<compile_context>
chip_gen: v5e
topology: v5e:2x2
jax: 0.10.0
libtpu: 0.0.40
codegen_flags: <defaults>
</compile_context>

<pallas_src>
import jax
import jax.numpy as jnp
from jax.experimental import pallas as pl
from jax.experimental.pallas import tpu as pltpu


def comparator_kernel(cur_ref, buf_ref, w1a_ref, w1b_ref, b1_ref,
                      w2_ref, b2_ref, o_ref):
    cdt = w1a_ref.dtype  # MXU compute dtype (bf16 by default)

    # fc1 on the (virtually) concatenated input: two MXU matmuls, f32 accum.
    h = (jnp.dot(cur_ref[...].astype(cdt), w1a_ref[...],
                 preferred_element_type=jnp.float32)
         + jnp.dot(buf_ref[...].astype(cdt), w1b_ref[...],
                   preferred_element_type=jnp.float32)
         + b1_ref[...])                               # (tb, 256) f32
    h = jnp.maximum(h, 0.0)                           # ReLU (VPU, f32)

    # fc4: 256 -> 1 as broadcast-multiply (VALU) + lane reduction (XLU);
    # overlaps with the fc1 MXU work instead of wasting an MXU sequence.
    z = jnp.sum(h * w2_ref[...], axis=-1, keepdims=True) + b2_ref[...]
    o_ref[...] = jax.nn.sigmoid(z)                    # (tb, 1) f32


def prepare_comparator_params(w1, b1, w2, b2, compute_dtype=jnp.bfloat16):
    """Once-per-model weight preprocessing (kernel layout + dtype), hoisted
    out of the per-call path.  w1: (256, 2E) PyTorch layout, b1: (256,),
    w2: (1, 256), b2: (1,)."""
    H, E2 = w1.shape
    E = E2 // 2
    w1a = w1[:, :E].T.astype(compute_dtype)        # (E, 256): multiplies `cur`
    w1b = w1[:, E:].T.astype(compute_dtype)        # (E, 256): multiplies `buf`
    b1r = b1.astype(jnp.float32).reshape(1, H)     # (1, 256)
    w2r = w2.astype(jnp.float32).reshape(1, H)     # (1, 256) lane-dense row
    b2r = b2.astype(jnp.float32).reshape(1, 1)     # (1, 1)
    return w1a, w1b, b1r, w2r, b2r


def comparator_net(cur, buf, params, *, tb=512):
    """cur, buf: (B, E). params from prepare_comparator_params().
    Returns sigmoid(fc4(relu(fc1(cat([cur, buf], 1))))) as (B, 1) float32."""
    w1a, w1b, b1r, w2r, b2r = params
    B, E = cur.shape
    assert buf.shape == (B, E)
    assert w1a.shape[0] == E and w1b.shape[0] == E
    H = w1a.shape[1]

    # Effective batch tile: tiny batches round up to a multiple of 8 and use a
    # single tile; otherwise use `tb` and pad B up to a multiple of it.
    b8 = ((B + 7) // 8) * 8
    if b8 <= tb:
        tb_eff, Bp = b8, b8
    else:
        assert tb % 8 == 0, "batch tile must be a multiple of 8"
        tb_eff = tb
        Bp = ((B + tb - 1) // tb) * tb
    if Bp != B:
        cur = jnp.pad(cur, ((0, Bp - B), (0, 0)))
        buf = jnp.pad(buf, ((0, Bp - B), (0, 0)))

    out = pl.pallas_call(
        comparator_kernel,
        out_shape=jax.ShapeDtypeStruct((Bp, 1), jnp.float32),
        grid=(Bp // tb_eff,),
        in_specs=[
            pl.BlockSpec((tb_eff, E), lambda i: (i, 0)),   # cur tile
            pl.BlockSpec((tb_eff, E), lambda i: (i, 0)),   # buf tile
            pl.BlockSpec((E, H), lambda i: (0, 0)),        # w1a (resident)
            pl.BlockSpec((E, H), lambda i: (0, 0)),        # w1b (resident)
            pl.BlockSpec((1, H), lambda i: (0, 0)),        # b1 row
            pl.BlockSpec((1, H), lambda i: (0, 0)),        # w2 row
            pl.BlockSpec((1, 1), lambda i: (0, 0)),        # b2
        ],
        out_specs=pl.BlockSpec((tb_eff, 1), lambda i: (i, 0)),
        compiler_params=pltpu.CompilerParams(
            dimension_semantics=("parallel",)),            # shard tiles over TCs
    )(cur, buf, w1a, w1b, b1r, w2r, b2r)
    return out[:B]


def comparator_net_ref(cur, buf, w1, b1, w2, b2):
    x = jnp.concatenate([cur, buf], axis=1)
    h = jnp.maximum(x @ w1.T + b1, 0.0)
    return jax.nn.sigmoid(h @ w2.T + b2)


if __name__ == "__main__":
    E = 512   # embedded_size (module default)
    H = 256
    B = 512   # >= 2 batch tiles at tb=256 so both v7x TensorCores get work

    key = jax.random.PRNGKey(0)
    k_cur, k_buf, k_w1, k_b1, k_w2, k_b2 = jax.random.split(key, 6)

    cur = jax.random.normal(k_cur, (B, E), dtype=jnp.float32)
    buf = jax.random.normal(k_buf, (B, E), dtype=jnp.float32)

    # Deterministic parameter init (uniform, PyTorch Linear fan-in scale).
    w1 = jax.random.uniform(k_w1, (H, 2 * E), jnp.float32, -1.0, 1.0) / jnp.sqrt(2.0 * E)
    b1 = jax.random.uniform(k_b1, (H,), jnp.float32, -1.0, 1.0) / jnp.sqrt(2.0 * E)
    w2 = jax.random.uniform(k_w2, (1, H), jnp.float32, -1.0, 1.0) / jnp.sqrt(1.0 * H)
    b2 = jax.random.uniform(k_b2, (1,), jnp.float32, -1.0, 1.0) / jnp.sqrt(1.0 * H)

    # Weight preprocessing happens once, outside the per-call path.
    params = prepare_comparator_params(w1, b1, w2, b2)

    ref = comparator_net_ref(cur, buf, w1, b1, w2, b2)

    # Main check: 2 batch tiles of 256 rows (bf16 weights -> relaxed tolerance).
    out = jax.block_until_ready(comparator_net(cur, buf, params, tb=256))
    assert out.shape == (B, 1)
    assert jnp.allclose(out, ref, atol=1e-2, rtol=1e-2), \
        float(jnp.max(jnp.abs(out - ref)))

    # Ragged-batch check: exercises the pad-to-tile path.
    Br = 100
    out_r = jax.block_until_ready(comparator_net(cur[:Br], buf[:Br], params, tb=256))
    assert out_r.shape == (Br, 1)
    assert jnp.allclose(out_r, ref[:Br], atol=1e-2, rtol=1e-2)

    print("KERNEL_OK")
</pallas_src>

<mosaic_0001>
module attributes {stable_mosaic.version = 11 : i64} {
  func.func @comparator_kernel(%arg0: i32, %arg1: memref<256x512xf32, #tpu.memory_space<vmem>>, %arg2: memref<256x512xf32, #tpu.memory_space<vmem>>, %arg3: memref<512x256xbf16, #tpu.memory_space<vmem>>, %arg4: memref<512x256xbf16, #tpu.memory_space<vmem>>, %arg5: memref<1x256xf32, #tpu.memory_space<vmem>>, %arg6: memref<1x256xf32, #tpu.memory_space<vmem>>, %arg7: memref<1x1xf32, #tpu.memory_space<vmem>>, %arg8: memref<256x1xf32, #tpu.memory_space<vmem>>) attributes {dimension_semantics = [#tpu.dimension_semantics<parallel>], iteration_bounds = array<i64: 2>, scalar_prefetch = 0 : i64, scratch_operands = 0 : i64, tpu.core_type = #tpu.core_type<tc>, window_params = [{transform_indices = @transform_0, window_bounds = array<i64: 256, 512>}, {transform_indices = @transform_1, window_bounds = array<i64: 256, 512>}, {pipeline_mode = #tpu.pipeline_mode<synchronous>, transform_indices = @transform_2, window_bounds = array<i64: 512, 256>}, {pipeline_mode = #tpu.pipeline_mode<synchronous>, transform_indices = @transform_3, window_bounds = array<i64: 512, 256>}, {pipeline_mode = #tpu.pipeline_mode<synchronous>, transform_indices = @transform_4, window_bounds = array<i64: 1, 256>}, {pipeline_mode = #tpu.pipeline_mode<synchronous>, transform_indices = @transform_5, window_bounds = array<i64: 1, 256>}, {pipeline_mode = #tpu.pipeline_mode<synchronous>, transform_indices = @transform_6, window_bounds = array<i64: 1, 1>}, {transform_indices = @transform_7, window_bounds = array<i64: 256, 1>}]} {
    %c0 = arith.constant 0 : index
    %c0_0 = arith.constant 0 : index
    %0 = vector.load %arg1[%c0, %c0_0] : memref<256x512xf32, #tpu.memory_space<vmem>>, vector<256x512xf32>
    %1 = arith.truncf %0 : vector<256x512xf32> to vector<256x512xbf16>
    %c0_1 = arith.constant 0 : index
    %c0_2 = arith.constant 0 : index
    %2 = vector.load %arg3[%c0_1, %c0_2] : memref<512x256xbf16, #tpu.memory_space<vmem>>, vector<512x256xbf16>
    %cst = arith.constant dense<0.000000e+00> : vector<256x256xf32>
    %3 = tpu.matmul %1, %2, %cst {dimension_numbers = #tpu.dot_dimension_numbers<[1], [0], [0], [1], [0, 0, 1, 1], [], []>} : vector<256x512xbf16>, vector<512x256xbf16>, vector<256x256xf32> -> vector<256x256xf32>
    %c0_3 = arith.constant 0 : index
    %c0_4 = arith.constant 0 : index
    %4 = vector.load %arg2[%c0_3, %c0_4] : memref<256x512xf32, #tpu.memory_space<vmem>>, vector<256x512xf32>
    %5 = arith.truncf %4 : vector<256x512xf32> to vector<256x512xbf16>
    %c0_5 = arith.constant 0 : index
    %c0_6 = arith.constant 0 : index
    %6 = vector.load %arg4[%c0_5, %c0_6] : memref<512x256xbf16, #tpu.memory_space<vmem>>, vector<512x256xbf16>
    %cst_7 = arith.constant dense<0.000000e+00> : vector<256x256xf32>
    %7 = tpu.matmul %5, %6, %cst_7 {dimension_numbers = #tpu.dot_dimension_numbers<[1], [0], [0], [1], [0, 0, 1, 1], [], []>} : vector<256x512xbf16>, vector<512x256xbf16>, vector<256x256xf32> -> vector<256x256xf32>
    %8 = arith.addf %3, %7 : vector<256x256xf32>
    %c0_8 = arith.constant 0 : index
    %c0_9 = arith.constant 0 : index
    %9 = vector.load %arg5[%c0_8, %c0_9] : memref<1x256xf32, #tpu.memory_space<vmem>>, vector<1x256xf32>
    %10 = vector.broadcast %9 : vector<1x256xf32> to vector<256x256xf32>
    %11 = arith.addf %8, %10 : vector<256x256xf32>
    %cst_10 = arith.constant 0.000000e+00 : f32
    %12 = vector.broadcast %cst_10 : f32 to vector<256x256xf32>
    %13 = arith.maximumf %11, %12 : vector<256x256xf32>
    %c0_11 = arith.constant 0 : index
    %c0_12 = arith.constant 0 : index
    %14 = vector.load %arg6[%c0_11, %c0_12] : memref<1x256xf32, #tpu.memory_space<vmem>>, vector<1x256xf32>
    %15 = vector.broadcast %14 : vector<1x256xf32> to vector<256x256xf32>
    %16 = arith.mulf %13, %15 : vector<256x256xf32>
    %cst_13 = arith.constant dense<0.000000e+00> : vector<256xf32>
    %17 = vector.multi_reduction <add>, %16, %cst_13 [1] : vector<256x256xf32> to vector<256xf32>
    %18 = vector.shape_cast %17 : vector<256xf32> to vector<256x1xf32>
    %c0_14 = arith.constant 0 : index
    %c0_15 = arith.constant 0 : index
    %19 = vector.load %arg7[%c0_14, %c0_15] : memref<1x1xf32, #tpu.memory_space<vmem>>, vector<1x1xf32>
    %20 = vector.broadcast %19 : vector<1x1xf32> to vector<256x1xf32>
    %21 = arith.addf %18, %20 : vector<256x1xf32>
    %22 = arith.negf %21 : vector<256x1xf32>
    %23 = math.exp %22 : vector<256x1xf32>
    %cst_16 = arith.constant 1.000000e+00 : f32
    %24 = vector.broadcast %cst_16 : f32 to vector<256x1xf32>
    %25 = arith.addf %24, %23 : vector<256x1xf32>
    %26 = arith.divf %24, %25 : vector<256x1xf32>
    %c0_17 = arith.constant 0 : index
    %c0_18 = arith.constant 0 : index
    %27 = vector.load %arg8[%c0_17, %c0_18] : memref<256x1xf32, #tpu.memory_space<vmem>>, vector<256x1xf32>
    tpu.vector_store %arg8[%c0_17, %c0_18], %26 {strides = array<i32>} : memref<256x1xf32, #tpu.memory_space<vmem>>, vector<256x1xf32>,
    return
  }
  func.func @transform_0(%arg0: i32) -> (i32, i32) {
    %c0_i32 = arith.constant 0 : i32
    %c0_i32_0 = arith.constant 0 : i32
    return %arg0, %c0_i32 : i32, i32
  }
  func.func @transform_1(%arg0: i32) -> (i32, i32) {
    %c0_i32 = arith.constant 0 : i32
    %c0_i32_0 = arith.constant 0 : i32
    return %arg0, %c0_i32 : i32, i32
  }
  func.func @transform_2(%arg0: i32) -> (i32, i32) {
    %c0_i32 = arith.constant 0 : i32
    %c0_i32_0 = arith.constant 0 : i32
    %c0_i32_1 = arith.constant 0 : i32
    return %c0_i32, %c0_i32_0 : i32, i32
  }
  func.func @transform_3(%arg0: i32) -> (i32, i32) {
    %c0_i32 = arith.constant 0 : i32
    %c0_i32_0 = arith.constant 0 : i32
    %c0_i32_1 = arith.constant 0 : i32
    return %c0_i32, %c0_i32_0 : i32, i32
  }
  func.func @transform_4(%arg0: i32) -> (i32, i32) {
    %c0_i32 = arith.constant 0 : i32
    %c0_i32_0 = arith.constant 0 : i32
    %c0_i32_1 = arith.constant 0 : i32
    return %c0_i32, %c0_i32_0 : i32, i32
  }
  func.func @transform_5(%arg0: i32) -> (i32, i32) {
    %c0_i32 = arith.constant 0 : i32
    %c0_i32_0 = arith.constant 0 : i32
    %c0_i32_1 = arith.constant 0 : i32
    return %c0_i32, %c0_i32_0 : i32, i32
  }
  func.func @transform_6(%arg0: i32) -> (i32, i32) {
    %c0_i32 = arith.constant 0 : i32
    %c0_i32_0 = arith.constant 0 : i32
    %c0_i32_1 = arith.constant 0 : i32
    return %c0_i32, %c0_i32_0 : i32, i32
  }
  func.func @transform_7(%arg0: i32) -> (i32, i32) {
    %c0_i32 = arith.constant 0 : i32
    %c0_i32_0 = arith.constant 0 : i32
    return %arg0, %c0_i32 : i32, i32
  }
}

</mosaic_0001>

<llo_original>
// kernel: tpu_custom_call.1
$region0: #{tpu_custom_call.1}
  #allocation0 [shape = 'u32[]', space=smem, size = 0x4, offset = 0x4, fixed_abs, tag = 'smem constant byte address 0x4 - core index']
  #allocation1 [shape = 'u32[72,128]{1,0:T(1,128)}', space=vmem, size = 0x9000, scoped, tag = 'internal scratch']
  #allocation2 [shape = 'f32[1,1]{1,0:T(1,128)S(1)}', space=vmem, size = 0x200, scoped, tag = 'scoped memory for tpu_custom_call.1']
  %s0 = inlined_call_operand.hbm [shape: f32[512,512], index: 0, kind: input, shape index: {}]
  %s1 = inlined_call_operand.hbm [shape: f32[512,512], index: 1, kind: input, shape index: {}]
  %s2 = inlined_call_operand.hbm [shape: bf16[512,256], index: 2, kind: input, shape index: {}]
  %s3 = inlined_call_operand.hbm [shape: bf16[512,256], index: 3, kind: input, shape index: {}]
  %s4 = inlined_call_operand.vmem [shape: f32[1,256], index: 4, kind: input, shape index: {}]
  %s5 = inlined_call_operand.vmem [shape: f32[1,256], index: 5, kind: input, shape index: {}]
  %s6 = inlined_call_operand.<no memory space> [shape: f32[1,1], index: 6, kind: input, shape index: {}]
  %s7 = inlined_call_operand.vmem [shape: f32[512,1], index: 7, kind: output, shape index: {}]
  %s8 = sld [smem:[#allocation0]]
  $region77: #{tpu_custom_call.1} parent=0
    _
  %s10 = ssub.s32 1, %s8
  %s11 = scalar_select 0, %s10, %s8
  %v12 = vstv %s6
  %13 = vst [vmem:[#allocation2] sm:$0x1] %v12
  $region1: #{tpu_custom_call.1} parent=0
    #allocation3 [shape = 'u8[1048576]{0}', space=vmem, size = 0x100000, scoped, tag = 'input window, operand 0']
    #allocation4 [shape = 's32[2]{0}', space=sflag, size = 0x8, scoped, tag = 'scoped memory for tpu_custom_call.1']
    #allocation5 [shape = 'u8[1048576]{0}', space=vmem, size = 0x100000, scoped, tag = 'input window, operand 1']
    #allocation6 [shape = 's32[2]{0}', space=sflag, size = 0x8, scoped, tag = 'scoped memory for tpu_custom_call.1']
    #allocation7 [shape = 'u8[262144]{0}', space=vmem, size = 0x40000, scoped, tag = 'input window, operand 2, single buffered']
    #allocation8 [shape = 'u8[262144]{0}', space=vmem, size = 0x40000, scoped, tag = 'input window, operand 3, single buffered']
    #allocation9 [shape = 's32[1]{0}', space=sflag, size = 0x4, scoped, tag = 'scoped memory for tpu_custom_call.1']
    %14 = vsyncpa [#allocation4], 0
    %s15 = scalar_lea.sflag [#allocation4], 1
    %16 = vsyncpa %s15, 0
    %17 = vsyncpa [#allocation6], 0
    %s18 = scalar_lea.sflag [#allocation6], 1
    %19 = vsyncpa %s18, 0
    %20 = vsyncpa [#allocation9], 0
    loop: start=0, step=1, limit=4
    $region2: #{tpu_custom_call.1} parent=1 // loop_pre_header
      _
    $region3: #{tpu_custom_call.1} parent=1 // loop_header
      %s22 = sphi 0, %s26
      %p23 = scmp.ge.s32.totalorder %s22, 4
      %s32 = sphi 0, %s34
      %s35 = sphi 0, %s32
      %s36 = sphi 0, %s35
      %s52 = sphi 0, %s36
      %s58 = sphi 0, %s60
      %s61 = sphi 0, %s58
      %s62 = sphi 0, %s61
      %s78 = sphi 0, %s62
      %s82 = sphi 0, %s82
      %s84 = sphi 0, %s82
      %s85 = sphi 0, %s84
      %s99 = sphi 0, %s85
      %s103 = sphi 0, %s103
      %s105 = sphi 0, %s103
      %s106 = sphi 0, %s105
      %s120 = sphi 0, %s106
      %s124 = sphi 0, %s124
      %s126 = sphi 0, %s124
      %s127 = sphi 0, %s126
      %s141 = sphi 0, %s127
      %s145 = sphi 0, %s145
      %s147 = sphi 0, %s145
      %s148 = sphi 0, %s147
      %s162 = sphi 0, %s148
      %s166 = sphi 0, %s166
      %s168 = sphi 0, %s166
      %s169 = sphi 0, %s168
      %s183 = sphi 0, %s169
      %s189 = sphi 0, %s191
      %s192 = sphi 0, %s189
      %s193 = sphi 0, %s192
      %s209 = sphi 0, %s193
    $region4: #{tpu_custom_call.1} parent=1 // loop_header_branch
      %25 = sbr.rel (%p23) target = $region8
    $region5: #{tpu_custom_call.1} parent=1 // loop_body
      %s27 = ssub.s32 %s22, 1
      %s28 = ssub.s32 %s22, 2
      %s29 = sadd.s32 %s22, 1
      %s30 = ssub.s32 %s22, %s29
      %p31 = scmp.eq.s32.totalorder %s30, 0
      %s33 = sadd.s32 %s32, 1
      %s34 = scalar_select %p31, %s32, %s33
      %p37 = pneg %p31
      %p38 = scmp.eq.s32.totalorder %s22, 1
      %p39 = por %p37, %p38
      %p40 = scmp.ne.s32.totalorder %s32, %s35
      %p41 = scmp.eq.s32.totalorder %s22, 0
      %p42 = por %p40, %p41
      %p43 = scmp.ne.s32.totalorder %s32, %s35
      %p44 = scmp.eq.s32.totalorder %s27, 1
      %p45 = por %p43, %p44
      %p46 = scmp.ne.s32.totalorder %s35, %s36
      %p47 = scmp.eq.s32.totalorder %s27, 0
      %p48 = por %p46, %p47
      %p49 = scmp.ne.s32.totalorder %s35, %s36
      %p50 = scmp.eq.s32.totalorder %s28, 1
      %p51 = por %p49, %p50
      %p53 = scmp.ne.s32.totalorder %s36, %s52
      %p54 = scmp.eq.s32.totalorder %s28, 0
      %p55 = por %p53, %p54
      %s56 = ssub.s32 %s22, %s29
      %p57 = scmp.eq.s32.totalorder %s56, 0
      %s59 = sadd.s32 %s58, 1
      %s60 = scalar_select %p57, %s58, %s59
      %p63 = pneg %p57
      %p64 = scmp.eq.s32.totalorder %s22, 1
      %p65 = por %p63, %p64
      %p66 = scmp.ne.s32.totalorder %s58, %s61
      %p67 = scmp.eq.s32.totalorder %s22, 0
      %p68 = por %p66, %p67
      %p69 = scmp.ne.s32.totalorder %s58, %s61
      %p70 = scmp.eq.s32.totalorder %s27, 1
      %p71 = por %p69, %p70
      %p72 = scmp.ne.s32.totalorder %s61, %s62
      %p73 = scmp.eq.s32.totalorder %s27, 0
      %p74 = por %p72, %p73
      %p75 = scmp.ne.s32.totalorder %s61, %s62
      %p76 = scmp.eq.s32.totalorder %s28, 1
      %p77 = por %p75, %p76
      %p79 = scmp.ne.s32.totalorder %s62, %s78
      %p80 = scmp.eq.s32.totalorder %s28, 0
      %p81 = por %p79, %p80
      %s83 = sadd.s32 %s82, 1
      %p86 = scmp.eq.s32.totalorder %s22, 1
      %p87 = scmp.ne.s32.totalorder %s82, %s84
      %p88 = scmp.eq.s32.totalorder %s22, 0
      %p89 = por %p87, %p88
      %p90 = scmp.ne.s32.totalorder %s82, %s84
      %p91 = scmp.eq.s32.totalorder %s27, 1
      %p92 = por %p90, %p91
      %p93 = scmp.ne.s32.totalorder %s84, %s85
      %p94 = scmp.eq.s32.totalorder %s27, 0
      %p95 = por %p93, %p94
      %p96 = scmp.ne.s32.totalorder %s84, %s85
      %p97 = scmp.eq.s32.totalorder %s28, 1
      %p98 = por %p96, %p97
      %p100 = scmp.ne.s32.totalorder %s85, %s99
      %p101 = scmp.eq.s32.totalorder %s28, 0
      %p102 = por %p100, %p101
      %s104 = sadd.s32 %s103, 1
      %p107 = scmp.eq.s32.totalorder %s22, 1
      %p108 = scmp.ne.s32.totalorder %s103, %s105
      %p109 = scmp.eq.s32.totalorder %s22, 0
      %p110 = por %p108, %p109
      %p111 = scmp.ne.s32.totalorder %s103, %s105
      %p112 = scmp.eq.s32.totalorder %s27, 1
      %p113 = por %p111, %p112
      %p114 = scmp.ne.s32.totalorder %s105, %s106
      %p115 = scmp.eq.s32.totalorder %s27, 0
      %p116 = por %p114, %p115
      %p117 = scmp.ne.s32.totalorder %s105, %s106
      %p118 = scmp.eq.s32.totalorder %s28, 1
      %p119 = por %p117, %p118
      %p121 = scmp.ne.s32.totalorder %s106, %s120
      %p122 = scmp.eq.s32.totalorder %s28, 0
      %p123 = por %p121, %p122
      %s125 = sadd.s32 %s124, 1
      %p128 = scmp.eq.s32.totalorder %s22, 1
      %p129 = scmp.ne.s32.totalorder %s124, %s126
      %p130 = scmp.eq.s32.totalorder %s22, 0
      %p131 = por %p129, %p130
      %p132 = scmp.ne.s32.totalorder %s124, %s126
      %p133 = scmp.eq.s32.totalorder %s27, 1
      %p134 = por %p132, %p133
      %p135 = scmp.ne.s32.totalorder %s126, %s127
      %p136 = scmp.eq.s32.totalorder %s27, 0
      %p137 = por %p135, %p136
      %p138 = scmp.ne.s32.totalorder %s126, %s127
      %p139 = scmp.eq.s32.totalorder %s28, 1
      %p140 = por %p138, %p139
      %p142 = scmp.ne.s32.totalorder %s127, %s141
      %p143 = scmp.eq.s32.totalorder %s28, 0
      %p144 = por %p142, %p143
      %s146 = sadd.s32 %s145, 1
      %p149 = scmp.eq.s32.totalorder %s22, 1
      %p150 = scmp.ne.s32.totalorder %s145, %s147
      %p151 = scmp.eq.s32.totalorder %s22, 0
      %p152 = por %p150, %p151
      %p153 = scmp.ne.s32.totalorder %s145, %s147
      %p154 = scmp.eq.s32.totalorder %s27, 1
      %p155 = por %p153, %p154
      %p156 = scmp.ne.s32.totalorder %s147, %s148
      %p157 = scmp.eq.s32.totalorder %s27, 0
      %p158 = por %p156, %p157
      %p159 = scmp.ne.s32.totalorder %s147, %s148
      %p160 = scmp.eq.s32.totalorder %s28, 1
      %p161 = por %p159, %p160
      %p163 = scmp.ne.s32.totalorder %s148, %s162
      %p164 = scmp.eq.s32.totalorder %s28, 0
      %p165 = por %p163, %p164
      %s167 = sadd.s32 %s166, 1
      %p170 = scmp.eq.s32.totalorder %s22, 1
      %p171 = scmp.ne.s32.totalorder %s166, %s168
      %p172 = scmp.eq.s32.totalorder %s22, 0
      %p173 = por %p171, %p172
      %p174 = scmp.ne.s32.totalorder %s166, %s168
      %p175 = scmp.eq.s32.totalorder %s27, 1
      %p176 = por %p174, %p175
      %p177 = scmp.ne.s32.totalorder %s168, %s169
      %p178 = scmp.eq.s32.totalorder %s27, 0
      %p179 = por %p177, %p178
      %p180 = scmp.ne.s32.totalorder %s168, %s169
      %p181 = scmp.eq.s32.totalorder %s28, 1
      %p182 = por %p180, %p181
      %p184 = scmp.ne.s32.totalorder %s169, %s183
      %p185 = scmp.eq.s32.totalorder %s28, 0
      %p186 = por %p184, %p185
      %s187 = ssub.s32 %s22, %s29
      %p188 = scmp.eq.s32.totalorder %s187, 0
      %s190 = sadd.s32 %s189, 1
      %s191 = scalar_select %p188, %s189, %s190
      %p194 = pneg %p188
      %p195 = scmp.eq.s32.totalorder %s22, 1
      %p196 = por %p194, %p195
      %p197 = scmp.ne.s32.totalorder %s189, %s192
      %p198 = scmp.eq.s32.totalorder %s22, 0
      %p199 = por %p197, %p198
      %p200 = scmp.ne.s32.totalorder %s189, %s192
      %p201 = scmp.eq.s32.totalorder %s27, 1
      %p202 = por %p200, %p201
      %p203 = scmp.ne.s32.totalorder %s192, %s193
      %p204 = scmp.eq.s32.totalorder %s27, 0
      %p205 = por %p203, %p204
      %p206 = scmp.ne.s32.totalorder %s192, %s193
      %p207 = scmp.eq.s32.totalorder %s28, 1
      %p208 = por %p206, %p207
      %p210 = scmp.ne.s32.totalorder %s193, %s209
      %p211 = scmp.eq.s32.totalorder %s28, 0
      %p212 = por %p210, %p211
      %p213 = scmp.le.s32.totalorder 1, %s22
      %p214 = scmp.lt.s32.totalorder %s22, 3
      %p215 = pnand %p213, %p214
      %p216 = pneg %p215
      // Predicated region
      $region9: #{tpu_custom_call.1} parent=5 // pred_check
        _
      $region10: #{tpu_custom_call.1} parent=5 // pred_check_branch
        %218 = sbr.rel (%p215) target = $region12
      $region11: #{tpu_custom_call.1} parent=5 // pred_region
        %s219 = ssub.s32 %s22, 1
        // Predicated region
        $region13: #{tpu_custom_call.1} parent=11 // pred_check
          %p220 = pneg %p95
        $region14: #{tpu_custom_call.1} parent=11 // pred_check_branch
          %222 = sbr.rel (%p220) target = $region16
        $region15: #{tpu_custom_call.1} parent=11 // pred_region
          %224 = vsyncadd [#allocation6], 0
          %s225 = sshll.u32 %s2, 4
          %s226 = int_to_ptr.hbm [resolvable:$true] %s225
          %s227 = sshll.u32 [#allocation7], 4
          %s228 = int_to_ptr.vmem [resolvable:$true] %s227
          %233 = dma.hbm_to_vmem [thread:$0]  %s226, 8192, %s228, [#allocation6], 128, 128, 8
        $region16: #{tpu_custom_call.1} parent=11 // pred_fallthru
          _
        // Predicated region
        $region17: #{tpu_custom_call.1} parent=11 // pred_check
          %p234 = pneg %p116
        $region18: #{tpu_custom_call.1} parent=11 // pred_check_branch
          %236 = sbr.rel (%p234) target = $region20
        $region19: #{tpu_custom_call.1} parent=11 // pred_region
          %238 = vsyncadd [#allocation9], 0
          %s239 = sshll.u32 %s3, 4
          %s240 = int_to_ptr.hbm [resolvable:$true] %s239
          %s241 = sshll.u32 [#allocation8], 4
          %s242 = int_to_ptr.vmem [resolvable:$true] %s241
          %247 = dma.hbm_to_vmem [thread:$0]  %s240, 8192, %s242, [#allocation9], 128, 128, 8
        $region20: #{tpu_custom_call.1} parent=11 // pred_fallthru
          _
        // Predicated region
        $region21: #{tpu_custom_call.1} parent=11 // pred_check
          %p248 = pneg %p137
        $region22: #{tpu_custom_call.1} parent=11 // pred_check_branch
          %250 = sbr.rel (%p248) target = $region24
        $region23: #{tpu_custom_call.1} parent=11 // pred_region
          _
        $region24: #{tpu_custom_call.1} parent=11 // pred_fallthru
          _
        // Predicated region
        $region25: #{tpu_custom_call.1} parent=11 // pred_check
          %p251 = pneg %p158
        $region26: #{tpu_custom_call.1} parent=11 // pred_check_branch
          %253 = sbr.rel (%p251) target = $region28
        $region27: #{tpu_custom_call.1} parent=11 // pred_region
          _
        $region28: #{tpu_custom_call.1} parent=11 // pred_fallthru
          _
        // Predicated region
        $region29: #{tpu_custom_call.1} parent=11 // pred_check
          %p254 = pneg %p179
        $region30: #{tpu_custom_call.1} parent=11 // pred_check_branch
          %256 = sbr.rel (%p254) target = $region32
        $region31: #{tpu_custom_call.1} parent=11 // pred_region
          _
        $region32: #{tpu_custom_call.1} parent=11 // pred_fallthru
          _
      $region12: #{tpu_custom_call.1} parent=5 // pred_fallthru
        _
      %p257 = scmp.lt.s32.totalorder %s22, 2
      // Predicated region
      $region33: #{tpu_custom_call.1} parent=5 // pred_check
        %p258 = pneg %p257
      $region34: #{tpu_custom_call.1} parent=5 // pred_check_branch
        %260 = sbr.rel (%p258) target = $region36
      $region35: #{tpu_custom_call.1} parent=5 // pred_region
        // Predicated region
        $region37: #{tpu_custom_call.1} parent=35 // pred_check
          %p261 = pneg %p42
        $region38: #{tpu_custom_call.1} parent=35 // pred_check_branch
          %263 = sbr.rel (%p261) target = $region40
        $region39: #{tpu_custom_call.1} parent=35 // pred_region
          %s264 = sand.u32 %s32, 1
          %s265 = scalar_lea.sflag [#allocation4], %s264
          %s266 = sand.u32 %s32, 1
          %s267 = smul.addr %s266, 1024
          %s268 = scalar_lea.vmem [#allocation3], %s267
          %s269 = smul.u32 32, %s22
          %271 = vsyncadd %s265, 0
          %s272 = smul.addr %s269, 4
          %s273 = smul.addr %s272, 8
          %s274 = scalar_lea.hbm %s0, %s273
          %s275 = sshll.u32 %s274, 4
          %s276 = int_to_ptr.hbm [resolvable:$true] %s275
          %s277 = sshll.u32 %s268, 4
          %s278 = int_to_ptr.vmem [resolvable:$true] %s277
          %283 = dma.hbm_to_vmem [thread:$0]  %s276, 16384, %s278, %s265, 512, 512, 32
        $region40: #{tpu_custom_call.1} parent=35 // pred_fallthru
          _
        // Predicated region
        $region41: #{tpu_custom_call.1} parent=35 // pred_check
          %p284 = pneg %p68
        $region42: #{tpu_custom_call.1} parent=35 // pred_check_branch
          %286 = sbr.rel (%p284) target = $region44
        $region43: #{tpu_custom_call.1} parent=35 // pred_region
          %s287 = sand.u32 %s22, 1
          %s288 = scalar_lea.sflag [#allocation6], %s287
          %s289 = sand.u32 %s58, 1
          %s290 = smul.addr %s289, 1024
          %s291 = scalar_lea.vmem [#allocation5], %s290
          %s292 = smul.u32 32, %s22
          %294 = vsyncadd %s288, 0
          %s295 = smul.addr %s292, 4
          %s296 = smul.addr %s295, 8
          %s297 = scalar_lea.hbm %s1, %s296
          %s298 = sshll.u32 %s297, 4
          %s299 = int_to_ptr.hbm [resolvable:$true] %s298
          %s300 = sshll.u32 %s291, 4
          %s301 = int_to_ptr.vmem [resolvable:$true] %s300
          %306 = dma.hbm_to_vmem [thread:$0]  %s299, 16384, %s301, %s288, 512, 512, 32
        $region44: #{tpu_custom_call.1} parent=35 // pred_fallthru
          _
      $region36: #{tpu_custom_call.1} parent=5 // pred_fallthru
        _
      %p307 = scmp.le.s32.totalorder 1, %s22
      %p308 = scmp.lt.s32.totalorder %s22, 3
      %p309 = pnand %p307, %p308
      %p310 = pneg %p309
      // Predicated region
      $region45: #{tpu_custom_call.1} parent=5 // pred_check
        _
      $region46: #{tpu_custom_call.1} parent=5 // pred_check_branch
        %312 = sbr.rel (%p309) target = $region48
      $region47: #{tpu_custom_call.1} parent=5 // pred_region
        %s313 = ssub.s32 %s22, 1
        %s314 = sand.u32 %s35, 1
        %s315 = scalar_lea.sflag [#allocation4], %s314
        %s316 = sand.u32 %s35, 1
        %s317 = smul.addr %s316, 1024
        %s318 = scalar_lea.vmem [#allocation3], %s317
        // Predicated region
        $region49: #{tpu_custom_call.1} parent=47 // pred_check
          %p319 = pneg %p48
        $region50: #{tpu_custom_call.1} parent=47 // pred_check_branch
          %321 = sbr.rel (%p319) target = $region52
        $region51: #{tpu_custom_call.1} parent=47 // pred_region
          %323 = dma.done %s315, 16384
        $region52: #{tpu_custom_call.1} parent=47 // pred_fallthru
          _
        %s324 = sand.u32 %s27, 1
        %s325 = scalar_lea.sflag [#allocation6], %s324
        %s326 = sand.u32 %s61, 1
        %s327 = smul.addr %s326, 1024
        %s328 = scalar_lea.vmem [#allocation5], %s327
        // Predicated region
        $region53: #{tpu_custom_call.1} parent=47 // pred_check
          %p329 = pneg %p74
        $region54: #{tpu_custom_call.1} parent=47 // pred_check_branch
          %331 = sbr.rel (%p329) target = $region56
        $region55: #{tpu_custom_call.1} parent=47 // pred_region
          %333 = dma.done %s325, 16384
        $region56: #{tpu_custom_call.1} parent=47 // pred_fallthru
          _
        // Predicated region
        $region57: #{tpu_custom_call.1} parent=47 // pred_check
          %p334 = pneg %p95
        $region58: #{tpu_custom_call.1} parent=47 // pred_check_branch
          %336 = sbr.rel (%p334) target = $region60
        $region59: #{tpu_custom_call.1} parent=47 // pred_region
          %338 = dma.done [#allocation6], 8192
        $region60: #{tpu_custom_call.1} parent=47 // pred_fallthru
          _
        // Predicated region
        $region61: #{tpu_custom_call.1} parent=47 // pred_check
          %p339 = pneg %p116
        $region62: #{tpu_custom_call.1} parent=47 // pred_check_branch
          %341 = sbr.rel (%p339) target = $region64
        $region63: #{tpu_custom_call.1} parent=47 // pred_region
          %343 = dma.done [#allocation9], 8192
        $region64: #{tpu_custom_call.1} parent=47 // pred_fallthru
          _
        %s344 = sand.u32 %s35, 1
        %s345 = scalar_lea.sflag [#allocation4], %s344
        %s346 = sand.u32 %s35, 1
        %s347 = smul.addr %s346, 1024
        %s348 = scalar_lea.vmem [#allocation3], %s347
        %p349 = pneg %p48
        %p350 = pneg %p45
        %s351 = sand.u32 %s27, 1
        %s352 = scalar_lea.sflag [#allocation6], %s351
        %s353 = sand.u32 %s61, 1
        %s354 = smul.addr %s353, 1024
        %s355 = scalar_lea.vmem [#allocation5], %s354
        %p356 = pneg %p74
        %p357 = pneg %p71
        %p358 = pneg %p95
        %p359 = pneg %p92
        %p360 = pneg %p116
        %p361 = pneg %p113
        %p362 = pneg %p137
        %p363 = pneg %p134
        %p364 = pneg %p158
        %p365 = pneg %p155
        %p366 = pneg %p179
        %p367 = pneg %p176
        %p368 = pneg %p205
        %p369 = pneg %p202
        %s370 = smul.u32 32, %s27
        %p371 = scmp.lt.s32.totalorder %s370, 63
        %s372 = scalar_select %p371, %s370, 63
        %s373 = smul.addr %s372, 8
        %s374 = scalar_lea.vmem %s7, %s373
        %s375 = smul.u32 32, %s27
        %s376 = smul.u32 32, %s27
        %s377 = smul.u32 32, %s27
        %p378 = scmp.lt.s32.totalorder %s377, 63
        %s379 = scalar_select %p378, %s377, 63
        %s380 = smul.addr %s379, 8
        %s381 = scalar_lea.vmem %s7, %s380
        %s382 = smul.u32 32, %s27
        %v383 = vld [vmem:[%s318] sm:$0xff]
        %v384 = vld [vmem:[%s318 + $0x8] sm:$0xff]
        %v385 = vld [vmem:[%s318 + $0x10] sm:$0xff]
        %v386 = vld [vmem:[%s318 + $0x18] sm:$0xff]
        %v387 = vld [vmem:[%s318 + $0x20] sm:$0xff]
        %v388 = vld [vmem:[%s318 + $0x28] sm:$0xff]
        %v389 = vld [vmem:[%s318 + $0x30] sm:$0xff]
        %v390 = vld [vmem:[%s318 + $0x38] sm:$0xff]
        %v391 = vld [vmem:[%s318 + $0x40] sm:$0xff]
        %v392 = vld [vmem:[%s318 + $0x48] sm:$0xff]
        %v393 = vld [vmem:[%s318 + $0x50] sm:$0xff]
        %v394 = vld [vmem:[%s318 + $0x58] sm:$0xff]
        %v395 = vld [vmem:[%s318 + $0x60] sm:$0xff]
        %v396 = vld [vmem:[%s318 + $0x68] sm:$0xff]
        %v397 = vld [vmem:[%s318 + $0x70] sm:$0xff]
        %v398 = vld [vmem:[%s318 + $0x78] sm:$0xff]
        %v399 = vld [vmem:[%s318 + $0x80] sm:$0xff]
        %v400 = vld [vmem:[%s318 + $0x88] sm:$0xff]
        %v401 = vld [vmem:[%s318 + $0x90] sm:$0xff]
        %v402 = vld [vmem:[%s318 + $0x98] sm:$0xff]
        %v403 = vld [vmem:[%s318 + $0xa0] sm:$0xff]
        %v404 = vld [vmem:[%s318 + $0xa8] sm:$0xff]
        %v405 = vld [vmem:[%s318 + $0xb0] sm:$0xff]
        %v406 = vld [vmem:[%s318 + $0xb8] sm:$0xff]
        %v407 = vld [vmem:[%s318 + $0xc0] sm:$0xff]
        %v408 = vld [vmem:[%s318 + $0xc8] sm:$0xff]
        %v409 = vld [vmem:[%s318 + $0xd0] sm:$0xff]
        %v410 = vld [vmem:[%s318 + $0xd8] sm:$0xff]
        %v411 = vld [vmem:[%s318 + $0xe0] sm:$0xff]
        %v412 = vld [vmem:[%s318 + $0xe8] sm:$0xff]
        %v413 = vld [vmem:[%s318 + $0xf0] sm:$0xff]
        %v414 = vld [vmem:[%s318 + $0xf8] sm:$0xff]
        %v415 = vld [vmem:[%s318 + $0x100] sm:$0xff]
        %v416 = vld [vmem:[%s318 + $0x108] sm:$0xff]
        %v417 = vld [vmem:[%s318 + $0x110] sm:$0xff]
        %v418 = vld [vmem:[%s318 + $0x118] sm:$0xff]
        %v419 = vld [vmem:[%s318 + $0x120] sm:$0xff]
        %v420 = vld [vmem:[%s318 + $0x128] sm:$0xff]
        %v421 = vld [vmem:[%s318 + $0x130] sm:$0xff]
        %v422 = vld [vmem:[%s318 + $0x138] sm:$0xff]
        %v423 = vld [vmem:[%s318 + $0x140] sm:$0xff]
        %v424 = vld [vmem:[%s318 + $0x148] sm:$0xff]
        %v425 = vld [vmem:[%s318 + $0x150] sm:$0xff]
        %v426 = vld [vmem:[%s318 + $0x158] sm:$0xff]
        %v427 = vld [vmem:[%s318 + $0x160] sm:$0xff]
        %v428 = vld [vmem:[%s318 + $0x168] sm:$0xff]
        %v429 = vld [vmem:[%s318 + $0x170] sm:$0xff]
        %v430 = vld [vmem:[%s318 + $0x178] sm:$0xff]
        %v431 = vld [vmem:[%s318 + $0x180] sm:$0xff]
        %v432 = vld [vmem:[%s318 + $0x188] sm:$0xff]
        %v433 = vld [vmem:[%s318 + $0x190] sm:$0xff]
        %v434 = vld [vmem:[%s318 + $0x198] sm:$0xff]
        %v435 = vld [vmem:[%s318 + $0x1a0] sm:$0xff]
        %v436 = vld [vmem:[%s318 + $0x1a8] sm:$0xff]
        %v437 = vld [vmem:[%s318 + $0x1b0] sm:$0xff]
        %v438 = vld [vmem:[%s318 + $0x1b8] sm:$0xff]
        %v439 = vld [vmem:[%s318 + $0x1c0] sm:$0xff]
        %v440 = vld [vmem:[%s318 + $0x1c8] sm:$0xff]
        %v441 = vld [vmem:[%s318 + $0x1d0] sm:$0xff]
        %v442 = vld [vmem:[%s318 + $0x1d8] sm:$0xff]
        %v443 = vld [vmem:[%s318 + $0x1e0] sm:$0xff]
        %v444 = vld [vmem:[%s318 + $0x1e8] sm:$0xff]
        %v445 = vld [vmem:[%s318 + $0x1f0] sm:$0xff]
        %v446 = vld [vmem:[%s318 + $0x1f8] sm:$0xff]
        %v447 = vld [vmem:[%s318 + $0x200] sm:$0xff]
        %v448 = vld [vmem:[%s318 + $0x208] sm:$0xff]
        %v449 = vld [vmem:[%s318 + $0x210] sm:$0xff]
        %v450 = vld [vmem:[%s318 + $0x218] sm:$0xff]
        %v451 = vld [vmem:[%s318 + $0x220] sm:$0xff]
        %v452 = vld [vmem:[%s318 + $0x228] sm:$0xff]
        %v453 = vld [vmem:[%s318 + $0x230] sm:$0xff]
        %v454 = vld [vmem:[%s318 + $0x238] sm:$0xff]
        %v455 = vld [vmem:[%s318 + $0x240] sm:$0xff]
        %v456 = vld [vmem:[%s318 + $0x248] sm:$0xff]
        %v457 = vld [vmem:[%s318 + $0x250] sm:$0xff]
        %v458 = vld [vmem:[%s318 + $0x258] sm:$0xff]
        %v459 = vld [vmem:[%s318 + $0x260] sm:$0xff]
        %v460 = vld [vmem:[%s318 + $0x268] sm:$0xff]
        %v461 = vld [vmem:[%s318 + $0x270] sm:$0xff]
        %v462 = vld [vmem:[%s318 + $0x278] sm:$0xff]
        %v463 = vld [vmem:[%s318 + $0x280] sm:$0xff]
        %v464 = vld [vmem:[%s318 + $0x288] sm:$0xff]
        %v465 = vld [vmem:[%s318 + $0x290] sm:$0xff]
        %v466 = vld [vmem:[%s318 + $0x298] sm:$0xff]
        %v467 = vld [vmem:[%s318 + $0x2a0] sm:$0xff]
        %v468 = vld [vmem:[%s318 + $0x2a8] sm:$0xff]
        %v469 = vld [vmem:[%s318 + $0x2b0] sm:$0xff]
        %v470 = vld [vmem:[%s318 + $0x2b8] sm:$0xff]
        %v471 = vld [vmem:[%s318 + $0x2c0] sm:$0xff]
        %v472 = vld [vmem:[%s318 + $0x2c8] sm:$0xff]
        %v473 = vld [vmem:[%s318 + $0x2d0] sm:$0xff]
        %v474 = vld [vmem:[%s318 + $0x2d8] sm:$0xff]
        %v475 = vld [vmem:[%s318 + $0x2e0] sm:$0xff]
        %v476 = vld [vmem:[%s318 + $0x2e8] sm:$0xff]
        %v477 = vld [vmem:[%s318 + $0x2f0] sm:$0xff]
        %v478 = vld [vmem:[%s318 + $0x2f8] sm:$0xff]
        %v479 = vld [vmem:[%s318 + $0x300] sm:$0xff]
        %v480 = vld [vmem:[%s318 + $0x308] sm:$0xff]
        %v481 = vld [vmem:[%s318 + $0x310] sm:$0xff]
        %v482 = vld [vmem:[%s318 + $0x318] sm:$0xff]
        %v483 = vld [vmem:[%s318 + $0x320] sm:$0xff]
        %v484 = vld [vmem:[%s318 + $0x328] sm:$0xff]
        %v485 = vld [vmem:[%s318 + $0x330] sm:$0xff]
        %v486 = vld [vmem:[%s318 + $0x338] sm:$0xff]
        %v487 = vld [vmem:[%s318 + $0x340] sm:$0xff]
        %v488 = vld [vmem:[%s318 + $0x348] sm:$0xff]
        %v489 = vld [vmem:[%s318 + $0x350] sm:$0xff]
        %v490 = vld [vmem:[%s318 + $0x358] sm:$0xff]
        %v491 = vld [vmem:[%s318 + $0x360] sm:$0xff]
        %v492 = vld [vmem:[%s318 + $0x368] sm:$0xff]
        %v493 = vld [vmem:[%s318 + $0x370] sm:$0xff]
        %v494 = vld [vmem:[%s318 + $0x378] sm:$0xff]
        %v495 = vld [vmem:[%s318 + $0x380] sm:$0xff]
        %v496 = vld [vmem:[%s318 + $0x388] sm:$0xff]
        %v497 = vld [vmem:[%s318 + $0x390] sm:$0xff]
        %v498 = vld [vmem:[%s318 + $0x398] sm:$0xff]
        %v499 = vld [vmem:[%s318 + $0x3a0] sm:$0xff]
        %v500 = vld [vmem:[%s318 + $0x3a8] sm:$0xff]
        %v501 = vld [vmem:[%s318 + $0x3b0] sm:$0xff]
        %v502 = vld [vmem:[%s318 + $0x3b8] sm:$0xff]
        %v503 = vld [vmem:[%s318 + $0x3c0] sm:$0xff]
        %v504 = vld [vmem:[%s318 + $0x3c8] sm:$0xff]
        %v505 = vld [vmem:[%s318 + $0x3d0] sm:$0xff]
        %v506 = vld [vmem:[%s318 + $0x3d8] sm:$0xff]
        %v507 = vld [vmem:[%s318 + $0x3e0] sm:$0xff]
        %v508 = vld [vmem:[%s318 + $0x3e8] sm:$0xff]
        %v509 = vld [vmem:[%s318 + $0x3f0] sm:$0xff]
        %v510 = vld [vmem:[%s318 + $0x3f8] sm:$0xff]
        %v511 = vpack.c.bf16 %v387, %v383
        %v512 = vpack.c.bf16 %v388, %v384
        %v513 = vpack.c.bf16 %v389, %v385
        %v514 = vpack.c.bf16 %v390, %v386
        %v515 = vpack.c.bf16 %v395, %v391
        %v516 = vpack.c.bf16 %v396, %v392
        %v517 = vpack.c.bf16 %v397, %v393
        %v518 = vpack.c.bf16 %v398, %v394
        %v519 = vpack.c.bf16 %v403, %v399
        %v520 = vpack.c.bf16 %v404, %v400
        %v521 = vpack.c.bf16 %v405, %v401
        %v522 = vpack.c.bf16 %v406, %v402
        %v523 = vpack.c.bf16 %v411, %v407
        %v524 = vpack.c.bf16 %v412, %v408
        %v525 = vpack.c.bf16 %v413, %v409
        %v526 = vpack.c.bf16 %v414, %v410
        %v527 = vpack.c.bf16 %v419, %v415
        %v528 = vpack.c.bf16 %v420, %v416
        %v529 = vpack.c.bf16 %v421, %v417
        %v530 = vpack.c.bf16 %v422, %v418
        %v531 = vpack.c.bf16 %v427, %v423
        %v532 = vpack.c.bf16 %v428, %v424
        %v533 = vpack.c.bf16 %v429, %v425
        %v534 = vpack.c.bf16 %v430, %v426
        %v535 = vpack.c.bf16 %v435, %v431
        %v536 = vpack.c.bf16 %v436, %v432
        %v537 = vpack.c.bf16 %v437, %v433
        %v538 = vpack.c.bf16 %v438, %v434
        %v539 = vpack.c.bf16 %v443, %v439
        %v540 = vpack.c.bf16 %v444, %v440
        %v541 = vpack.c.bf16 %v445, %v441
        %v542 = vpack.c.bf16 %v446, %v442
        %v543 = vpack.c.bf16 %v451, %v447
        %v544 = vpack.c.bf16 %v452, %v448
        %v545 = vpack.c.bf16 %v453, %v449
        %v546 = vpack.c.bf16 %v454, %v450
        %v547 = vpack.c.bf16 %v459, %v455
        %v548 = vpack.c.bf16 %v460, %v456
        %v549 = vpack.c.bf16 %v461, %v457
        %v550 = vpack.c.bf16 %v462, %v458
        %v551 = vpack.c.bf16 %v467, %v463
        %v552 = vpack.c.bf16 %v468, %v464
        %v553 = vpack.c.bf16 %v469, %v465
        %v554 = vpack.c.bf16 %v470, %v466
        %v555 = vpack.c.bf16 %v475, %v471
        %v556 = vpack.c.bf16 %v476, %v472
        %v557 = vpack.c.bf16 %v477, %v473
        %v558 = vpack.c.bf16 %v478, %v474
        %v559 = vpack.c.bf16 %v483, %v479
        %v560 = vpack.c.bf16 %v484, %v480
        %v561 = vpack.c.bf16 %v485, %v481
        %v562 = vpack.c.bf16 %v486, %v482
        %v563 = vpack.c.bf16 %v491, %v487
        %v564 = vpack.c.bf16 %v492, %v488
        %v565 = vpack.c.bf16 %v493, %v489
        %v566 = vpack.c.bf16 %v494, %v490
        %v567 = vpack.c.bf16 %v499, %v495
        %v568 = vpack.c.bf16 %v500, %v496
        %v569 = vpack.c.bf16 %v501, %v497
        %v570 = vpack.c.bf16 %v502, %v498
        %v571 = vpack.c.bf16 %v507, %v503
        %v572 = vpack.c.bf16 %v508, %v504
        %v573 = vpack.c.bf16 %v509, %v505
        %v574 = vpack.c.bf16 %v510, %v506
        %v575 = vld [vmem:[#allocation7] sm:$0xff]
        %v576 = vld [vmem:[#allocation7 + $0x8] sm:$0xff]
        %v577 = vld [vmem:[#allocation7 + $0x10] sm:$0xff]
        %v578 = vld [vmem:[#allocation7 + $0x18] sm:$0xff]
        %v579 = vld [vmem:[#allocation7 + $0x20] sm:$0xff]
        %v580 = vld [vmem:[#allocation7 + $0x28] sm:$0xff]
        %v581 = vld [vmem:[#allocation7 + $0x30] sm:$0xff]
        %v582 = vld [vmem:[#allocation7 + $0x38] sm:$0xff]
        %v583 = vld [vmem:[#allocation7 + $0x40] sm:$0xff]
        %v584 = vld [vmem:[#allocation7 + $0x48] sm:$0xff]
        %v585 = vld [vmem:[#allocation7 + $0x50] sm:$0xff]
        %v586 = vld [vmem:[#allocation7 + $0x58] sm:$0xff]
        %v587 = vld [vmem:[#allocation7 + $0x60] sm:$0xff]
        %v588 = vld [vmem:[#allocation7 + $0x68] sm:$0xff]
        %v589 = vld [vmem:[#allocation7 + $0x70] sm:$0xff]
        %v590 = vld [vmem:[#allocation7 + $0x78] sm:$0xff]
        %v591 = vld [vmem:[#allocation7 + $0x80] sm:$0xff]
        %v592 = vld [vmem:[#allocation7 + $0x88] sm:$0xff]
        %v593 = vld [vmem:[#allocation7 + $0x90] sm:$0xff]
        %v594 = vld [vmem:[#allocation7 + $0x98] sm:$0xff]
        %v595 = vld [vmem:[#allocation7 + $0xa0] sm:$0xff]
        %v596 = vld [vmem:[#allocation7 + $0xa8] sm:$0xff]
        %v597 = vld [vmem:[#allocation7 + $0xb0] sm:$0xff]
        %v598 = vld [vmem:[#allocation7 + $0xb8] sm:$0xff]
        %v599 = vld [vmem:[#allocation7 + $0xc0] sm:$0xff]
        %v600 = vld [vmem:[#allocation7 + $0xc8] sm:$0xff]
        %v601 = vld [vmem:[#allocation7 + $0xd0] sm:$0xff]
        %v602 = vld [vmem:[#allocation7 + $0xd8] sm:$0xff]
        %v603 = vld [vmem:[#allocation7 + $0xe0] sm:$0xff]
        %v604 = vld [vmem:[#allocation7 + $0xe8] sm:$0xff]
        %v605 = vld [vmem:[#allocation7 + $0xf0] sm:$0xff]
        %v606 = vld [vmem:[#allocation7 + $0xf8] sm:$0xff]
        %v607 = vld [vmem:[#allocation7 + $0x100] sm:$0xff]
        %v608 = vld [vmem:[#allocation7 + $0x108] sm:$0xff]
        %v609 = vld [vmem:[#allocation7 + $0x110] sm:$0xff]
        %v610 = vld [vmem:[#allocation7 + $0x118] sm:$0xff]
        %v611 = vld [vmem:[#allocation7 + $0x120] sm:$0xff]
        %v612 = vld [vmem:[#allocation7 + $0x128] sm:$0xff]
        %v613 = vld [vmem:[#allocation7 + $0x130] sm:$0xff]
        %v614 = vld [vmem:[#allocation7 + $0x138] sm:$0xff]
        %v615 = vld [vmem:[#allocation7 + $0x140] sm:$0xff]
        %v616 = vld [vmem:[#allocation7 + $0x148] sm:$0xff]
        %v617 = vld [vmem:[#allocation7 + $0x150] sm:$0xff]
        %v618 = vld [vmem:[#allocation7 + $0x158] sm:$0xff]
        %v619 = vld [vmem:[#allocation7 + $0x160] sm:$0xff]
        %v620 = vld [vmem:[#allocation7 + $0x168] sm:$0xff]
        %v621 = vld [vmem:[#allocation7 + $0x170] sm:$0xff]
        %v622 = vld [vmem:[#allocation7 + $0x178] sm:$0xff]
        %v623 = vld [vmem:[#allocation7 + $0x180] sm:$0xff]
        %v624 = vld [vmem:[#allocation7 + $0x188] sm:$0xff]
        %v625 = vld [vmem:[#allocation7 + $0x190] sm:$0xff]
        %v626 = vld [vmem:[#allocation7 + $0x198] sm:$0xff]
        %v627 = vld [vmem:[#allocation7 + $0x1a0] sm:$0xff]
        %v628 = vld [vmem:[#allocation7 + $0x1a8] sm:$0xff]
        %v629 = vld [vmem:[#allocation7 + $0x1b0] sm:$0xff]
        %v630 = vld [vmem:[#allocation7 + $0x1b8] sm:$0xff]
        %v631 = vld [vmem:[#allocation7 + $0x1c0] sm:$0xff]
        %v632 = vld [vmem:[#allocation7 + $0x1c8] sm:$0xff]
        %v633 = vld [vmem:[#allocation7 + $0x1d0] sm:$0xff]
        %v634 = vld [vmem:[#allocation7 + $0x1d8] sm:$0xff]
        %v635 = vld [vmem:[#allocation7 + $0x1e0] sm:$0xff]
        %v636 = vld [vmem:[#allocation7 + $0x1e8] sm:$0xff]
        %v637 = vld [vmem:[#allocation7 + $0x1f0] sm:$0xff]
        %v638 = vld [vmem:[#allocation7 + $0x1f8] sm:$0xff]
        %v639 = vld [vmem:[%s328] sm:$0xff]
        %v640 = vld [vmem:[%s328 + $0x8] sm:$0xff]
        %v641 = vld [vmem:[%s328 + $0x10] sm:$0xff]
        %v642 = vld [vmem:[%s328 + $0x18] sm:$0xff]
        %v643 = vld [vmem:[%s328 + $0x20] sm:$0xff]
        %v644 = vld [vmem:[%s328 + $0x28] sm:$0xff]
        %v645 = vld [vmem:[%s328 + $0x30] sm:$0xff]
        %v646 = vld [vmem:[%s328 + $0x38] sm:$0xff]
        %v647 = vld [vmem:[%s328 + $0x40] sm:$0xff]
        %v648 = vld [vmem:[%s328 + $0x48] sm:$0xff]
        %v649 = vld [vmem:[%s328 + $0x50] sm:$0xff]
        %v650 = vld [vmem:[%s328 + $0x58] sm:$0xff]
        %v651 = vld [vmem:[%s328 + $0x60] sm:$0xff]
        %v652 = vld [vmem:[%s328 + $0x68] sm:$0xff]
        %v653 = vld [vmem:[%s328 + $0x70] sm:$0xff]
        %v654 = vld [vmem:[%s328 + $0x78] sm:$0xff]
        %v655 = vld [vmem:[%s328 + $0x80] sm:$0xff]
        %v656 = vld [vmem:[%s328 + $0x88] sm:$0xff]
        %v657 = vld [vmem:[%s328 + $0x90] sm:$0xff]
        %v658 = vld [vmem:[%s328 + $0x98] sm:$0xff]
        %v659 = vld [vmem:[%s328 + $0xa0] sm:$0xff]
        %v660 = vld [vmem:[%s328 + $0xa8] sm:$0xff]
        %v661 = vld [vmem:[%s328 + $0xb0] sm:$0xff]
        %v662 = vld [vmem:[%s328 + $0xb8] sm:$0xff]
        %v663 = vld [vmem:[%s328 + $0xc0] sm:$0xff]
        %v664 = vld [vmem:[%s328 + $0xc8] sm:$0xff]
        %v665 = vld [vmem:[%s328 + $0xd0] sm:$0xff]
        %v666 = vld [vmem:[%s328 + $0xd8] sm:$0xff]
        %v667 = vld [vmem:[%s328 + $0xe0] sm:$0xff]
        %v668 = vld [vmem:[%s328 + $0xe8] sm:$0xff]
        %v669 = vld [vmem:[%s328 + $0xf0] sm:$0xff]
        %v670 = vld [vmem:[%s328 + $0xf8] sm:$0xff]
        %v671 = vld [vmem:[%s328 + $0x100] sm:$0xff]
        %v672 = vld [vmem:[%s328 + $0x108] sm:$0xff]
        %v673 = vld [vmem:[%s328 + $0x110] sm:$0xff]
        %v674 = vld [vmem:[%s328 + $0x118] sm:$0xff]
        %v675 = vld [vmem:[%s328 + $0x120] sm:$0xff]
        %v676 = vld [vmem:[%s328 + $0x128] sm:$0xff]
        %v677 = vld [vmem:[%s328 + $0x130] sm:$0xff]
        %v678 = vld [vmem:[%s328 + $0x138] sm:$0xff]
        %v679 = vld [vmem:[%s328 + $0x140] sm:$0xff]
        %v680 = vld [vmem:[%s328 + $0x148] sm:$0xff]
        %v681 = vld [vmem:[%s328 + $0x150] sm:$0xff]
        %v682 = vld [vmem:[%s328 + $0x158] sm:$0xff]
        %v683 = vld [vmem:[%s328 + $0x160] sm:$0xff]
        %v684 = vld [vmem:[%s328 + $0x168] sm:$0xff]
        %v685 = vld [vmem:[%s328 + $0x170] sm:$0xff]
        %v686 = vld [vmem:[%s328 + $0x178] sm:$0xff]
        %v687 = vld [vmem:[%s328 + $0x180] sm:$0xff]
        %v688 = vld [vmem:[%s328 + $0x188] sm:$0xff]
        %v689 = vld [vmem:[%s328 + $0x190] sm:$0xff]
        %v690 = vld [vmem:[%s328 + $0x198] sm:$0xff]
        %v691 = vld [vmem:[%s328 + $0x1a0] sm:$0xff]
        %v692 = vld [vmem:[%s328 + $0x1a8] sm:$0xff]
        %v693 = vld [vmem:[%s328 + $0x1b0] sm:$0xff]
        %v694 = vld [vmem:[%s328 + $0x1b8] sm:$0xff]
        %v695 = vld [vmem:[%s328 + $0x1c0] sm:$0xff]
        %v696 = vld [vmem:[%s328 + $0x1c8] sm:$0xff]
        %v697 = vld [vmem:[%s328 + $0x1d0] sm:$0xff]
        %v698 = vld [vmem:[%s328 + $0x1d8] sm:$0xff]
        %v699 = vld [vmem:[%s328 + $0x1e0] sm:$0xff]
        %v700 = vld [vmem:[%s328 + $0x1e8] sm:$0xff]
        %v701 = vld [vmem:[%s328 + $0x1f0] sm:$0xff]
        %v702 = vld [vmem:[%s328 + $0x1f8] sm:$0xff]
        %v703 = vld [vmem:[%s328 + $0x200] sm:$0xff]
        %v704 = vld [vmem:[%s328 + $0x208] sm:$0xff]
        %v705 = vld [vmem:[%s328 + $0x210] sm:$0xff]
        %v706 = vld [vmem:[%s328 + $0x218] sm:$0xff]
        %v707 = vld [vmem:[%s328 + $0x220] sm:$0xff]
        %v708 = vld [vmem:[%s328 + $0x228] sm:$0xff]
        %v709 = vld [vmem:[%s328 + $0x230] sm:$0xff]
        %v710 = vld [vmem:[%s328 + $0x238] sm:$0xff]
        %v711 = vld [vmem:[%s328 + $0x240] sm:$0xff]
        %v712 = vld [vmem:[%s328 + $0x248] sm:$0xff]
        %v713 = vld [vmem:[%s328 + $0x250] sm:$0xff]
        %v714 = vld [vmem:[%s328 + $0x258] sm:$0xff]
        %v715 = vld [vmem:[%s328 + $0x260] sm:$0xff]
        %v716 = vld [vmem:[%s328 + $0x268] sm:$0xff]
        %v717 = vld [vmem:[%s328 + $0x270] sm:$0xff]
        %v718 = vld [vmem:[%s328 + $0x278] sm:$0xff]
        %v719 = vld [vmem:[%s328 + $0x280] sm:$0xff]
        %v720 = vld [vmem:[%s328 + $0x288] sm:$0xff]
        %v721 = vld [vmem:[%s328 + $0x290] sm:$0xff]
        %v722 = vld [vmem:[%s328 + $0x298] sm:$0xff]
        %v723 = vld [vmem:[%s328 + $0x2a0] sm:$0xff]
        %v724 = vld [vmem:[%s328 + $0x2a8] sm:$0xff]
        %v725 = vld [vmem:[%s328 + $0x2b0] sm:$0xff]
        %v726 = vld [vmem:[%s328 + $0x2b8] sm:$0xff]
        %v727 = vld [vmem:[%s328 + $0x2c0] sm:$0xff]
        %v728 = vld [vmem:[%s328 + $0x2c8] sm:$0xff]
        %v729 = vld [vmem:[%s328 + $0x2d0] sm:$0xff]
        %v730 = vld [vmem:[%s328 + $0x2d8] sm:$0xff]
        %v731 = vld [vmem:[%s328 + $0x2e0] sm:$0xff]
        %v732 = vld [vmem:[%s328 + $0x2e8] sm:$0xff]
        %v733 = vld [vmem:[%s328 + $0x2f0] sm:$0xff]
        %v734 = vld [vmem:[%s328 + $0x2f8] sm:$0xff]
        %v735 = vld [vmem:[%s328 + $0x300] sm:$0xff]
        %v736 = vld [vmem:[%s328 + $0x308] sm:$0xff]
        %v737 = vld [vmem:[%s328 + $0x310] sm:$0xff]
        %v738 = vld [vmem:[%s328 + $0x318] sm:$0xff]
        %v739 = vld [vmem:[%s328 + $0x320] sm:$0xff]
        %v740 = vld [vmem:[%s328 + $0x328] sm:$0xff]
        %v741 = vld [vmem:[%s328 + $0x330] sm:$0xff]
        %v742 = vld [vmem:[%s328 + $0x338] sm:$0xff]
        %v743 = vld [vmem:[%s328 + $0x340] sm:$0xff]
        %v744 = vld [vmem:[%s328 + $0x348] sm:$0xff]
        %v745 = vld [vmem:[%s328 + $0x350] sm:$0xff]
        %v746 = vld [vmem:[%s328 + $0x358] sm:$0xff]
        %v747 = vld [vmem:[%s328 + $0x360] sm:$0xff]
        %v748 = vld [vmem:[%s328 + $0x368] sm:$0xff]
        %v749 = vld [vmem:[%s328 + $0x370] sm:$0xff]
        %v750 = vld [vmem:[%s328 + $0x378] sm:$0xff]
        %v751 = vld [vmem:[%s328 + $0x380] sm:$0xff]
        %v752 = vld [vmem:[%s328 + $0x388] sm:$0xff]
        %v753 = vld [vmem:[%s328 + $0x390] sm:$0xff]
        %v754 = vld [vmem:[%s328 + $0x398] sm:$0xff]
        %v755 = vld [vmem:[%s328 + $0x3a0] sm:$0xff]
        %v756 = vld [vmem:[%s328 + $0x3a8] sm:$0xff]
        %v757 = vld [vmem:[%s328 + $0x3b0] sm:$0xff]
        %v758 = vld [vmem:[%s328 + $0x3b8] sm:$0xff]
        %v759 = vld [vmem:[%s328 + $0x3c0] sm:$0xff]
        %v760 = vld [vmem:[%s328 + $0x3c8] sm:$0xff]
        %v761 = vld [vmem:[%s328 + $0x3d0] sm:$0xff]
        %v762 = vld [vmem:[%s328 + $0x3d8] sm:$0xff]
        %v763 = vld [vmem:[%s328 + $0x3e0] sm:$0xff]
        %v764 = vld [vmem:[%s328 + $0x3e8] sm:$0xff]
        %v765 = vld [vmem:[%s328 + $0x3f0] sm:$0xff]
        %v766 = vld [vmem:[%s328 + $0x3f8] sm:$0xff]
        %v767 = vpack.c.bf16 %v643, %v639
        %v768 = vpack.c.bf16 %v644, %v640
        %v769 = vpack.c.bf16 %v645, %v641
        %v770 = vpack.c.bf16 %v646, %v642
        %v771 = vpack.c.bf16 %v651, %v647
        %v772 = vpack.c.bf16 %v652, %v648
        %v773 = vpack.c.bf16 %v653, %v649
        %v774 = vpack.c.bf16 %v654, %v650
        %v775 = vpack.c.bf16 %v659, %v655
        %v776 = vpack.c.bf16 %v660, %v656
        %v777 = vpack.c.bf16 %v661, %v657
        %v778 = vpack.c.bf16 %v662, %v658
        %v779 = vpack.c.bf16 %v667, %v663
        %v780 = vpack.c.bf16 %v668, %v664
        %v781 = vpack.c.bf16 %v669, %v665
        %v782 = vpack.c.bf16 %v670, %v666
        %v783 = vpack.c.bf16 %v675, %v671
        %v784 = vpack.c.bf16 %v676, %v672
        %v785 = vpack.c.bf16 %v677, %v673
        %v786 = vpack.c.bf16 %v678, %v674
        %v787 = vpack.c.bf16 %v683, %v679
        %v788 = vpack.c.bf16 %v684, %v680
        %v789 = vpack.c.bf16 %v685, %v681
        %v790 = vpack.c.bf16 %v686, %v682
        %v791 = vpack.c.bf16 %v691, %v687
        %v792 = vpack.c.bf16 %v692, %v688
        %v793 = vpack.c.bf16 %v693, %v689
        %v794 = vpack.c.bf16 %v694, %v690
        %v795 = vpack.c.bf16 %v699, %v695
        %v796 = vpack.c.bf16 %v700, %v696
        %v797 = vpack.c.bf16 %v701, %v697
        %v798 = vpack.c.bf16 %v702, %v698
        %v799 = vpack.c.bf16 %v707, %v703
        %v800 = vpack.c.bf16 %v708, %v704
        %v801 = vpack.c.bf16 %v709, %v705
        %v802 = vpack.c.bf16 %v710, %v706
        %v803 = vpack.c.bf16 %v715, %v711
        %v804 = vpack.c.bf16 %v716, %v712
        %v805 = vpack.c.bf16 %v717, %v713
        %v806 = vpack.c.bf16 %v718, %v714
        %v807 = vpack.c.bf16 %v723, %v719
        %v808 = vpack.c.bf16 %v724, %v720
        %v809 = vpack.c.bf16 %v725, %v721
        %v810 = vpack.c.bf16 %v726, %v722
        %v811 = vpack.c.bf16 %v731, %v727
        %v812 = vpack.c.bf16 %v732, %v728
        %v813 = vpack.c.bf16 %v733, %v729
        %v814 = vpack.c.bf16 %v734, %v730
        %v815 = vpack.c.bf16 %v739, %v735
        %v816 = vpack.c.bf16 %v740, %v736
        %v817 = vpack.c.bf16 %v741, %v737
        %v818 = vpack.c.bf16 %v742, %v738
        %v819 = vpack.c.bf16 %v747, %v743
        %v820 = vpack.c.bf16 %v748, %v744
        %v821 = vpack.c.bf16 %v749, %v745
        %v822 = vpack.c.bf16 %v750, %v746
        %v823 = vpack.c.bf16 %v755, %v751
        %v824 = vpack.c.bf16 %v756, %v752
        %v825 = vpack.c.bf16 %v757, %v753
        %v826 = vpack.c.bf16 %v758, %v754
        %v827 = vpack.c.bf16 %v763, %v759
        %v828 = vpack.c.bf16 %v764, %v760
        %v829 = vpack.c.bf16 %v765, %v761
        %v830 = vpack.c.bf16 %v766, %v762
        %v831 = vld [vmem:[#allocation8] sm:$0xff]
        %v832 = vld [vmem:[#allocation8 + $0x8] sm:$0xff]
        %v833 = vld [vmem:[#allocation8 + $0x10] sm:$0xff]
        %v834 = vld [vmem:[#allocation8 + $0x18] sm:$0xff]
        %v835 = vld [vmem:[#allocation8 + $0x20] sm:$0xff]
        %v836 = vld [vmem:[#allocation8 + $0x28] sm:$0xff]
        %v837 = vld [vmem:[#allocation8 + $0x30] sm:$0xff]
        %v838 = vld [vmem:[#allocation8 + $0x38] sm:$0xff]
        %v839 = vld [vmem:[#allocation8 + $0x40] sm:$0xff]
        %v840 = vld [vmem:[#allocation8 + $0x48] sm:$0xff]
        %v841 = vld [vmem:[#allocation8 + $0x50] sm:$0xff]
        %v842 = vld [vmem:[#allocation8 + $0x58] sm:$0xff]
        %v843 = vld [vmem:[#allocation8 + $0x60] sm:$0xff]
        %v844 = vld [vmem:[#allocation8 + $0x68] sm:$0xff]
        %v845 = vld [vmem:[#allocation8 + $0x70] sm:$0xff]
        %v846 = vld [vmem:[#allocation8 + $0x78] sm:$0xff]
        %v847 = vld [vmem:[#allocation8 + $0x80] sm:$0xff]
        %v848 = vld [vmem:[#allocation8 + $0x88] sm:$0xff]
        %v849 = vld [vmem:[#allocation8 + $0x90] sm:$0xff]
        %v850 = vld [vmem:[#allocation8 + $0x98] sm:$0xff]
        %v851 = vld [vmem:[#allocation8 + $0xa0] sm:$0xff]
        %v852 = vld [vmem:[#allocation8 + $0xa8] sm:$0xff]
        %v853 = vld [vmem:[#allocation8 + $0xb0] sm:$0xff]
        %v854 = vld [vmem:[#allocation8 + $0xb8] sm:$0xff]
        %v855 = vld [vmem:[#allocation8 + $0xc0] sm:$0xff]
        %v856 = vld [vmem:[#allocation8 + $0xc8] sm:$0xff]
        %v857 = vld [vmem:[#allocation8 + $0xd0] sm:$0xff]
        %v858 = vld [vmem:[#allocation8 + $0xd8] sm:$0xff]
        %v859 = vld [vmem:[#allocation8 + $0xe0] sm:$0xff]
        %v860 = vld [vmem:[#allocation8 + $0xe8] sm:$0xff]
        %v861 = vld [vmem:[#allocation8 + $0xf0] sm:$0xff]
        %v862 = vld [vmem:[#allocation8 + $0xf8] sm:$0xff]
        %v863 = vld [vmem:[#allocation8 + $0x100] sm:$0xff]
        %v864 = vld [vmem:[#allocation8 + $0x108] sm:$0xff]
        %v865 = vld [vmem:[#allocation8 + $0x110] sm:$0xff]
        %v866 = vld [vmem:[#allocation8 + $0x118] sm:$0xff]
        %v867 = vld [vmem:[#allocation8 + $0x120] sm:$0xff]
        %v868 = vld [vmem:[#allocation8 + $0x128] sm:$0xff]
        %v869 = vld [vmem:[#allocation8 + $0x130] sm:$0xff]
        %v870 = vld [vmem:[#allocation8 + $0x138] sm:$0xff]
        %v871 = vld [vmem:[#allocation8 + $0x140] sm:$0xff]
        %v872 = vld [vmem:[#allocation8 + $0x148] sm:$0xff]
        %v873 = vld [vmem:[#allocation8 + $0x150] sm:$0xff]
        %v874 = vld [vmem:[#allocation8 + $0x158] sm:$0xff]
        %v875 = vld [vmem:[#allocation8 + $0x160] sm:$0xff]
        %v876 = vld [vmem:[#allocation8 + $0x168] sm:$0xff]
        %v877 = vld [vmem:[#allocation8 + $0x170] sm:$0xff]
        %v878 = vld [vmem:[#allocation8 + $0x178] sm:$0xff]
        %v879 = vld [vmem:[#allocation8 + $0x180] sm:$0xff]
        %v880 = vld [vmem:[#allocation8 + $0x188] sm:$0xff]
        %v881 = vld [vmem:[#allocation8 + $0x190] sm:$0xff]
        %v882 = vld [vmem:[#allocation8 + $0x198] sm:$0xff]
        %v883 = vld [vmem:[#allocation8 + $0x1a0] sm:$0xff]
        %v884 = vld [vmem:[#allocation8 + $0x1a8] sm:$0xff]
        %v885 = vld [vmem:[#allocation8 + $0x1b0] sm:$0xff]
        %v886 = vld [vmem:[#allocation8 + $0x1b8] sm:$0xff]
        %v887 = vld [vmem:[#allocation8 + $0x1c0] sm:$0xff]
        %v888 = vld [vmem:[#allocation8 + $0x1c8] sm:$0xff]
        %v889 = vld [vmem:[#allocation8 + $0x1d0] sm:$0xff]
        %v890 = vld [vmem:[#allocation8 + $0x1d8] sm:$0xff]
        %v891 = vld [vmem:[#allocation8 + $0x1e0] sm:$0xff]
        %v892 = vld [vmem:[#allocation8 + $0x1e8] sm:$0xff]
        %v893 = vld [vmem:[#allocation8 + $0x1f0] sm:$0xff]
        %v894 = vld [vmem:[#allocation8 + $0x1f8] sm:$0xff]
        %v959 = vunpack.c.l.b16 %v831
        %v960 = vunpack.c.h.b16 %v831
        %v961 = vunpack.c.l.b16 %v832
        %v962 = vunpack.c.h.b16 %v832
        %v963 = vunpack.c.l.b16 %v833
        %v964 = vunpack.c.h.b16 %v833
        %v965 = vunpack.c.l.b16 %v834
        %v966 = vunpack.c.h.b16 %v834
        %v967 = vunpack.c.l.b16 %v835
        %v968 = vunpack.c.h.b16 %v835
        %v969 = vunpack.c.l.b16 %v836
        %v970 = vunpack.c.h.b16 %v836
        %v971 = vunpack.c.l.b16 %v837
        %v972 = vunpack.c.h.b16 %v837
        %v973 = vunpack.c.l.b16 %v838
        %v974 = vunpack.c.h.b16 %v838
        %v975 = vunpack.c.l.b16 %v839
        %v976 = vunpack.c.h.b16 %v839
        %v977 = vunpack.c.l.b16 %v840
        %v978 = vunpack.c.h.b16 %v840
        %v979 = vunpack.c.l.b16 %v841
        %v980 = vunpack.c.h.b16 %v841
        %v981 = vunpack.c.l.b16 %v842
        %v982 = vunpack.c.h.b16 %v842
        %v983 = vunpack.c.l.b16 %v843
        %v984 = vunpack.c.h.b16 %v843
        %v985 = vunpack.c.l.b16 %v844
        %v986 = vunpack.c.h.b16 %v844
        %v987 = vunpack.c.l.b16 %v845
        %v988 = vunpack.c.h.b16 %v845
        %v989 = vunpack.c.l.b16 %v846
        %v990 = vunpack.c.h.b16 %v846
        %v991 = vunpack.c.l.b16 %v847
        %v992 = vunpack.c.h.b16 %v847
        %v993 = vunpack.c.l.b16 %v848
        %v994 = vunpack.c.h.b16 %v848
        %v995 = vunpack.c.l.b16 %v849
        %v996 = vunpack.c.h.b16 %v849
        %v997 = vunpack.c.l.b16 %v850
        %v998 = vunpack.c.h.b16 %v850
        %v999 = vunpack.c.l.b16 %v851
        %v1000 = vunpack.c.h.b16 %v851
        %v1001 = vunpack.c.l.b16 %v852
        %v1002 = vunpack.c.h.b16 %v852
        %v1003 = vunpack.c.l.b16 %v853
        %v1004 = vunpack.c.h.b16 %v853
        %v1005 = vunpack.c.l.b16 %v854
        %v1006 = vunpack.c.h.b16 %v854
        %v1007 = vunpack.c.l.b16 %v855
        %v1008 = vunpack.c.h.b16 %v855
        %v1009 = vunpack.c.l.b16 %v856
        %v1010 = vunpack.c.h.b16 %v856
        %v1011 = vunpack.c.l.b16 %v857
        %v1012 = vunpack.c.h.b16 %v857
        %v1013 = vunpack.c.l.b16 %v858
        %v1014 = vunpack.c.h.b16 %v858
        %v1015 = vunpack.c.l.b16 %v859
        %v1016 = vunpack.c.h.b16 %v859
        %v1017 = vunpack.c.l.b16 %v860
        %v1018 = vunpack.c.h.b16 %v860
        %v1019 = vunpack.c.l.b16 %v861
        %v1020 = vunpack.c.h.b16 %v861
        %v1021 = vunpack.c.l.b16 %v862
        %v1022 = vunpack.c.h.b16 %v862
        %v1023 = vunpack.c.l.b16 %v863
        %v1024 = vunpack.c.h.b16 %v863
        %v1025 = vunpack.c.l.b16 %v864
        %v1026 = vunpack.c.h.b16 %v864
        %v1027 = vunpack.c.l.b16 %v865
        %v1028 = vunpack.c.h.b16 %v865
        %v1029 = vunpack.c.l.b16 %v866
        %v1030 = vunpack.c.h.b16 %v866
        %v1031 = vunpack.c.l.b16 %v867
        %v1032 = vunpack.c.h.b16 %v867
        %v1033 = vunpack.c.l.b16 %v868
        %v1034 = vunpack.c.h.b16 %v868
        %v1035 = vunpack.c.l.b16 %v869
        %v1036 = vunpack.c.h.b16 %v869
        %v1037 = vunpack.c.l.b16 %v870
        %v1038 = vunpack.c.h.b16 %v870
        %v1039 = vunpack.c.l.b16 %v871
        %v1040 = vunpack.c.h.b16 %v871
        %v1041 = vunpack.c.l.b16 %v872
        %v1042 = vunpack.c.h.b16 %v872
        %v1043 = vunpack.c.l.b16 %v873
        %v1044 = vunpack.c.h.b16 %v873
        %v1045 = vunpack.c.l.b16 %v874
        %v1046 = vunpack.c.h.b16 %v874
        %v1047 = vunpack.c.l.b16 %v875
        %v1048 = vunpack.c.h.b16 %v875
        %v1049 = vunpack.c.l.b16 %v876
        %v1050 = vunpack.c.h.b16 %v876
        %v1051 = vunpack.c.l.b16 %v877
        %v1052 = vunpack.c.h.b16 %v877
        %v1053 = vunpack.c.l.b16 %v878
        %v1054 = vunpack.c.h.b16 %v878
        %v1055 = vunpack.c.l.b16 %v879
        %v1056 = vunpack.c.h.b16 %v879
        %v1057 = vunpack.c.l.b16 %v880
        %v1058 = vunpack.c.h.b16 %v880
        %v1059 = vunpack.c.l.b16 %v881
        %v1060 = vunpack.c.h.b16 %v881
        %v1061 = vunpack.c.l.b16 %v882
        %v1062 = vunpack.c.h.b16 %v882
        %v1063 = vunpack.c.l.b16 %v883
        %v1064 = vunpack.c.h.b16 %v883
        %v1065 = vunpack.c.l.b16 %v884
        %v1066 = vunpack.c.h.b16 %v884
        %v1067 = vunpack.c.l.b16 %v885
        %v1068 = vunpack.c.h.b16 %v885
        %v1069 = vunpack.c.l.b16 %v886
        %v1070 = vunpack.c.h.b16 %v886
        %v1071 = vunpack.c.l.b16 %v887
        %v1072 = vunpack.c.h.b16 %v887
        %v1073 = vunpack.c.l.b16 %v888
        %v1074 = vunpack.c.h.b16 %v888
        %v1075 = vunpack.c.l.b16 %v889
        %v1076 = vunpack.c.h.b16 %v889
        %v1077 = vunpack.c.l.b16 %v890
        %v1078 = vunpack.c.h.b16 %v890
        %v1079 = vunpack.c.l.b16 %v891
        %v1080 = vunpack.c.h.b16 %v891
        %v1081 = vunpack.c.l.b16 %v892
        %v1082 = vunpack.c.h.b16 %v892
        %v1083 = vunpack.c.l.b16 %v893
        %v1084 = vunpack.c.h.b16 %v893
        %v1085 = vunpack.c.l.b16 %v894
        %v1086 = vunpack.c.h.b16 %v894
        %v1087 = vpack.c.b16 %v961, %v959
        %v1088 = vpack.c.b16 %v962, %v960
        %v1089 = vpack.c.b16 %v965, %v963
        %v1090 = vpack.c.b16 %v966, %v964
        %v1091 = vpack.c.b16 %v969, %v967
        %v1092 = vpack.c.b16 %v970, %v968
        %v1093 = vpack.c.b16 %v973, %v971
        %v1094 = vpack.c.b16 %v974, %v972
        %v1095 = vpack.c.b16 %v977, %v975
        %v1096 = vpack.c.b16 %v978, %v976
        %v1097 = vpack.c.b16 %v981, %v979
        %v1098 = vpack.c.b16 %v982, %v980
        %v1099 = vpack.c.b16 %v985, %v983
        %v1100 = vpack.c.b16 %v986, %v984
        %v1101 = vpack.c.b16 %v989, %v987
        %v1102 = vpack.c.b16 %v990, %v988
        %v1103 = vpack.c.b16 %v993, %v991
        %v1104 = vpack.c.b16 %v994, %v992
        %v1105 = vpack.c.b16 %v997, %v995
        %v1106 = vpack.c.b16 %v998, %v996
        %v1107 = vpack.c.b16 %v1001, %v999
        %v1108 = vpack.c.b16 %v1002, %v1000
        %v1109 = vpack.c.b16 %v1005, %v1003
        %v1110 = vpack.c.b16 %v1006, %v1004
        %v1111 = vpack.c.b16 %v1009, %v1007
        %v1112 = vpack.c.b16 %v1010, %v1008
        %v1113 = vpack.c.b16 %v1013, %v1011
        %v1114 = vpack.c.b16 %v1014, %v1012
        %v1115 = vpack.c.b16 %v1017, %v1015
        %v1116 = vpack.c.b16 %v1018, %v1016
        %v1117 = vpack.c.b16 %v1021, %v1019
        %v1118 = vpack.c.b16 %v1022, %v1020
        %v1119 = vpack.c.b16 %v1025, %v1023
        %v1120 = vpack.c.b16 %v1026, %v1024
        %v1121 = vpack.c.b16 %v1029, %v1027
        %v1122 = vpack.c.b16 %v1030, %v1028
        %v1123 = vpack.c.b16 %v1033, %v1031
        %v1124 = vpack.c.b16 %v1034, %v1032
        %v1125 = vpack.c.b16 %v1037, %v1035
        %v1126 = vpack.c.b16 %v1038, %v1036
        %v1127 = vpack.c.b16 %v1041, %v1039
        %v1128 = vpack.c.b16 %v1042, %v1040
        %v1129 = vpack.c.b16 %v1045, %v1043
        %v1130 = vpack.c.b16 %v1046, %v1044
        %v1131 = vpack.c.b16 %v1049, %v1047
        %v1132 = vpack.c.b16 %v1050, %v1048
        %v1133 = vpack.c.b16 %v1053, %v1051
        %v1134 = vpack.c.b16 %v1054, %v1052
        %v1135 = vpack.c.b16 %v1057, %v1055
        %v1136 = vpack.c.b16 %v1058, %v1056
        %v1137 = vpack.c.b16 %v1061, %v1059
        %v1138 = vpack.c.b16 %v1062, %v1060
        %v1139 = vpack.c.b16 %v1065, %v1063
        %v1140 = vpack.c.b16 %v1066, %v1064
        %v1141 = vpack.c.b16 %v1069, %v1067
        %v1142 = vpack.c.b16 %v1070, %v1068
        %v1143 = vpack.c.b16 %v1073, %v1071
        %v1144 = vpack.c.b16 %v1074, %v1072
        %v1145 = vpack.c.b16 %v1077, %v1075
        %v1146 = vpack.c.b16 %v1078, %v1076
        %v1147 = vpack.c.b16 %v1081, %v1079
        %v1148 = vpack.c.b16 %v1082, %v1080
        %v1149 = vpack.c.b16 %v1085, %v1083
        %v1150 = vpack.c.b16 %v1086, %v1084
        %1215 = vmatpush.bf16.msra.mxu0 %v1101
        %1216 = vmatpush.bf16.msra.mxu0 %v1099
        %1217 = vmatpush.bf16.msra.mxu0 %v1097
        %1218 = vmatpush.bf16.msra.mxu0 %v1095
        %1219 = vmatpush.bf16.msra.mxu0 %v1093
        %1220 = vmatpush.bf16.msra.mxu0 %v1091
        %1221 = vmatpush.bf16.msra.mxu0 %v1089
        %1222 = vmatpush.bf16.msra.mxu0 %v1087
        %1223 = vmatmul.bf16.gmra.mxu0 %v767
        %v1224 = vpop.f32.mrf.mxu0
        %v1225 = vadd.f32 0.0, %v1224
        %v1226 = vpop.f32.mrf.mxu0
        %v1227 = vadd.f32 0.0, %v1226
        %1228 = vmatmul.bf16.gmra.mxu0 %v771
        %v1229 = vpop.f32.mrf.mxu0
        %v1230 = vadd.f32 0.0, %v1229
        %v1231 = vpop.f32.mrf.mxu0
        %v1232 = vadd.f32 0.0, %v1231
        %1233 = vmatmul.bf16.gmra.mxu0 %v775
        %v1234 = vpop.f32.mrf.mxu0
        %v1235 = vadd.f32 0.0, %v1234
        %v1236 = vpop.f32.mrf.mxu0
        %v1237 = vadd.f32 0.0, %v1236
        %1238 = vmatmul.bf16.gmra.mxu0 %v779
        %v1239 = vpop.f32.mrf.mxu0
        %v1240 = vadd.f32 0.0, %v1239
        %v1241 = vpop.f32.mrf.mxu0
        %v1242 = vadd.f32 0.0, %v1241
        %1243 = vmatmul.bf16.gmra.mxu0 %v783
        %v1244 = vpop.f32.mrf.mxu0
        %v1245 = vadd.f32 0.0, %v1244
        %v1246 = vpop.f32.mrf.mxu0
        %v1247 = vadd.f32 0.0, %v1246
        %1248 = vmatmul.bf16.gmra.mxu0 %v787
        %v1249 = vpop.f32.mrf.mxu0
        %v1250 = vadd.f32 0.0, %v1249
        %v1251 = vpop.f32.mrf.mxu0
        %v1252 = vadd.f32 0.0, %v1251
        %1253 = vmatmul.bf16.gmra.mxu0 %v791
        %v1254 = vpop.f32.mrf.mxu0
        %v1255 = vadd.f32 0.0, %v1254
        %v1256 = vpop.f32.mrf.mxu0
        %v1257 = vadd.f32 0.0, %v1256
        %1258 = vmatmul.bf16.gmra.mxu0 %v795
        %v1259 = vpop.f32.mrf.mxu0
        %v1260 = vadd.f32 0.0, %v1259
        %v1261 = vpop.f32.mrf.mxu0
        %v1262 = vadd.f32 0.0, %v1261
        %1263 = vmatmul.bf16.gmra.mxu0 %v799
        %v1264 = vpop.f32.mrf.mxu0
        %v1265 = vadd.f32 0.0, %v1264
        %v1266 = vpop.f32.mrf.mxu0
        %v1267 = vadd.f32 0.0, %v1266
        %1268 = vmatmul.bf16.gmra.mxu0 %v803
        %v1269 = vpop.f32.mrf.mxu0
        %v1270 = vadd.f32 0.0, %v1269
        %v1271 = vpop.f32.mrf.mxu0
        %v1272 = vadd.f32 0.0, %v1271
        %1273 = vmatmul.bf16.gmra.mxu0 %v807
        %v1274 = vpop.f32.mrf.mxu0
        %v1275 = vadd.f32 0.0, %v1274
        %v1276 = vpop.f32.mrf.mxu0
        %v1277 = vadd.f32 0.0, %v1276
        %1278 = vmatmul.bf16.gmra.mxu0 %v811
        %v1279 = vpop.f32.mrf.mxu0
        %v1280 = vadd.f32 0.0, %v1279
        %v1281 = vpop.f32.mrf.mxu0
        %v1282 = vadd.f32 0.0, %v1281
        %1283 = vmatmul.bf16.gmra.mxu0 %v815
        %v1284 = vpop.f32.mrf.mxu0
        %v1285 = vadd.f32 0.0, %v1284
        %v1286 = vpop.f32.mrf.mxu0
        %v1287 = vadd.f32 0.0, %v1286
        %1288 = vmatmul.bf16.gmra.mxu0 %v819
        %v1289 = vpop.f32.mrf.mxu0
        %v1290 = vadd.f32 0.0, %v1289
        %v1291 = vpop.f32.mrf.mxu0
        %v1292 = vadd.f32 0.0, %v1291
        %1293 = vmatmul.bf16.gmra.mxu0 %v823
        %v1294 = vpop.f32.mrf.mxu0
        %v1295 = vadd.f32 0.0, %v1294
        %v1296 = vpop.f32.mrf.mxu0
        %v1297 = vadd.f32 0.0, %v1296
        %1298 = vmatmul.bf16.gmra.mxu0 %v827
        %v1299 = vpop.f32.mrf.mxu0
        %v1300 = vadd.f32 0.0, %v1299
        %v1301 = vpop.f32.mrf.mxu0
        %v1302 = vadd.f32 0.0, %v1301
        %1303 = vdwg.mxu0
        %1304 = vmatpush.bf16.msra.mxu0 %v1117
        %1305 = vmatpush.bf16.msra.mxu0 %v1115
        %1306 = vmatpush.bf16.msra.mxu0 %v1113
        %1307 = vmatpush.bf16.msra.mxu0 %v1111
        %1308 = vmatpush.bf16.msra.mxu0 %v1109
        %1309 = vmatpush.bf16.msra.mxu0 %v1107
        %1310 = vmatpush.bf16.msra.mxu0 %v1105
        %1311 = vmatpush.bf16.msra.mxu0 %v1103
        %1312 = vmatmul.bf16.gmra.mxu0 %v768
        %v1313 = vpop.f32.mrf.mxu0
        %v1314 = vadd.f32 %v1225, %v1313
        %v1315 = vpop.f32.mrf.mxu0
        %v1316 = vadd.f32 %v1227, %v1315
        %1317 = vmatmul.bf16.gmra.mxu0 %v772
        %v1318 = vpop.f32.mrf.mxu0
        %v1319 = vadd.f32 %v1230, %v1318
        %v1320 = vpop.f32.mrf.mxu0
        %v1321 = vadd.f32 %v1232, %v1320
        %1322 = vmatmul.bf16.gmra.mxu0 %v776
        %v1323 = vpop.f32.mrf.mxu0
        %v1324 = vadd.f32 %v1235, %v1323
        %v1325 = vpop.f32.mrf.mxu0
        %v1326 = vadd.f32 %v1237, %v1325
        %1327 = vmatmul.bf16.gmra.mxu0 %v780
        %v1328 = vpop.f32.mrf.mxu0
        %v1329 = vadd.f32 %v1240, %v1328
        %v1330 = vpop.f32.mrf.mxu0
        %v1331 = vadd.f32 %v1242, %v1330
        %1332 = vmatmul.bf16.gmra.mxu0 %v784
        %v1333 = vpop.f32.mrf.mxu0
        %v1334 = vadd.f32 %v1245, %v1333
        %v1335 = vpop.f32.mrf.mxu0
        %v1336 = vadd.f32 %v1247, %v1335
        %1337 = vmatmul.bf16.gmra.mxu0 %v788
        %v1338 = vpop.f32.mrf.mxu0
        %v1339 = vadd.f32 %v1250, %v1338
        %v1340 = vpop.f32.mrf.mxu0
        %v1341 = vadd.f32 %v1252, %v1340
        %1342 = vmatmul.bf16.gmra.mxu0 %v792
        %v1343 = vpop.f32.mrf.mxu0
        %v1344 = vadd.f32 %v1255, %v1343
        %v1345 = vpop.f32.mrf.mxu0
        %v1346 = vadd.f32 %v1257, %v1345
        %1347 = vmatmul.bf16.gmra.mxu0 %v796
        %v1348 = vpop.f32.mrf.mxu0
        %v1349 = vadd.f32 %v1260, %v1348
        %v1350 = vpop.f32.mrf.mxu0
        %v1351 = vadd.f32 %v1262, %v1350
        %1352 = vmatmul.bf16.gmra.mxu0 %v800
        %v1353 = vpop.f32.mrf.mxu0
        %v1354 = vadd.f32 %v1265, %v1353
        %v1355 = vpop.f32.mrf.mxu0
        %v1356 = vadd.f32 %v1267, %v1355
        %1357 = vmatmul.bf16.gmra.mxu0 %v804
        %v1358 = vpop.f32.mrf.mxu0
        %v1359 = vadd.f32 %v1270, %v1358
        %v1360 = vpop.f32.mrf.mxu0
        %v1361 = vadd.f32 %v1272, %v1360
        %1362 = vmatmul.bf16.gmra.mxu0 %v808
        %v1363 = vpop.f32.mrf.mxu0
        %v1364 = vadd.f32 %v1275, %v1363
        %v1365 = vpop.f32.mrf.mxu0
        %v1366 = vadd.f32 %v1277, %v1365
        %1367 = vmatmul.bf16.gmra.mxu0 %v812
        %v1368 = vpop.f32.mrf.mxu0
        %v1369 = vadd.f32 %v1280, %v1368
        %v1370 = vpop.f32.mrf.mxu0
        %v1371 = vadd.f32 %v1282, %v1370
        %1372 = vmatmul.bf16.gmra.mxu0 %v816
        %v1373 = vpop.f32.mrf.mxu0
        %v1374 = vadd.f32 %v1285, %v1373
        %v1375 = vpop.f32.mrf.mxu0
        %v1376 = vadd.f32 %v1287, %v1375
        %1377 = vmatmul.bf16.gmra.mxu0 %v820
        %v1378 = vpop.f32.mrf.mxu0
        %v1379 = vadd.f32 %v1290, %v1378
        %v1380 = vpop.f32.mrf.mxu0
        %v1381 = vadd.f32 %v1292, %v1380
        %1382 = vmatmul.bf16.gmra.mxu0 %v824
        %v1383 = vpop.f32.mrf.mxu0
        %v1384 = vadd.f32 %v1295, %v1383
        %v1385 = vpop.f32.mrf.mxu0
        %v1386 = vadd.f32 %v1297, %v1385
        %1387 = vmatmul.bf16.gmra.mxu0 %v828
        %v1388 = vpop.f32.mrf.mxu0
        %v1389 = vadd.f32 %v1300, %v1388
        %v1390 = vpop.f32.mrf.mxu0
        %v1391 = vadd.f32 %v1302, %v1390
        %1392 = vdwg.mxu0
        %1393 = vmatpush.bf16.msra.mxu0 %v1133
        %1394 = vmatpush.bf16.msra.mxu0 %v1131
        %1395 = vmatpush.bf16.msra.mxu0 %v1129
        %1396 = vmatpush.bf16.msra.mxu0 %v1127
        %1397 = vmatpush.bf16.msra.mxu0 %v1125
        %1398 = vmatpush.bf16.msra.mxu0 %v1123
        %1399 = vmatpush.bf16.msra.mxu0 %v1121
        %1400 = vmatpush.bf16.msra.mxu0 %v1119
        %1401 = vmatmul.bf16.gmra.mxu0 %v769
        %v1402 = vpop.f32.mrf.mxu0
        %v1403 = vadd.f32 %v1314, %v1402
        %v1404 = vpop.f32.mrf.mxu0
        %v1405 = vadd.f32 %v1316, %v1404
        %1406 = vmatmul.bf16.gmra.mxu0 %v773
        %v1407 = vpop.f32.mrf.mxu0
        %v1408 = vadd.f32 %v1319, %v1407
        %v1409 = vpop.f32.mrf.mxu0
        %v1410 = vadd.f32 %v1321, %v1409
        %1411 = vmatmul.bf16.gmra.mxu0 %v777
        %v1412 = vpop.f32.mrf.mxu0
        %v1413 = vadd.f32 %v1324, %v1412
        %v1414 = vpop.f32.mrf.mxu0
        %v1415 = vadd.f32 %v1326, %v1414
        %1416 = vmatmul.bf16.gmra.mxu0 %v781
        %v1417 = vpop.f32.mrf.mxu0
        %v1418 = vadd.f32 %v1329, %v1417
        %v1419 = vpop.f32.mrf.mxu0
        %v1420 = vadd.f32 %v1331, %v1419
        %1421 = vmatmul.bf16.gmra.mxu0 %v785
        %v1422 = vpop.f32.mrf.mxu0
        %v1423 = vadd.f32 %v1334, %v1422
        %v1424 = vpop.f32.mrf.mxu0
        %v1425 = vadd.f32 %v1336, %v1424
        %1426 = vmatmul.bf16.gmra.mxu0 %v789
        %v1427 = vpop.f32.mrf.mxu0
        %v1428 = vadd.f32 %v1339, %v1427
        %v1429 = vpop.f32.mrf.mxu0
        %v1430 = vadd.f32 %v1341, %v1429
        %1431 = vmatmul.bf16.gmra.mxu0 %v793
        %v1432 = vpop.f32.mrf.mxu0
        %v1433 = vadd.f32 %v1344, %v1432
        %v1434 = vpop.f32.mrf.mxu0
        %v1435 = vadd.f32 %v1346, %v1434
        %1436 = vmatmul.bf16.gmra.mxu0 %v797
        %v1437 = vpop.f32.mrf.mxu0
        %v1438 = vadd.f32 %v1349, %v1437
        %v1439 = vpop.f32.mrf.mxu0
        %v1440 = vadd.f32 %v1351, %v1439
        %1441 = vmatmul.bf16.gmra.mxu0 %v801
        %v1442 = vpop.f32.mrf.mxu0
        %v1443 = vadd.f32 %v1354, %v1442
        %v1444 = vpop.f32.mrf.mxu0
        %v1445 = vadd.f32 %v1356, %v1444
        %1446 = vmatmul.bf16.gmra.mxu0 %v805
        %v1447 = vpop.f32.mrf.mxu0
        %v1448 = vadd.f32 %v1359, %v1447
        %v1449 = vpop.f32.mrf.mxu0
        %v1450 = vadd.f32 %v1361, %v1449
        %1451 = vmatmul.bf16.gmra.mxu0 %v809
        %v1452 = vpop.f32.mrf.mxu0
        %v1453 = vadd.f32 %v1364, %v1452
        %v1454 = vpop.f32.mrf.mxu0
        %v1455 = vadd.f32 %v1366, %v1454
        %1456 = vmatmul.bf16.gmra.mxu0 %v813
        %v1457 = vpop.f32.mrf.mxu0
        %v1458 = vadd.f32 %v1369, %v1457
        %v1459 = vpop.f32.mrf.mxu0
        %v1460 = vadd.f32 %v1371, %v1459
        %1461 = vmatmul.bf16.gmra.mxu0 %v817
        %v1462 = vpop.f32.mrf.mxu0
        %v1463 = vadd.f32 %v1374, %v1462
        %v1464 = vpop.f32.mrf.mxu0
        %v1465 = vadd.f32 %v1376, %v1464
        %1466 = vmatmul.bf16.gmra.mxu0 %v821
        %v1467 = vpop.f32.mrf.mxu0
        %v1468 = vadd.f32 %v1379, %v1467
        %v1469 = vpop.f32.mrf.mxu0
        %v1470 = vadd.f32 %v1381, %v1469
        %1471 = vmatmul.bf16.gmra.mxu0 %v825
        %v1472 = vpop.f32.mrf.mxu0
        %v1473 = vadd.f32 %v1384, %v1472
        %v1474 = vpop.f32.mrf.mxu0
        %v1475 = vadd.f32 %v1386, %v1474
        %1476 = vmatmul.bf16.gmra.mxu0 %v829
        %v1477 = vpop.f32.mrf.mxu0
        %v1478 = vadd.f32 %v1389, %v1477
        %v1479 = vpop.f32.mrf.mxu0
        %v1480 = vadd.f32 %v1391, %v1479
        %1481 = vdwg.mxu0
        %1482 = vmatpush.bf16.msra.mxu0 %v1149
        %1483 = vmatpush.bf16.msra.mxu0 %v1147
        %1484 = vmatpush.bf16.msra.mxu0 %v1145
        %1485 = vmatpush.bf16.msra.mxu0 %v1143
        %1486 = vmatpush.bf16.msra.mxu0 %v1141
        %1487 = vmatpush.bf16.msra.mxu0 %v1139
        %1488 = vmatpush.bf16.msra.mxu0 %v1137
        %1489 = vmatpush.bf16.msra.mxu0 %v1135
        %1490 = vmatmul.bf16.gmra.mxu0 %v770
        %v1491 = vpop.f32.mrf.mxu0
        %v1492 = vadd.f32 %v1403, %v1491
        %v1493 = vpop.f32.mrf.mxu0
        %v1494 = vadd.f32 %v1405, %v1493
        %1495 = vmatmul.bf16.gmra.mxu0 %v774
        %v1496 = vpop.f32.mrf.mxu0
        %v1497 = vadd.f32 %v1408, %v1496
        %v1498 = vpop.f32.mrf.mxu0
        %v1499 = vadd.f32 %v1410, %v1498
        %1500 = vmatmul.bf16.gmra.mxu0 %v778
        %v1501 = vpop.f32.mrf.mxu0
        %v1502 = vadd.f32 %v1413, %v1501
        %v1503 = vpop.f32.mrf.mxu0
        %v1504 = vadd.f32 %v1415, %v1503
        %1505 = vmatmul.bf16.gmra.mxu0 %v782
        %v1506 = vpop.f32.mrf.mxu0
        %v1507 = vadd.f32 %v1418, %v1506
        %v1508 = vpop.f32.mrf.mxu0
        %v1509 = vadd.f32 %v1420, %v1508
        %1510 = vmatmul.bf16.gmra.mxu0 %v786
        %v1511 = vpop.f32.mrf.mxu0
        %v1512 = vadd.f32 %v1423, %v1511
        %v1513 = vpop.f32.mrf.mxu0
        %v1514 = vadd.f32 %v1425, %v1513
        %1515 = vmatmul.bf16.gmra.mxu0 %v790
        %v1516 = vpop.f32.mrf.mxu0
        %v1517 = vadd.f32 %v1428, %v1516
        %v1518 = vpop.f32.mrf.mxu0
        %v1519 = vadd.f32 %v1430, %v1518
        %1520 = vmatmul.bf16.gmra.mxu0 %v794
        %v1521 = vpop.f32.mrf.mxu0
        %v1522 = vadd.f32 %v1433, %v1521
        %v1523 = vpop.f32.mrf.mxu0
        %v1524 = vadd.f32 %v1435, %v1523
        %1525 = vmatmul.bf16.gmra.mxu0 %v798
        %v1526 = vpop.f32.mrf.mxu0
        %v1527 = vadd.f32 %v1438, %v1526
        %v1528 = vpop.f32.mrf.mxu0
        %v1529 = vadd.f32 %v1440, %v1528
        %1530 = vmatmul.bf16.gmra.mxu0 %v802
        %v1531 = vpop.f32.mrf.mxu0
        %v1532 = vadd.f32 %v1443, %v1531
        %v1533 = vpop.f32.mrf.mxu0
        %v1534 = vadd.f32 %v1445, %v1533
        %1535 = vmatmul.bf16.gmra.mxu0 %v806
        %v1536 = vpop.f32.mrf.mxu0
        %v1537 = vadd.f32 %v1448, %v1536
        %v1538 = vpop.f32.mrf.mxu0
        %v1539 = vadd.f32 %v1450, %v1538
        %1540 = vmatmul.bf16.gmra.mxu0 %v810
        %v1541 = vpop.f32.mrf.mxu0
        %v1542 = vadd.f32 %v1453, %v1541
        %v1543 = vpop.f32.mrf.mxu0
        %v1544 = vadd.f32 %v1455, %v1543
        %1545 = vmatmul.bf16.gmra.mxu0 %v814
        %v1546 = vpop.f32.mrf.mxu0
        %v1547 = vadd.f32 %v1458, %v1546
        %v1548 = vpop.f32.mrf.mxu0
        %v1549 = vadd.f32 %v1460, %v1548
        %1550 = vmatmul.bf16.gmra.mxu0 %v818
        %v1551 = vpop.f32.mrf.mxu0
        %v1552 = vadd.f32 %v1463, %v1551
        %v1553 = vpop.f32.mrf.mxu0
        %v1554 = vadd.f32 %v1465, %v1553
        %1555 = vmatmul.bf16.gmra.mxu0 %v822
        %v1556 = vpop.f32.mrf.mxu0
        %v1557 = vadd.f32 %v1468, %v1556
        %v1558 = vpop.f32.mrf.mxu0
        %v1559 = vadd.f32 %v1470, %v1558
        %1560 = vmatmul.bf16.gmra.mxu0 %v826
        %v1561 = vpop.f32.mrf.mxu0
        %v1562 = vadd.f32 %v1473, %v1561
        %v1563 = vpop.f32.mrf.mxu0
        %v1564 = vadd.f32 %v1475, %v1563
        %1565 = vmatmul.bf16.gmra.mxu0 %v830
        %v1566 = vpop.f32.mrf.mxu0
        %v1567 = vadd.f32 %v1478, %v1566
        %v1568 = vpop.f32.mrf.mxu0
        %v1569 = vadd.f32 %v1480, %v1568
        %1570 = vdwg.mxu0
        %1571 = vmatpush.bf16.msra.mxu0 %v1102
        %1572 = vmatpush.bf16.msra.mxu0 %v1100
        %1573 = vmatpush.bf16.msra.mxu0 %v1098
        %1574 = vmatpush.bf16.msra.mxu0 %v1096
        %1575 = vmatpush.bf16.msra.mxu0 %v1094
        %1576 = vmatpush.bf16.msra.mxu0 %v1092
        %1577 = vmatpush.bf16.msra.mxu0 %v1090
        %1578 = vmatpush.bf16.msra.mxu0 %v1088
        %1579 = vmatmul.bf16.gmra.mxu0 %v767
        %v1580 = vpop.f32.mrf.mxu0
        %v1581 = vadd.f32 0.0, %v1580
        %v1582 = vpop.f32.mrf.mxu0
        %v1583 = vadd.f32 0.0, %v1582
        %1584 = vmatmul.bf16.gmra.mxu0 %v771
        %v1585 = vpop.f32.mrf.mxu0
        %v1586 = vadd.f32 0.0, %v1585
        %v1587 = vpop.f32.mrf.mxu0
        %v1588 = vadd.f32 0.0, %v1587
        %1589 = vmatmul.bf16.gmra.mxu0 %v775
        %v1590 = vpop.f32.mrf.mxu0
        %v1591 = vadd.f32 0.0, %v1590
        %v1592 = vpop.f32.mrf.mxu0
        %v1593 = vadd.f32 0.0, %v1592
        %1594 = vmatmul.bf16.gmra.mxu0 %v779
        %v1595 = vpop.f32.mrf.mxu0
        %v1596 = vadd.f32 0.0, %v1595
        %v1597 = vpop.f32.mrf.mxu0
        %v1598 = vadd.f32 0.0, %v1597
        %1599 = vmatmul.bf16.gmra.mxu0 %v783
        %v1600 = vpop.f32.mrf.mxu0
        %v1601 = vadd.f32 0.0, %v1600
        %v1602 = vpop.f32.mrf.mxu0
        %v1603 = vadd.f32 0.0, %v1602
        %1604 = vmatmul.bf16.gmra.mxu0 %v787
        %v1605 = vpop.f32.mrf.mxu0
        %v1606 = vadd.f32 0.0, %v1605
        %v1607 = vpop.f32.mrf.mxu0
        %v1608 = vadd.f32 0.0, %v1607
        %1609 = vmatmul.bf16.gmra.mxu0 %v791
        %v1610 = vpop.f32.mrf.mxu0
        %v1611 = vadd.f32 0.0, %v1610
        %v1612 = vpop.f32.mrf.mxu0
        %v1613 = vadd.f32 0.0, %v1612
        %1614 = vmatmul.bf16.gmra.mxu0 %v795
        %v1615 = vpop.f32.mrf.mxu0
        %v1616 = vadd.f32 0.0, %v1615
        %v1617 = vpop.f32.mrf.mxu0
        %v1618 = vadd.f32 0.0, %v1617
        %1619 = vmatmul.bf16.gmra.mxu0 %v799
        %v1620 = vpop.f32.mrf.mxu0
        %v1621 = vadd.f32 0.0, %v1620
        %v1622 = vpop.f32.mrf.mxu0
        %v1623 = vadd.f32 0.0, %v1622
        %1624 = vmatmul.bf16.gmra.mxu0 %v803
        %v1625 = vpop.f32.mrf.mxu0
        %v1626 = vadd.f32 0.0, %v1625
        %v1627 = vpop.f32.mrf.mxu0
        %v1628 = vadd.f32 0.0, %v1627
        %1629 = vmatmul.bf16.gmra.mxu0 %v807
        %v1630 = vpop.f32.mrf.mxu0
        %v1631 = vadd.f32 0.0, %v1630
        %v1632 = vpop.f32.mrf.mxu0
        %v1633 = vadd.f32 0.0, %v1632
        %1634 = vmatmul.bf16.gmra.mxu0 %v811
        %v1635 = vpop.f32.mrf.mxu0
        %v1636 = vadd.f32 0.0, %v1635
        %v1637 = vpop.f32.mrf.mxu0
        %v1638 = vadd.f32 0.0, %v1637
        %1639 = vmatmul.bf16.gmra.mxu0 %v815
        %v1640 = vpop.f32.mrf.mxu0
        %v1641 = vadd.f32 0.0, %v1640
        %v1642 = vpop.f32.mrf.mxu0
        %v1643 = vadd.f32 0.0, %v1642
        %1644 = vmatmul.bf16.gmra.mxu0 %v819
        %v1645 = vpop.f32.mrf.mxu0
        %v1646 = vadd.f32 0.0, %v1645
        %v1647 = vpop.f32.mrf.mxu0
        %v1648 = vadd.f32 0.0, %v1647
        %1649 = vmatmul.bf16.gmra.mxu0 %v823
        %v1650 = vpop.f32.mrf.mxu0
        %v1651 = vadd.f32 0.0, %v1650
        %v1652 = vpop.f32.mrf.mxu0
        %v1653 = vadd.f32 0.0, %v1652
        %1654 = vmatmul.bf16.gmra.mxu0 %v827
        %v1655 = vpop.f32.mrf.mxu0
        %v1656 = vadd.f32 0.0, %v1655
        %v1657 = vpop.f32.mrf.mxu0
        %v1658 = vadd.f32 0.0, %v1657
        %1659 = vdwg.mxu0
        %1660 = vmatpush.bf16.msra.mxu0 %v1118
        %1661 = vmatpush.bf16.msra.mxu0 %v1116
        %1662 = vmatpush.bf16.msra.mxu0 %v1114
        %1663 = vmatpush.bf16.msra.mxu0 %v1112
        %1664 = vmatpush.bf16.msra.mxu0 %v1110
        %1665 = vmatpush.bf16.msra.mxu0 %v1108
        %1666 = vmatpush.bf16.msra.mxu0 %v1106
        %1667 = vmatpush.bf16.msra.mxu0 %v1104
        %1668 = vmatmul.bf16.gmra.mxu0 %v768
        %v1669 = vpop.f32.mrf.mxu0
        %v1670 = vadd.f32 %v1581, %v1669
        %v1671 = vpop.f32.mrf.mxu0
        %v1672 = vadd.f32 %v1583, %v1671
        %1673 = vmatmul.bf16.gmra.mxu0 %v772
        %v1674 = vpop.f32.mrf.mxu0
        %v1675 = vadd.f32 %v1586, %v1674
        %v1676 = vpop.f32.mrf.mxu0
        %v1677 = vadd.f32 %v1588, %v1676
        %1678 = vmatmul.bf16.gmra.mxu0 %v776
        %v1679 = vpop.f32.mrf.mxu0
        %v1680 = vadd.f32 %v1591, %v1679
        %v1681 = vpop.f32.mrf.mxu0
        %v1682 = vadd.f32 %v1593, %v1681
        %1683 = vmatmul.bf16.gmra.mxu0 %v780
        %v1684 = vpop.f32.mrf.mxu0
        %v1685 = vadd.f32 %v1596, %v1684
        %v1686 = vpop.f32.mrf.mxu0
        %v1687 = vadd.f32 %v1598, %v1686
        %1688 = vmatmul.bf16.gmra.mxu0 %v784
        %v1689 = vpop.f32.mrf.mxu0
        %v1690 = vadd.f32 %v1601, %v1689
        %v1691 = vpop.f32.mrf.mxu0
        %v1692 = vadd.f32 %v1603, %v1691
        %1693 = vmatmul.bf16.gmra.mxu0 %v788
        %v1694 = vpop.f32.mrf.mxu0
        %v1695 = vadd.f32 %v1606, %v1694
        %v1696 = vpop.f32.mrf.mxu0
        %v1697 = vadd.f32 %v1608, %v1696
        %1698 = vmatmul.bf16.gmra.mxu0 %v792
        %v1699 = vpop.f32.mrf.mxu0
        %v1700 = vadd.f32 %v1611, %v1699
        %v1701 = vpop.f32.mrf.mxu0
        %v1702 = vadd.f32 %v1613, %v1701
        %1703 = vmatmul.bf16.gmra.mxu0 %v796
        %v1704 = vpop.f32.mrf.mxu0
        %v1705 = vadd.f32 %v1616, %v1704
        %v1706 = vpop.f32.mrf.mxu0
        %v1707 = vadd.f32 %v1618, %v1706
        %1708 = vmatmul.bf16.gmra.mxu0 %v800
        %v1709 = vpop.f32.mrf.mxu0
        %v1710 = vadd.f32 %v1621, %v1709
        %v1711 = vpop.f32.mrf.mxu0
        %v1712 = vadd.f32 %v1623, %v1711
        %1713 = vmatmul.bf16.gmra.mxu0 %v804
        %v1714 = vpop.f32.mrf.mxu0
        %v1715 = vadd.f32 %v1626, %v1714
        %v1716 = vpop.f32.mrf.mxu0
        %v1717 = vadd.f32 %v1628, %v1716
        %1718 = vmatmul.bf16.gmra.mxu0 %v808
        %v1719 = vpop.f32.mrf.mxu0
        %v1720 = vadd.f32 %v1631, %v1719
        %v1721 = vpop.f32.mrf.mxu0
        %v1722 = vadd.f32 %v1633, %v1721
        %1723 = vmatmul.bf16.gmra.mxu0 %v812
        %v1724 = vpop.f32.mrf.mxu0
        %v1725 = vadd.f32 %v1636, %v1724
        %v1726 = vpop.f32.mrf.mxu0
        %v1727 = vadd.f32 %v1638, %v1726
        %1728 = vmatmul.bf16.gmra.mxu0 %v816
        %v1729 = vpop.f32.mrf.mxu0
        %v1730 = vadd.f32 %v1641, %v1729
        %v1731 = vpop.f32.mrf.mxu0
        %v1732 = vadd.f32 %v1643, %v1731
        %1733 = vmatmul.bf16.gmra.mxu0 %v820
        %v1734 = vpop.f32.mrf.mxu0
        %v1735 = vadd.f32 %v1646, %v1734
        %v1736 = vpop.f32.mrf.mxu0
        %v1737 = vadd.f32 %v1648, %v1736
        %1738 = vmatmul.bf16.gmra.mxu0 %v824
        %v1739 = vpop.f32.mrf.mxu0
        %v1740 = vadd.f32 %v1651, %v1739
        %v1741 = vpop.f32.mrf.mxu0
        %v1742 = vadd.f32 %v1653, %v1741
        %1743 = vmatmul.bf16.gmra.mxu0 %v828
        %v1744 = vpop.f32.mrf.mxu0
        %v1745 = vadd.f32 %v1656, %v1744
        %v1746 = vpop.f32.mrf.mxu0
        %v1747 = vadd.f32 %v1658, %v1746
        %1748 = vdwg.mxu0
        %1749 = vmatpush.bf16.msra.mxu0 %v1134
        %1750 = vmatpush.bf16.msra.mxu0 %v1132
        %1751 = vmatpush.bf16.msra.mxu0 %v1130
        %1752 = vmatpush.bf16.msra.mxu0 %v1128
        %1753 = vmatpush.bf16.msra.mxu0 %v1126
        %1754 = vmatpush.bf16.msra.mxu0 %v1124
        %1755 = vmatpush.bf16.msra.mxu0 %v1122
        %1756 = vmatpush.bf16.msra.mxu0 %v1120
        %1757 = vmatmul.bf16.gmra.mxu0 %v769
        %v1758 = vpop.f32.mrf.mxu0
        %v1759 = vadd.f32 %v1670, %v1758
        %v1760 = vpop.f32.mrf.mxu0
        %v1761 = vadd.f32 %v1672, %v1760
        %1762 = vmatmul.bf16.gmra.mxu0 %v773
        %v1763 = vpop.f32.mrf.mxu0
        %v1764 = vadd.f32 %v1675, %v1763
        %v1765 = vpop.f32.mrf.mxu0
        %v1766 = vadd.f32 %v1677, %v1765
        %1767 = vmatmul.bf16.gmra.mxu0 %v777
        %v1768 = vpop.f32.mrf.mxu0
        %v1769 = vadd.f32 %v1680, %v1768
        %v1770 = vpop.f32.mrf.mxu0
        %v1771 = vadd.f32 %v1682, %v1770
        %1772 = vmatmul.bf16.gmra.mxu0 %v781
        %v1773 = vpop.f32.mrf.mxu0
        %v1774 = vadd.f32 %v1685, %v1773
        %v1775 = vpop.f32.mrf.mxu0
        %v1776 = vadd.f32 %v1687, %v1775
        %1777 = vmatmul.bf16.gmra.mxu0 %v785
        %v1778 = vpop.f32.mrf.mxu0
        %v1779 = vadd.f32 %v1690, %v1778
        %v1780 = vpop.f32.mrf.mxu0
        %v1781 = vadd.f32 %v1692, %v1780
        %1782 = vmatmul.bf16.gmra.mxu0 %v789
        %v1783 = vpop.f32.mrf.mxu0
        %v1784 = vadd.f32 %v1695, %v1783
        %v1785 = vpop.f32.mrf.mxu0
        %v1786 = vadd.f32 %v1697, %v1785
        %1787 = vmatmul.bf16.gmra.mxu0 %v793
        %v1788 = vpop.f32.mrf.mxu0
        %v1789 = vadd.f32 %v1700, %v1788
        %v1790 = vpop.f32.mrf.mxu0
        %v1791 = vadd.f32 %v1702, %v1790
        %1792 = vmatmul.bf16.gmra.mxu0 %v797
        %v1793 = vpop.f32.mrf.mxu0
        %v1794 = vadd.f32 %v1705, %v1793
        %v1795 = vpop.f32.mrf.mxu0
        %v1796 = vadd.f32 %v1707, %v1795
        %1797 = vmatmul.bf16.gmra.mxu0 %v801
        %v1798 = vpop.f32.mrf.mxu0
        %v1799 = vadd.f32 %v1710, %v1798
        %v1800 = vpop.f32.mrf.mxu0
        %v1801 = vadd.f32 %v1712, %v1800
        %1802 = vmatmul.bf16.gmra.mxu0 %v805
        %v1803 = vpop.f32.mrf.mxu0
        %v1804 = vadd.f32 %v1715, %v1803
        %v1805 = vpop.f32.mrf.mxu0
        %v1806 = vadd.f32 %v1717, %v1805
        %1807 = vmatmul.bf16.gmra.mxu0 %v809
        %v1808 = vpop.f32.mrf.mxu0
        %v1809 = vadd.f32 %v1720, %v1808
        %v1810 = vpop.f32.mrf.mxu0
        %v1811 = vadd.f32 %v1722, %v1810
        %1812 = vmatmul.bf16.gmra.mxu0 %v813
        %v1813 = vpop.f32.mrf.mxu0
        %v1814 = vadd.f32 %v1725, %v1813
        %v1815 = vpop.f32.mrf.mxu0
        %v1816 = vadd.f32 %v1727, %v1815
        %1817 = vmatmul.bf16.gmra.mxu0 %v817
        %v1818 = vpop.f32.mrf.mxu0
        %v1819 = vadd.f32 %v1730, %v1818
        %v1820 = vpop.f32.mrf.mxu0
        %v1821 = vadd.f32 %v1732, %v1820
        %1822 = vmatmul.bf16.gmra.mxu0 %v821
        %v1823 = vpop.f32.mrf.mxu0
        %v1824 = vadd.f32 %v1735, %v1823
        %v1825 = vpop.f32.mrf.mxu0
        %v1826 = vadd.f32 %v1737, %v1825
        %1827 = vmatmul.bf16.gmra.mxu0 %v825
        %v1828 = vpop.f32.mrf.mxu0
        %v1829 = vadd.f32 %v1740, %v1828
        %v1830 = vpop.f32.mrf.mxu0
        %v1831 = vadd.f32 %v1742, %v1830
        %1832 = vmatmul.bf16.gmra.mxu0 %v829
        %v1833 = vpop.f32.mrf.mxu0
        %v1834 = vadd.f32 %v1745, %v1833
        %v1835 = vpop.f32.mrf.mxu0
        %v1836 = vadd.f32 %v1747, %v1835
        %1837 = vdwg.mxu0
        %1838 = vmatpush.bf16.msra.mxu0 %v1150
        %1839 = vmatpush.bf16.msra.mxu0 %v1148
        %1840 = vmatpush.bf16.msra.mxu0 %v1146
        %1841 = vmatpush.bf16.msra.mxu0 %v1144
        %1842 = vmatpush.bf16.msra.mxu0 %v1142
        %1843 = vmatpush.bf16.msra.mxu0 %v1140
        %1844 = vmatpush.bf16.msra.mxu0 %v1138
        %1845 = vmatpush.bf16.msra.mxu0 %v1136
        %1846 = vmatmul.bf16.gmra.mxu0 %v770
        %v1847 = vpop.f32.mrf.mxu0
        %v1848 = vadd.f32 %v1759, %v1847
        %v1849 = vpop.f32.mrf.mxu0
        %v1850 = vadd.f32 %v1761, %v1849
        %1851 = vmatmul.bf16.gmra.mxu0 %v774
        %v1852 = vpop.f32.mrf.mxu0
        %v1853 = vadd.f32 %v1764, %v1852
        %v1854 = vpop.f32.mrf.mxu0
        %v1855 = vadd.f32 %v1766, %v1854
        %1856 = vmatmul.bf16.gmra.mxu0 %v778
        %v1857 = vpop.f32.mrf.mxu0
        %v1858 = vadd.f32 %v1769, %v1857
        %v1859 = vpop.f32.mrf.mxu0
        %v1860 = vadd.f32 %v1771, %v1859
        %1861 = vmatmul.bf16.gmra.mxu0 %v782
        %v1862 = vpop.f32.mrf.mxu0
        %v1863 = vadd.f32 %v1774, %v1862
        %v1864 = vpop.f32.mrf.mxu0
        %v1865 = vadd.f32 %v1776, %v1864
        %1866 = vmatmul.bf16.gmra.mxu0 %v786
        %v1867 = vpop.f32.mrf.mxu0
        %v1868 = vadd.f32 %v1779, %v1867
        %v1869 = vpop.f32.mrf.mxu0
        %v1870 = vadd.f32 %v1781, %v1869
        %1871 = vmatmul.bf16.gmra.mxu0 %v790
        %v1872 = vpop.f32.mrf.mxu0
        %v1873 = vadd.f32 %v1784, %v1872
        %v1874 = vpop.f32.mrf.mxu0
        %v1875 = vadd.f32 %v1786, %v1874
        %1876 = vmatmul.bf16.gmra.mxu0 %v794
        %v1877 = vpop.f32.mrf.mxu0
        %v1878 = vadd.f32 %v1789, %v1877
        %v1879 = vpop.f32.mrf.mxu0
        %v1880 = vadd.f32 %v1791, %v1879
        %1881 = vmatmul.bf16.gmra.mxu0 %v798
        %v1882 = vpop.f32.mrf.mxu0
        %v1883 = vadd.f32 %v1794, %v1882
        %v1884 = vpop.f32.mrf.mxu0
        %v1885 = vadd.f32 %v1796, %v1884
        %1886 = vmatmul.bf16.gmra.mxu0 %v802
        %v1887 = vpop.f32.mrf.mxu0
        %v1888 = vadd.f32 %v1799, %v1887
        %v1889 = vpop.f32.mrf.mxu0
        %v1890 = vadd.f32 %v1801, %v1889
        %1891 = vmatmul.bf16.gmra.mxu0 %v806
        %v1892 = vpop.f32.mrf.mxu0
        %v1893 = vadd.f32 %v1804, %v1892
        %v1894 = vpop.f32.mrf.mxu0
        %v1895 = vadd.f32 %v1806, %v1894
        %1896 = vmatmul.bf16.gmra.mxu0 %v810
        %v1897 = vpop.f32.mrf.mxu0
        %v1898 = vadd.f32 %v1809, %v1897
        %v1899 = vpop.f32.mrf.mxu0
        %v1900 = vadd.f32 %v1811, %v1899
        %1901 = vmatmul.bf16.gmra.mxu0 %v814
        %v1902 = vpop.f32.mrf.mxu0
        %v1903 = vadd.f32 %v1814, %v1902
        %v1904 = vpop.f32.mrf.mxu0
        %v1905 = vadd.f32 %v1816, %v1904
        %1906 = vmatmul.bf16.gmra.mxu0 %v818
        %v1907 = vpop.f32.mrf.mxu0
        %v1908 = vadd.f32 %v1819, %v1907
        %v1909 = vpop.f32.mrf.mxu0
        %v1910 = vadd.f32 %v1821, %v1909
        %1911 = vmatmul.bf16.gmra.mxu0 %v822
        %v1912 = vpop.f32.mrf.mxu0
        %v1913 = vadd.f32 %v1824, %v1912
        %v1914 = vpop.f32.mrf.mxu0
        %v1915 = vadd.f32 %v1826, %v1914
        %1916 = vmatmul.bf16.gmra.mxu0 %v826
        %v1917 = vpop.f32.mrf.mxu0
        %v1918 = vadd.f32 %v1829, %v1917
        %v1919 = vpop.f32.mrf.mxu0
        %v1920 = vadd.f32 %v1831, %v1919
        %1921 = vmatmul.bf16.gmra.mxu0 %v830
        %v1922 = vpop.f32.mrf.mxu0
        %v1923 = vadd.f32 %v1834, %v1922
        %v1924 = vpop.f32.mrf.mxu0
        %v1925 = vadd.f32 %v1836, %v1924
        %1926 = vdwg.mxu0
        %v1991 = vunpack.c.l.b16 %v575
        %v1992 = vunpack.c.h.b16 %v575
        %v1993 = vunpack.c.l.b16 %v576
        %v1994 = vunpack.c.h.b16 %v576
        %v1995 = vunpack.c.l.b16 %v577
        %v1996 = vunpack.c.h.b16 %v577
        %v1997 = vunpack.c.l.b16 %v578
        %v1998 = vunpack.c.h.b16 %v578
        %v1999 = vunpack.c.l.b16 %v579
        %v2000 = vunpack.c.h.b16 %v579
        %v2001 = vunpack.c.l.b16 %v580
        %v2002 = vunpack.c.h.b16 %v580
        %v2003 = vunpack.c.l.b16 %v581
        %v2004 = vunpack.c.h.b16 %v581
        %v2005 = vunpack.c.l.b16 %v582
        %v2006 = vunpack.c.h.b16 %v582
        %v2007 = vunpack.c.l.b16 %v583
        %v2008 = vunpack.c.h.b16 %v583
        %v2009 = vunpack.c.l.b16 %v584
        %v2010 = vunpack.c.h.b16 %v584
        %v2011 = vunpack.c.l.b16 %v585
        %v2012 = vunpack.c.h.b16 %v585
        %v2013 = vunpack.c.l.b16 %v586
        %v2014 = vunpack.c.h.b16 %v586
        %v2015 = vunpack.c.l.b16 %v587
        %v2016 = vunpack.c.h.b16 %v587
        %v2017 = vunpack.c.l.b16 %v588
        %v2018 = vunpack.c.h.b16 %v588
        %v2019 = vunpack.c.l.b16 %v589
        %v2020 = vunpack.c.h.b16 %v589
        %v2021 = vunpack.c.l.b16 %v590
        %v2022 = vunpack.c.h.b16 %v590
        %v2023 = vunpack.c.l.b16 %v591
        %v2024 = vunpack.c.h.b16 %v591
        %v2025 = vunpack.c.l.b16 %v592
        %v2026 = vunpack.c.h.b16 %v592
        %v2027 = vunpack.c.l.b16 %v593
        %v2028 = vunpack.c.h.b16 %v593
        %v2029 = vunpack.c.l.b16 %v594
        %v2030 = vunpack.c.h.b16 %v594
        %v2031 = vunpack.c.l.b16 %v595
        %v2032 = vunpack.c.h.b16 %v595
        %v2033 = vunpack.c.l.b16 %v596
        %v2034 = vunpack.c.h.b16 %v596
        %v2035 = vunpack.c.l.b16 %v597
        %v2036 = vunpack.c.h.b16 %v597
        %v2037 = vunpack.c.l.b16 %v598
        %v2038 = vunpack.c.h.b16 %v598
        %v2039 = vunpack.c.l.b16 %v599
        %v2040 = vunpack.c.h.b16 %v599
        %v2041 = vunpack.c.l.b16 %v600
        %v2042 = vunpack.c.h.b16 %v600
        %v2043 = vunpack.c.l.b16 %v601
        %v2044 = vunpack.c.h.b16 %v601
        %v2045 = vunpack.c.l.b16 %v602
        %v2046 = vunpack.c.h.b16 %v602
        %v2047 = vunpack.c.l.b16 %v603
        %v2048 = vunpack.c.h.b16 %v603
        %v2049 = vunpack.c.l.b16 %v604
        %v2050 = vunpack.c.h.b16 %v604
        %v2051 = vunpack.c.l.b16 %v605
        %v2052 = vunpack.c.h.b16 %v605
        %v2053 = vunpack.c.l.b16 %v606
        %v2054 = vunpack.c.h.b16 %v606
        %v2055 = vunpack.c.l.b16 %v607
        %v2056 = vunpack.c.h.b16 %v607
        %v2057 = vunpack.c.l.b16 %v608
        %v2058 = vunpack.c.h.b16 %v608
        %v2059 = vunpack.c.l.b16 %v609
        %v2060 = vunpack.c.h.b16 %v609
        %v2061 = vunpack.c.l.b16 %v610
        %v2062 = vunpack.c.h.b16 %v610
        %v2063 = vunpack.c.l.b16 %v611
        %v2064 = vunpack.c.h.b16 %v611
        %v2065 = vunpack.c.l.b16 %v612
        %v2066 = vunpack.c.h.b16 %v612
        %v2067 = vunpack.c.l.b16 %v613
        %v2068 = vunpack.c.h.b16 %v613
        %v2069 = vunpack.c.l.b16 %v614
        %v2070 = vunpack.c.h.b16 %v614
        %v2071 = vunpack.c.l.b16 %v615
        %v2072 = vunpack.c.h.b16 %v615
        %v2073 = vunpack.c.l.b16 %v616
        %v2074 = vunpack.c.h.b16 %v616
        %v2075 = vunpack.c.l.b16 %v617
        %v2076 = vunpack.c.h.b16 %v617
        %v2077 = vunpack.c.l.b16 %v618
        %v2078 = vunpack.c.h.b16 %v618
        %v2079 = vunpack.c.l.b16 %v619
        %v2080 = vunpack.c.h.b16 %v619
        %v2081 = vunpack.c.l.b16 %v620
        %v2082 = vunpack.c.h.b16 %v620
        %v2083 = vunpack.c.l.b16 %v621
        %v2084 = vunpack.c.h.b16 %v621
        %v2085 = vunpack.c.l.b16 %v622
        %v2086 = vunpack.c.h.b16 %v622
        %v2087 = vunpack.c.l.b16 %v623
        %v2088 = vunpack.c.h.b16 %v623
        %v2089 = vunpack.c.l.b16 %v624
        %v2090 = vunpack.c.h.b16 %v624
        %v2091 = vunpack.c.l.b16 %v625
        %v2092 = vunpack.c.h.b16 %v625
        %v2093 = vunpack.c.l.b16 %v626
        %v2094 = vunpack.c.h.b16 %v626
        %v2095 = vunpack.c.l.b16 %v627
        %v2096 = vunpack.c.h.b16 %v627
        %v2097 = vunpack.c.l.b16 %v628
        %v2098 = vunpack.c.h.b16 %v628
        %v2099 = vunpack.c.l.b16 %v629
        %v2100 = vunpack.c.h.b16 %v629
        %v2101 = vunpack.c.l.b16 %v630
        %v2102 = vunpack.c.h.b16 %v630
        %v2103 = vunpack.c.l.b16 %v631
        %v2104 = vunpack.c.h.b16 %v631
        %v2105 = vunpack.c.l.b16 %v632
        %v2106 = vunpack.c.h.b16 %v632
        %v2107 = vunpack.c.l.b16 %v633
        %v2108 = vunpack.c.h.b16 %v633
        %v2109 = vunpack.c.l.b16 %v634
        %v2110 = vunpack.c.h.b16 %v634
        %v2111 = vunpack.c.l.b16 %v635
        %v2112 = vunpack.c.h.b16 %v635
        %v2113 = vunpack.c.l.b16 %v636
        %v2114 = vunpack.c.h.b16 %v636
        %v2115 = vunpack.c.l.b16 %v637
        %v2116 = vunpack.c.h.b16 %v637
        %v2117 = vunpack.c.l.b16 %v638
        %v2118 = vunpack.c.h.b16 %v638
        %v2119 = vpack.c.b16 %v1993, %v1991
        %v2120 = vpack.c.b16 %v1994, %v1992
        %v2121 = vpack.c.b16 %v1997, %v1995
        %v2122 = vpack.c.b16 %v1998, %v1996
        %v2123 = vpack.c.b16 %v2001, %v1999
        %v2124 = vpack.c.b16 %v2002, %v2000
        %v2125 = vpack.c.b16 %v2005, %v2003
        %v2126 = vpack.c.b16 %v2006, %v2004
        %v2127 = vpack.c.b16 %v2009, %v2007
        %v2128 = vpack.c.b16 %v2010, %v2008
        %v2129 = vpack.c.b16 %v2013, %v2011
        %v2130 = vpack.c.b16 %v2014, %v2012
        %v2131 = vpack.c.b16 %v2017, %v2015
        %v2132 = vpack.c.b16 %v2018, %v2016
        %v2133 = vpack.c.b16 %v2021, %v2019
        %v2134 = vpack.c.b16 %v2022, %v2020
        %v2135 = vpack.c.b16 %v2025, %v2023
        %v2136 = vpack.c.b16 %v2026, %v2024
        %v2137 = vpack.c.b16 %v2029, %v2027
        %v2138 = vpack.c.b16 %v2030, %v2028
        %v2139 = vpack.c.b16 %v2033, %v2031
        %v2140 = vpack.c.b16 %v2034, %v2032
        %v2141 = vpack.c.b16 %v2037, %v2035
        %v2142 = vpack.c.b16 %v2038, %v2036
        %v2143 = vpack.c.b16 %v2041, %v2039
        %v2144 = vpack.c.b16 %v2042, %v2040
        %v2145 = vpack.c.b16 %v2045, %v2043
        %v2146 = vpack.c.b16 %v2046, %v2044
        %v2147 = vpack.c.b16 %v2049, %v2047
        %v2148 = vpack.c.b16 %v2050, %v2048
        %v2149 = vpack.c.b16 %v2053, %v2051
        %v2150 = vpack.c.b16 %v2054, %v2052
        %v2151 = vpack.c.b16 %v2057, %v2055
        %v2152 = vpack.c.b16 %v2058, %v2056
        %v2153 = vpack.c.b16 %v2061, %v2059
        %v2154 = vpack.c.b16 %v2062, %v2060
        %v2155 = vpack.c.b16 %v2065, %v2063
        %v2156 = vpack.c.b16 %v2066, %v2064
        %v2157 = vpack.c.b16 %v2069, %v2067
        %v2158 = vpack.c.b16 %v2070, %v2068
        %v2159 = vpack.c.b16 %v2073, %v2071
        %v2160 = vpack.c.b16 %v2074, %v2072
        %v2161 = vpack.c.b16 %v2077, %v2075
        %v2162 = vpack.c.b16 %v2078, %v2076
        %v2163 = vpack.c.b16 %v2081, %v2079
        %v2164 = vpack.c.b16 %v2082, %v2080
        %v2165 = vpack.c.b16 %v2085, %v2083
        %v2166 = vpack.c.b16 %v2086, %v2084
        %v2167 = vpack.c.b16 %v2089, %v2087
        %v2168 = vpack.c.b16 %v2090, %v2088
        %v2169 = vpack.c.b16 %v2093, %v2091
        %v2170 = vpack.c.b16 %v2094, %v2092
        %v2171 = vpack.c.b16 %v2097, %v2095
        %v2172 = vpack.c.b16 %v2098, %v2096
        %v2173 = vpack.c.b16 %v2101, %v2099
        %v2174 = vpack.c.b16 %v2102, %v2100
        %v2175 = vpack.c.b16 %v2105, %v2103
        %v2176 = vpack.c.b16 %v2106, %v2104
        %v2177 = vpack.c.b16 %v2109, %v2107
        %v2178 = vpack.c.b16 %v2110, %v2108
        %v2179 = vpack.c.b16 %v2113, %v2111
        %v2180 = vpack.c.b16 %v2114, %v2112
        %v2181 = vpack.c.b16 %v2117, %v2115
        %v2182 = vpack.c.b16 %v2118, %v2116
        %2247 = vmatpush.bf16.msra.mxu0 %v2133
        %2248 = vmatpush.bf16.msra.mxu0 %v2131
        %2249 = vmatpush.bf16.msra.mxu0 %v2129
        %2250 = vmatpush.bf16.msra.mxu0 %v2127
        %2251 = vmatpush.bf16.msra.mxu0 %v2125
        %2252 = vmatpush.bf16.msra.mxu0 %v2123
        %2253 = vmatpush.bf16.msra.mxu0 %v2121
        %2254 = vmatpush.bf16.msra.mxu0 %v2119
        %2255 = vmatmul.bf16.gmra.mxu0 %v511
        %v2256 = vpop.f32.mrf.mxu0
        %v2257 = vadd.f32 %v1492, %v2256
        %v2258 = vpop.f32.mrf.mxu0
        %v2259 = vadd.f32 %v1494, %v2258
        %2260 = vmatmul.bf16.gmra.mxu0 %v515
        %v2261 = vpop.f32.mrf.mxu0
        %v2262 = vadd.f32 %v1497, %v2261
        %v2263 = vpop.f32.mrf.mxu0
        %v2264 = vadd.f32 %v1499, %v2263
        %2265 = vmatmul.bf16.gmra.mxu0 %v519
        %v2266 = vpop.f32.mrf.mxu0
        %v2267 = vadd.f32 %v1502, %v2266
        %v2268 = vpop.f32.mrf.mxu0
        %v2269 = vadd.f32 %v1504, %v2268
        %2270 = vmatmul.bf16.gmra.mxu0 %v523
        %v2271 = vpop.f32.mrf.mxu0
        %v2272 = vadd.f32 %v1507, %v2271
        %v2273 = vpop.f32.mrf.mxu0
        %v2274 = vadd.f32 %v1509, %v2273
        %2275 = vmatmul.bf16.gmra.mxu0 %v527
        %v2276 = vpop.f32.mrf.mxu0
        %v2277 = vadd.f32 %v1512, %v2276
        %v2278 = vpop.f32.mrf.mxu0
        %v2279 = vadd.f32 %v1514, %v2278
        %2280 = vmatmul.bf16.gmra.mxu0 %v531
        %v2281 = vpop.f32.mrf.mxu0
        %v2282 = vadd.f32 %v1517, %v2281
        %v2283 = vpop.f32.mrf.mxu0
        %v2284 = vadd.f32 %v1519, %v2283
        %2285 = vmatmul.bf16.gmra.mxu0 %v535
        %v2286 = vpop.f32.mrf.mxu0
        %v2287 = vadd.f32 %v1522, %v2286
        %v2288 = vpop.f32.mrf.mxu0
        %v2289 = vadd.f32 %v1524, %v2288
        %2290 = vmatmul.bf16.gmra.mxu0 %v539
        %v2291 = vpop.f32.mrf.mxu0
        %v2292 = vadd.f32 %v1527, %v2291
        %v2293 = vpop.f32.mrf.mxu0
        %v2294 = vadd.f32 %v1529, %v2293
        %2295 = vmatmul.bf16.gmra.mxu0 %v543
        %v2296 = vpop.f32.mrf.mxu0
        %v2297 = vadd.f32 %v1532, %v2296
        %v2298 = vpop.f32.mrf.mxu0
        %v2299 = vadd.f32 %v1534, %v2298
        %2300 = vmatmul.bf16.gmra.mxu0 %v547
        %v2301 = vpop.f32.mrf.mxu0
        %v2302 = vadd.f32 %v1537, %v2301
        %v2303 = vpop.f32.mrf.mxu0
        %v2304 = vadd.f32 %v1539, %v2303
        %2305 = vmatmul.bf16.gmra.mxu0 %v551
        %v2306 = vpop.f32.mrf.mxu0
        %v2307 = vadd.f32 %v1542, %v2306
        %v2308 = vpop.f32.mrf.mxu0
        %v2309 = vadd.f32 %v1544, %v2308
        %2310 = vmatmul.bf16.gmra.mxu0 %v555
        %v2311 = vpop.f32.mrf.mxu0
        %v2312 = vadd.f32 %v1547, %v2311
        %v2313 = vpop.f32.mrf.mxu0
        %v2314 = vadd.f32 %v1549, %v2313
        %2315 = vmatmul.bf16.gmra.mxu0 %v559
        %v2316 = vpop.f32.mrf.mxu0
        %v2317 = vadd.f32 %v1552, %v2316
        %v2318 = vpop.f32.mrf.mxu0
        %v2319 = vadd.f32 %v1554, %v2318
        %2320 = vmatmul.bf16.gmra.mxu0 %v563
        %v2321 = vpop.f32.mrf.mxu0
        %v2322 = vadd.f32 %v1557, %v2321
        %v2323 = vpop.f32.mrf.mxu0
        %v2324 = vadd.f32 %v1559, %v2323
        %2325 = vmatmul.bf16.gmra.mxu0 %v567
        %v2326 = vpop.f32.mrf.mxu0
        %v2327 = vadd.f32 %v1562, %v2326
        %v2328 = vpop.f32.mrf.mxu0
        %v2329 = vadd.f32 %v1564, %v2328
        %2330 = vmatmul.bf16.gmra.mxu0 %v571
        %v2331 = vpop.f32.mrf.mxu0
        %v2332 = vadd.f32 %v1567, %v2331
        %v2333 = vpop.f32.mrf.mxu0
        %v2334 = vadd.f32 %v1569, %v2333
        %2335 = vdwg.mxu0
        %2336 = vmatpush.bf16.msra.mxu0 %v2149
        %2337 = vmatpush.bf16.msra.mxu0 %v2147
        %2338 = vmatpush.bf16.msra.mxu0 %v2145
        %2339 = vmatpush.bf16.msra.mxu0 %v2143
        %2340 = vmatpush.bf16.msra.mxu0 %v2141
        %2341 = vmatpush.bf16.msra.mxu0 %v2139
        %2342 = vmatpush.bf16.msra.mxu0 %v2137
        %2343 = vmatpush.bf16.msra.mxu0 %v2135
        %2344 = vmatmul.bf16.gmra.mxu0 %v512
        %v2345 = vpop.f32.mrf.mxu0
        %v2346 = vadd.f32 %v2257, %v2345
        %v2347 = vpop.f32.mrf.mxu0
        %v2348 = vadd.f32 %v2259, %v2347
        %2349 = vmatmul.bf16.gmra.mxu0 %v516
        %v2350 = vpop.f32.mrf.mxu0
        %v2351 = vadd.f32 %v2262, %v2350
        %v2352 = vpop.f32.mrf.mxu0
        %v2353 = vadd.f32 %v2264, %v2352
        %2354 = vmatmul.bf16.gmra.mxu0 %v520
        %v2355 = vpop.f32.mrf.mxu0
        %v2356 = vadd.f32 %v2267, %v2355
        %v2357 = vpop.f32.mrf.mxu0
        %v2358 = vadd.f32 %v2269, %v2357
        %2359 = vmatmul.bf16.gmra.mxu0 %v524
        %v2360 = vpop.f32.mrf.mxu0
        %v2361 = vadd.f32 %v2272, %v2360
        %v2362 = vpop.f32.mrf.mxu0
        %v2363 = vadd.f32 %v2274, %v2362
        %2364 = vmatmul.bf16.gmra.mxu0 %v528
        %v2365 = vpop.f32.mrf.mxu0
        %v2366 = vadd.f32 %v2277, %v2365
        %v2367 = vpop.f32.mrf.mxu0
        %v2368 = vadd.f32 %v2279, %v2367
        %2369 = vmatmul.bf16.gmra.mxu0 %v532
        %v2370 = vpop.f32.mrf.mxu0
        %v2371 = vadd.f32 %v2282, %v2370
        %v2372 = vpop.f32.mrf.mxu0
        %v2373 = vadd.f32 %v2284, %v2372
        %2374 = vmatmul.bf16.gmra.mxu0 %v536
        %v2375 = vpop.f32.mrf.mxu0
        %v2376 = vadd.f32 %v2287, %v2375
        %v2377 = vpop.f32.mrf.mxu0
        %v2378 = vadd.f32 %v2289, %v2377
        %2379 = vmatmul.bf16.gmra.mxu0 %v540
        %v2380 = vpop.f32.mrf.mxu0
        %v2381 = vadd.f32 %v2292, %v2380
        %v2382 = vpop.f32.mrf.mxu0
        %v2383 = vadd.f32 %v2294, %v2382
        %2384 = vmatmul.bf16.gmra.mxu0 %v544
        %v2385 = vpop.f32.mrf.mxu0
        %v2386 = vadd.f32 %v2297, %v2385
        %v2387 = vpop.f32.mrf.mxu0
        %v2388 = vadd.f32 %v2299, %v2387
        %2389 = vmatmul.bf16.gmra.mxu0 %v548
        %v2390 = vpop.f32.mrf.mxu0
        %v2391 = vadd.f32 %v2302, %v2390
        %v2392 = vpop.f32.mrf.mxu0
        %v2393 = vadd.f32 %v2304, %v2392
        %2394 = vmatmul.bf16.gmra.mxu0 %v552
        %v2395 = vpop.f32.mrf.mxu0
        %v2396 = vadd.f32 %v2307, %v2395
        %v2397 = vpop.f32.mrf.mxu0
        %v2398 = vadd.f32 %v2309, %v2397
        %2399 = vmatmul.bf16.gmra.mxu0 %v556
        %v2400 = vpop.f32.mrf.mxu0
        %v2401 = vadd.f32 %v2312, %v2400
        %v2402 = vpop.f32.mrf.mxu0
        %v2403 = vadd.f32 %v2314, %v2402
        %2404 = vmatmul.bf16.gmra.mxu0 %v560
        %v2405 = vpop.f32.mrf.mxu0
        %v2406 = vadd.f32 %v2317, %v2405
        %v2407 = vpop.f32.mrf.mxu0
        %v2408 = vadd.f32 %v2319, %v2407
        %2409 = vmatmul.bf16.gmra.mxu0 %v564
        %v2410 = vpop.f32.mrf.mxu0
        %v2411 = vadd.f32 %v2322, %v2410
        %v2412 = vpop.f32.mrf.mxu0
        %v2413 = vadd.f32 %v2324, %v2412
        %2414 = vmatmul.bf16.gmra.mxu0 %v568
        %v2415 = vpop.f32.mrf.mxu0
        %v2416 = vadd.f32 %v2327, %v2415
        %v2417 = vpop.f32.mrf.mxu0
        %v2418 = vadd.f32 %v2329, %v2417
        %2419 = vmatmul.bf16.gmra.mxu0 %v572
        %v2420 = vpop.f32.mrf.mxu0
        %v2421 = vadd.f32 %v2332, %v2420
        %v2422 = vpop.f32.mrf.mxu0
        %v2423 = vadd.f32 %v2334, %v2422
        %2424 = vdwg.mxu0
        %2425 = vmatpush.bf16.msra.mxu0 %v2165
        %2426 = vmatpush.bf16.msra.mxu0 %v2163
        %2427 = vmatpush.bf16.msra.mxu0 %v2161
        %2428 = vmatpush.bf16.msra.mxu0 %v2159
        %2429 = vmatpush.bf16.msra.mxu0 %v2157
        %2430 = vmatpush.bf16.msra.mxu0 %v2155
        %2431 = vmatpush.bf16.msra.mxu0 %v2153
        %2432 = vmatpush.bf16.msra.mxu0 %v2151
        %2433 = vmatmul.bf16.gmra.mxu0 %v513
        %v2434 = vpop.f32.mrf.mxu0
        %v2435 = vadd.f32 %v2346, %v2434
        %v2436 = vpop.f32.mrf.mxu0
        %v2437 = vadd.f32 %v2348, %v2436
        %2438 = vmatmul.bf16.gmra.mxu0 %v517
        %v2439 = vpop.f32.mrf.mxu0
        %v2440 = vadd.f32 %v2351, %v2439
        %v2441 = vpop.f32.mrf.mxu0
        %v2442 = vadd.f32 %v2353, %v2441
        %2443 = vmatmul.bf16.gmra.mxu0 %v521
        %v2444 = vpop.f32.mrf.mxu0
        %v2445 = vadd.f32 %v2356, %v2444
        %v2446 = vpop.f32.mrf.mxu0
        %v2447 = vadd.f32 %v2358, %v2446
        %2448 = vmatmul.bf16.gmra.mxu0 %v525
        %v2449 = vpop.f32.mrf.mxu0
        %v2450 = vadd.f32 %v2361, %v2449
        %v2451 = vpop.f32.mrf.mxu0
        %v2452 = vadd.f32 %v2363, %v2451
        %2453 = vmatmul.bf16.gmra.mxu0 %v529
        %v2454 = vpop.f32.mrf.mxu0
        %v2455 = vadd.f32 %v2366, %v2454
        %v2456 = vpop.f32.mrf.mxu0
        %v2457 = vadd.f32 %v2368, %v2456
        %2458 = vmatmul.bf16.gmra.mxu0 %v533
        %v2459 = vpop.f32.mrf.mxu0
        %v2460 = vadd.f32 %v2371, %v2459
        %v2461 = vpop.f32.mrf.mxu0
        %v2462 = vadd.f32 %v2373, %v2461
        %2463 = vmatmul.bf16.gmra.mxu0 %v537
        %v2464 = vpop.f32.mrf.mxu0
        %v2465 = vadd.f32 %v2376, %v2464
        %v2466 = vpop.f32.mrf.mxu0
        %v2467 = vadd.f32 %v2378, %v2466
        %2468 = vmatmul.bf16.gmra.mxu0 %v541
        %v2469 = vpop.f32.mrf.mxu0
        %v2470 = vadd.f32 %v2381, %v2469
        %v2471 = vpop.f32.mrf.mxu0
        %v2472 = vadd.f32 %v2383, %v2471
        %2473 = vmatmul.bf16.gmra.mxu0 %v545
        %v2474 = vpop.f32.mrf.mxu0
        %v2475 = vadd.f32 %v2386, %v2474
        %v2476 = vpop.f32.mrf.mxu0
        %v2477 = vadd.f32 %v2388, %v2476
        %2478 = vmatmul.bf16.gmra.mxu0 %v549
        %v2479 = vpop.f32.mrf.mxu0
        %v2480 = vadd.f32 %v2391, %v2479
        %v2481 = vpop.f32.mrf.mxu0
        %v2482 = vadd.f32 %v2393, %v2481
        %2483 = vmatmul.bf16.gmra.mxu0 %v553
        %v2484 = vpop.f32.mrf.mxu0
        %v2485 = vadd.f32 %v2396, %v2484
        %v2486 = vpop.f32.mrf.mxu0
        %v2487 = vadd.f32 %v2398, %v2486
        %2488 = vmatmul.bf16.gmra.mxu0 %v557
        %v2489 = vpop.f32.mrf.mxu0
        %v2490 = vadd.f32 %v2401, %v2489
        %v2491 = vpop.f32.mrf.mxu0
        %v2492 = vadd.f32 %v2403, %v2491
        %2493 = vmatmul.bf16.gmra.mxu0 %v561
        %v2494 = vpop.f32.mrf.mxu0
        %v2495 = vadd.f32 %v2406, %v2494
        %v2496 = vpop.f32.mrf.mxu0
        %v2497 = vadd.f32 %v2408, %v2496
        %2498 = vmatmul.bf16.gmra.mxu0 %v565
        %v2499 = vpop.f32.mrf.mxu0
        %v2500 = vadd.f32 %v2411, %v2499
        %v2501 = vpop.f32.mrf.mxu0
        %v2502 = vadd.f32 %v2413, %v2501
        %2503 = vmatmul.bf16.gmra.mxu0 %v569
        %v2504 = vpop.f32.mrf.mxu0
        %v2505 = vadd.f32 %v2416, %v2504
        %v2506 = vpop.f32.mrf.mxu0
        %v2507 = vadd.f32 %v2418, %v2506
        %2508 = vmatmul.bf16.gmra.mxu0 %v573
        %v2509 = vpop.f32.mrf.mxu0
        %v2510 = vadd.f32 %v2421, %v2509
        %v2511 = vpop.f32.mrf.mxu0
        %v2512 = vadd.f32 %v2423, %v2511
        %2513 = vdwg.mxu0
        %2514 = vmatpush.bf16.msra.mxu0 %v2181
        %2515 = vmatpush.bf16.msra.mxu0 %v2179
        %2516 = vmatpush.bf16.msra.mxu0 %v2177
        %2517 = vmatpush.bf16.msra.mxu0 %v2175
        %2518 = vmatpush.bf16.msra.mxu0 %v2173
        %2519 = vmatpush.bf16.msra.mxu0 %v2171
        %2520 = vmatpush.bf16.msra.mxu0 %v2169
        %2521 = vmatpush.bf16.msra.mxu0 %v2167
        %2522 = vmatmul.bf16.gmra.mxu0 %v514
        %v2523 = vpop.f32.mrf.mxu0
        %v2524 = vadd.f32 %v2435, %v2523
        %v2525 = vpop.f32.mrf.mxu0
        %v2526 = vadd.f32 %v2437, %v2525
        %2527 = vmatmul.bf16.gmra.mxu0 %v518
        %v2528 = vpop.f32.mrf.mxu0
        %v2529 = vadd.f32 %v2440, %v2528
        %v2530 = vpop.f32.mrf.mxu0
        %v2531 = vadd.f32 %v2442, %v2530
        %2532 = vmatmul.bf16.gmra.mxu0 %v522
        %v2533 = vpop.f32.mrf.mxu0
        %v2534 = vadd.f32 %v2445, %v2533
        %v2535 = vpop.f32.mrf.mxu0
        %v2536 = vadd.f32 %v2447, %v2535
        %2537 = vmatmul.bf16.gmra.mxu0 %v526
        %v2538 = vpop.f32.mrf.mxu0
        %v2539 = vadd.f32 %v2450, %v2538
        %v2540 = vpop.f32.mrf.mxu0
        %v2541 = vadd.f32 %v2452, %v2540
        %2542 = vmatmul.bf16.gmra.mxu0 %v530
        %v2543 = vpop.f32.mrf.mxu0
        %v2544 = vadd.f32 %v2455, %v2543
        %v2545 = vpop.f32.mrf.mxu0
        %v2546 = vadd.f32 %v2457, %v2545
        %2547 = vmatmul.bf16.gmra.mxu0 %v534
        %v2548 = vpop.f32.mrf.mxu0
        %v2549 = vadd.f32 %v2460, %v2548
        %v2550 = vpop.f32.mrf.mxu0
        %v2551 = vadd.f32 %v2462, %v2550
        %2552 = vmatmul.bf16.gmra.mxu0 %v538
        %v2553 = vpop.f32.mrf.mxu0
        %v2554 = vadd.f32 %v2465, %v2553
        %v2555 = vpop.f32.mrf.mxu0
        %v2556 = vadd.f32 %v2467, %v2555
        %2557 = vmatmul.bf16.gmra.mxu0 %v542
        %v2558 = vpop.f32.mrf.mxu0
        %v2559 = vadd.f32 %v2470, %v2558
        %v2560 = vpop.f32.mrf.mxu0
        %v2561 = vadd.f32 %v2472, %v2560
        %2562 = vmatmul.bf16.gmra.mxu0 %v546
        %v2563 = vpop.f32.mrf.mxu0
        %v2564 = vadd.f32 %v2475, %v2563
        %v2565 = vpop.f32.mrf.mxu0
        %v2566 = vadd.f32 %v2477, %v2565
        %2567 = vmatmul.bf16.gmra.mxu0 %v550
        %v2568 = vpop.f32.mrf.mxu0
        %v2569 = vadd.f32 %v2480, %v2568
        %v2570 = vpop.f32.mrf.mxu0
        %v2571 = vadd.f32 %v2482, %v2570
        %2572 = vmatmul.bf16.gmra.mxu0 %v554
        %v2573 = vpop.f32.mrf.mxu0
        %v2574 = vadd.f32 %v2485, %v2573
        %v2575 = vpop.f32.mrf.mxu0
        %v2576 = vadd.f32 %v2487, %v2575
        %2577 = vmatmul.bf16.gmra.mxu0 %v558
        %v2578 = vpop.f32.mrf.mxu0
        %v2579 = vadd.f32 %v2490, %v2578
        %v2580 = vpop.f32.mrf.mxu0
        %v2581 = vadd.f32 %v2492, %v2580
        %2582 = vmatmul.bf16.gmra.mxu0 %v562
        %v2583 = vpop.f32.mrf.mxu0
        %v2584 = vadd.f32 %v2495, %v2583
        %v2585 = vpop.f32.mrf.mxu0
        %v2586 = vadd.f32 %v2497, %v2585
        %2587 = vmatmul.bf16.gmra.mxu0 %v566
        %v2588 = vpop.f32.mrf.mxu0
        %v2589 = vadd.f32 %v2500, %v2588
        %v2590 = vpop.f32.mrf.mxu0
        %v2591 = vadd.f32 %v2502, %v2590
        %2592 = vmatmul.bf16.gmra.mxu0 %v570
        %v2593 = vpop.f32.mrf.mxu0
        %v2594 = vadd.f32 %v2505, %v2593
        %v2595 = vpop.f32.mrf.mxu0
        %v2596 = vadd.f32 %v2507, %v2595
        %2597 = vmatmul.bf16.gmra.mxu0 %v574
        %v2598 = vpop.f32.mrf.mxu0
        %v2599 = vadd.f32 %v2510, %v2598
        %v2600 = vpop.f32.mrf.mxu0
        %v2601 = vadd.f32 %v2512, %v2600
        %2602 = vdwg.mxu0
        %2603 = vmatpush.bf16.msra.mxu0 %v2134
        %2604 = vmatpush.bf16.msra.mxu0 %v2132
        %2605 = vmatpush.bf16.msra.mxu0 %v2130
        %2606 = vmatpush.bf16.msra.mxu0 %v2128
        %2607 = vmatpush.bf16.msra.mxu0 %v2126
        %2608 = vmatpush.bf16.msra.mxu0 %v2124
        %2609 = vmatpush.bf16.msra.mxu0 %v2122
        %2610 = vmatpush.bf16.msra.mxu0 %v2120
        %2611 = vmatmul.bf16.gmra.mxu0 %v511
        %v2612 = vpop.f32.mrf.mxu0
        %v2613 = vadd.f32 %v1848, %v2612
        %v2614 = vpop.f32.mrf.mxu0
        %v2615 = vadd.f32 %v1850, %v2614
        %2616 = vmatmul.bf16.gmra.mxu0 %v515
        %v2617 = vpop.f32.mrf.mxu0
        %v2618 = vadd.f32 %v1853, %v2617
        %v2619 = vpop.f32.mrf.mxu0
        %v2620 = vadd.f32 %v1855, %v2619
        %2621 = vmatmul.bf16.gmra.mxu0 %v519
        %v2622 = vpop.f32.mrf.mxu0
        %v2623 = vadd.f32 %v1858, %v2622
        %v2624 = vpop.f32.mrf.mxu0
        %v2625 = vadd.f32 %v1860, %v2624
        %2626 = vmatmul.bf16.gmra.mxu0 %v523
        %v2627 = vpop.f32.mrf.mxu0
        %v2628 = vadd.f32 %v1863, %v2627
        %v2629 = vpop.f32.mrf.mxu0
        %v2630 = vadd.f32 %v1865, %v2629
        %2631 = vmatmul.bf16.gmra.mxu0 %v527
        %v2632 = vpop.f32.mrf.mxu0
        %v2633 = vadd.f32 %v1868, %v2632
        %v2634 = vpop.f32.mrf.mxu0
        %v2635 = vadd.f32 %v1870, %v2634
        %2636 = vmatmul.bf16.gmra.mxu0 %v531
        %v2637 = vpop.f32.mrf.mxu0
        %v2638 = vadd.f32 %v1873, %v2637
        %v2639 = vpop.f32.mrf.mxu0
        %v2640 = vadd.f32 %v1875, %v2639
        %2641 = vmatmul.bf16.gmra.mxu0 %v535
        %v2642 = vpop.f32.mrf.mxu0
        %v2643 = vadd.f32 %v1878, %v2642
        %v2644 = vpop.f32.mrf.mxu0
        %v2645 = vadd.f32 %v1880, %v2644
        %2646 = vmatmul.bf16.gmra.mxu0 %v539
        %v2647 = vpop.f32.mrf.mxu0
        %v2648 = vadd.f32 %v1883, %v2647
        %v2649 = vpop.f32.mrf.mxu0
        %v2650 = vadd.f32 %v1885, %v2649
        %2651 = vmatmul.bf16.gmra.mxu0 %v543
        %v2652 = vpop.f32.mrf.mxu0
        %v2653 = vadd.f32 %v1888, %v2652
        %v2654 = vpop.f32.mrf.mxu0
        %v2655 = vadd.f32 %v1890, %v2654
        %2656 = vmatmul.bf16.gmra.mxu0 %v547
        %v2657 = vpop.f32.mrf.mxu0
        %v2658 = vadd.f32 %v1893, %v2657
        %v2659 = vpop.f32.mrf.mxu0
        %v2660 = vadd.f32 %v1895, %v2659
        %2661 = vmatmul.bf16.gmra.mxu0 %v551
        %v2662 = vpop.f32.mrf.mxu0
        %v2663 = vadd.f32 %v1898, %v2662
        %v2664 = vpop.f32.mrf.mxu0
        %v2665 = vadd.f32 %v1900, %v2664
        %2666 = vmatmul.bf16.gmra.mxu0 %v555
        %v2667 = vpop.f32.mrf.mxu0
        %v2668 = vadd.f32 %v1903, %v2667
        %v2669 = vpop.f32.mrf.mxu0
        %v2670 = vadd.f32 %v1905, %v2669
        %2671 = vmatmul.bf16.gmra.mxu0 %v559
        %v2672 = vpop.f32.mrf.mxu0
        %v2673 = vadd.f32 %v1908, %v2672
        %v2674 = vpop.f32.mrf.mxu0
        %v2675 = vadd.f32 %v1910, %v2674
        %2676 = vmatmul.bf16.gmra.mxu0 %v563
        %v2677 = vpop.f32.mrf.mxu0
        %v2678 = vadd.f32 %v1913, %v2677
        %v2679 = vpop.f32.mrf.mxu0
        %v2680 = vadd.f32 %v1915, %v2679
        %2681 = vmatmul.bf16.gmra.mxu0 %v567
        %v2682 = vpop.f32.mrf.mxu0
        %v2683 = vadd.f32 %v1918, %v2682
        %v2684 = vpop.f32.mrf.mxu0
        %v2685 = vadd.f32 %v1920, %v2684
        %2686 = vmatmul.bf16.gmra.mxu0 %v571
        %v2687 = vpop.f32.mrf.mxu0
        %v2688 = vadd.f32 %v1923, %v2687
        %v2689 = vpop.f32.mrf.mxu0
        %v2690 = vadd.f32 %v1925, %v2689
        %2691 = vdwg.mxu0
        %2692 = vmatpush.bf16.msra.mxu0 %v2150
        %2693 = vmatpush.bf16.msra.mxu0 %v2148
        %2694 = vmatpush.bf16.msra.mxu0 %v2146
        %2695 = vmatpush.bf16.msra.mxu0 %v2144
        %2696 = vmatpush.bf16.msra.mxu0 %v2142
        %2697 = vmatpush.bf16.msra.mxu0 %v2140
        %2698 = vmatpush.bf16.msra.mxu0 %v2138
        %2699 = vmatpush.bf16.msra.mxu0 %v2136
        %2700 = vmatmul.bf16.gmra.mxu0 %v512
        %v2701 = vpop.f32.mrf.mxu0
        %v2702 = vadd.f32 %v2613, %v2701
        %v2703 = vpop.f32.mrf.mxu0
        %v2704 = vadd.f32 %v2615, %v2703
        %2705 = vmatmul.bf16.gmra.mxu0 %v516
        %v2706 = vpop.f32.mrf.mxu0
        %v2707 = vadd.f32 %v2618, %v2706
        %v2708 = vpop.f32.mrf.mxu0
        %v2709 = vadd.f32 %v2620, %v2708
        %2710 = vmatmul.bf16.gmra.mxu0 %v520
        %v2711 = vpop.f32.mrf.mxu0
        %v2712 = vadd.f32 %v2623, %v2711
        %v2713 = vpop.f32.mrf.mxu0
        %v2714 = vadd.f32 %v2625, %v2713
        %2715 = vmatmul.bf16.gmra.mxu0 %v524
        %v2716 = vpop.f32.mrf.mxu0
        %v2717 = vadd.f32 %v2628, %v2716
        %v2718 = vpop.f32.mrf.mxu0
        %v2719 = vadd.f32 %v2630, %v2718
        %2720 = vmatmul.bf16.gmra.mxu0 %v528
        %v2721 = vpop.f32.mrf.mxu0
        %v2722 = vadd.f32 %v2633, %v2721
        %v2723 = vpop.f32.mrf.mxu0
        %v2724 = vadd.f32 %v2635, %v2723
        %2725 = vmatmul.bf16.gmra.mxu0 %v532
        %v2726 = vpop.f32.mrf.mxu0
        %v2727 = vadd.f32 %v2638, %v2726
        %v2728 = vpop.f32.mrf.mxu0
        %v2729 = vadd.f32 %v2640, %v2728
        %2730 = vmatmul.bf16.gmra.mxu0 %v536
        %v2731 = vpop.f32.mrf.mxu0
        %v2732 = vadd.f32 %v2643, %v2731
        %v2733 = vpop.f32.mrf.mxu0
        %v2734 = vadd.f32 %v2645, %v2733
        %2735 = vmatmul.bf16.gmra.mxu0 %v540
        %v2736 = vpop.f32.mrf.mxu0
        %v2737 = vadd.f32 %v2648, %v2736
        %v2738 = vpop.f32.mrf.mxu0
        %v2739 = vadd.f32 %v2650, %v2738
        %2740 = vmatmul.bf16.gmra.mxu0 %v544
        %v2741 = vpop.f32.mrf.mxu0
        %v2742 = vadd.f32 %v2653, %v2741
        %v2743 = vpop.f32.mrf.mxu0
        %v2744 = vadd.f32 %v2655, %v2743
        %2745 = vmatmul.bf16.gmra.mxu0 %v548
        %v2746 = vpop.f32.mrf.mxu0
        %v2747 = vadd.f32 %v2658, %v2746
        %v2748 = vpop.f32.mrf.mxu0
        %v2749 = vadd.f32 %v2660, %v2748
        %2750 = vmatmul.bf16.gmra.mxu0 %v552
        %v2751 = vpop.f32.mrf.mxu0
        %v2752 = vadd.f32 %v2663, %v2751
        %v2753 = vpop.f32.mrf.mxu0
        %v2754 = vadd.f32 %v2665, %v2753
        %2755 = vmatmul.bf16.gmra.mxu0 %v556
        %v2756 = vpop.f32.mrf.mxu0
        %v2757 = vadd.f32 %v2668, %v2756
        %v2758 = vpop.f32.mrf.mxu0
        %v2759 = vadd.f32 %v2670, %v2758
        %2760 = vmatmul.bf16.gmra.mxu0 %v560
        %v2761 = vpop.f32.mrf.mxu0
        %v2762 = vadd.f32 %v2673, %v2761
        %v2763 = vpop.f32.mrf.mxu0
        %v2764 = vadd.f32 %v2675, %v2763
        %2765 = vmatmul.bf16.gmra.mxu0 %v564
        %v2766 = vpop.f32.mrf.mxu0
        %v2767 = vadd.f32 %v2678, %v2766
        %v2768 = vpop.f32.mrf.mxu0
        %v2769 = vadd.f32 %v2680, %v2768
        %2770 = vmatmul.bf16.gmra.mxu0 %v568
        %v2771 = vpop.f32.mrf.mxu0
        %v2772 = vadd.f32 %v2683, %v2771
        %v2773 = vpop.f32.mrf.mxu0
        %v2774 = vadd.f32 %v2685, %v2773
        %2775 = vmatmul.bf16.gmra.mxu0 %v572
        %v2776 = vpop.f32.mrf.mxu0
        %v2777 = vadd.f32 %v2688, %v2776
        %v2778 = vpop.f32.mrf.mxu0
        %v2779 = vadd.f32 %v2690, %v2778
        %2780 = vdwg.mxu0
        %2781 = vmatpush.bf16.msra.mxu0 %v2166
        %2782 = vmatpush.bf16.msra.mxu0 %v2164
        %2783 = vmatpush.bf16.msra.mxu0 %v2162
        %2784 = vmatpush.bf16.msra.mxu0 %v2160
        %2785 = vmatpush.bf16.msra.mxu0 %v2158
        %2786 = vmatpush.bf16.msra.mxu0 %v2156
        %2787 = vmatpush.bf16.msra.mxu0 %v2154
        %2788 = vmatpush.bf16.msra.mxu0 %v2152
        %2789 = vmatmul.bf16.gmra.mxu0 %v513
        %v2790 = vpop.f32.mrf.mxu0
        %v2791 = vadd.f32 %v2702, %v2790
        %v2792 = vpop.f32.mrf.mxu0
        %v2793 = vadd.f32 %v2704, %v2792
        %2794 = vmatmul.bf16.gmra.mxu0 %v517
        %v2795 = vpop.f32.mrf.mxu0
        %v2796 = vadd.f32 %v2707, %v2795
        %v2797 = vpop.f32.mrf.mxu0
        %v2798 = vadd.f32 %v2709, %v2797
        %2799 = vmatmul.bf16.gmra.mxu0 %v521
        %v2800 = vpop.f32.mrf.mxu0
        %v2801 = vadd.f32 %v2712, %v2800
        %v2802 = vpop.f32.mrf.mxu0
        %v2803 = vadd.f32 %v2714, %v2802
        %2804 = vmatmul.bf16.gmra.mxu0 %v525
        %v2805 = vpop.f32.mrf.mxu0
        %v2806 = vadd.f32 %v2717, %v2805
        %v2807 = vpop.f32.mrf.mxu0
        %v2808 = vadd.f32 %v2719, %v2807
        %2809 = vmatmul.bf16.gmra.mxu0 %v529
        %v2810 = vpop.f32.mrf.mxu0
        %v2811 = vadd.f32 %v2722, %v2810
        %v2812 = vpop.f32.mrf.mxu0
        %v2813 = vadd.f32 %v2724, %v2812
        %2814 = vmatmul.bf16.gmra.mxu0 %v533
        %v2815 = vpop.f32.mrf.mxu0
        %v2816 = vadd.f32 %v2727, %v2815
        %v2817 = vpop.f32.mrf.mxu0
        %v2818 = vadd.f32 %v2729, %v2817
        %2819 = vmatmul.bf16.gmra.mxu0 %v537
        %v2820 = vpop.f32.mrf.mxu0
        %v2821 = vadd.f32 %v2732, %v2820
        %v2822 = vpop.f32.mrf.mxu0
        %v2823 = vadd.f32 %v2734, %v2822
        %2824 = vmatmul.bf16.gmra.mxu0 %v541
        %v2825 = vpop.f32.mrf.mxu0
        %v2826 = vadd.f32 %v2737, %v2825
        %v2827 = vpop.f32.mrf.mxu0
        %v2828 = vadd.f32 %v2739, %v2827
        %2829 = vmatmul.bf16.gmra.mxu0 %v545
        %v2830 = vpop.f32.mrf.mxu0
        %v2831 = vadd.f32 %v2742, %v2830
        %v2832 = vpop.f32.mrf.mxu0
        %v2833 = vadd.f32 %v2744, %v2832
        %2834 = vmatmul.bf16.gmra.mxu0 %v549
        %v2835 = vpop.f32.mrf.mxu0
        %v2836 = vadd.f32 %v2747, %v2835
        %v2837 = vpop.f32.mrf.mxu0
        %v2838 = vadd.f32 %v2749, %v2837
        %2839 = vmatmul.bf16.gmra.mxu0 %v553
        %v2840 = vpop.f32.mrf.mxu0
        %v2841 = vadd.f32 %v2752, %v2840
        %v2842 = vpop.f32.mrf.mxu0
        %v2843 = vadd.f32 %v2754, %v2842
        %2844 = vmatmul.bf16.gmra.mxu0 %v557
        %v2845 = vpop.f32.mrf.mxu0
        %v2846 = vadd.f32 %v2757, %v2845
        %v2847 = vpop.f32.mrf.mxu0
        %v2848 = vadd.f32 %v2759, %v2847
        %2849 = vmatmul.bf16.gmra.mxu0 %v561
        %v2850 = vpop.f32.mrf.mxu0
        %v2851 = vadd.f32 %v2762, %v2850
        %v2852 = vpop.f32.mrf.mxu0
        %v2853 = vadd.f32 %v2764, %v2852
        %2854 = vmatmul.bf16.gmra.mxu0 %v565
        %v2855 = vpop.f32.mrf.mxu0
        %v2856 = vadd.f32 %v2767, %v2855
        %v2857 = vpop.f32.mrf.mxu0
        %v2858 = vadd.f32 %v2769, %v2857
        %2859 = vmatmul.bf16.gmra.mxu0 %v569
        %v2860 = vpop.f32.mrf.mxu0
        %v2861 = vadd.f32 %v2772, %v2860
        %v2862 = vpop.f32.mrf.mxu0
        %v2863 = vadd.f32 %v2774, %v2862
        %2864 = vmatmul.bf16.gmra.mxu0 %v573
        %v2865 = vpop.f32.mrf.mxu0
        %v2866 = vadd.f32 %v2777, %v2865
        %v2867 = vpop.f32.mrf.mxu0
        %v2868 = vadd.f32 %v2779, %v2867
        %2869 = vdwg.mxu0
        %2870 = vmatpush.bf16.msra.mxu0 %v2182
        %2871 = vmatpush.bf16.msra.mxu0 %v2180
        %2872 = vmatpush.bf16.msra.mxu0 %v2178
        %2873 = vmatpush.bf16.msra.mxu0 %v2176
        %2874 = vmatpush.bf16.msra.mxu0 %v2174
        %2875 = vmatpush.bf16.msra.mxu0 %v2172
        %2876 = vmatpush.bf16.msra.mxu0 %v2170
        %2877 = vmatpush.bf16.msra.mxu0 %v2168
        %2878 = vmatmul.bf16.gmra.mxu0 %v514
        %v2879 = vpop.f32.mrf.mxu0
        %v2880 = vadd.f32 %v2791, %v2879
        %v2881 = vpop.f32.mrf.mxu0
        %v2882 = vadd.f32 %v2793, %v2881
        %2883 = vmatmul.bf16.gmra.mxu0 %v518
        %v2884 = vpop.f32.mrf.mxu0
        %v2885 = vadd.f32 %v2796, %v2884
        %v2886 = vpop.f32.mrf.mxu0
        %v2887 = vadd.f32 %v2798, %v2886
        %2888 = vmatmul.bf16.gmra.mxu0 %v522
        %v2889 = vpop.f32.mrf.mxu0
        %v2890 = vadd.f32 %v2801, %v2889
        %v2891 = vpop.f32.mrf.mxu0
        %v2892 = vadd.f32 %v2803, %v2891
        %2893 = vmatmul.bf16.gmra.mxu0 %v526
        %v2894 = vpop.f32.mrf.mxu0
        %v2895 = vadd.f32 %v2806, %v2894
        %v2896 = vpop.f32.mrf.mxu0
        %v2897 = vadd.f32 %v2808, %v2896
        %2898 = vmatmul.bf16.gmra.mxu0 %v530
        %v2899 = vpop.f32.mrf.mxu0
        %v2900 = vadd.f32 %v2811, %v2899
        %v2901 = vpop.f32.mrf.mxu0
        %v2902 = vadd.f32 %v2813, %v2901
        %2903 = vmatmul.bf16.gmra.mxu0 %v534
        %v2904 = vpop.f32.mrf.mxu0
        %v2905 = vadd.f32 %v2816, %v2904
        %v2906 = vpop.f32.mrf.mxu0
        %v2907 = vadd.f32 %v2818, %v2906
        %2908 = vmatmul.bf16.gmra.mxu0 %v538
        %v2909 = vpop.f32.mrf.mxu0
        %v2910 = vadd.f32 %v2821, %v2909
        %v2911 = vpop.f32.mrf.mxu0
        %v2912 = vadd.f32 %v2823, %v2911
        %2913 = vmatmul.bf16.gmra.mxu0 %v542
        %v2914 = vpop.f32.mrf.mxu0
        %v2915 = vadd.f32 %v2826, %v2914
        %v2916 = vpop.f32.mrf.mxu0
        %v2917 = vadd.f32 %v2828, %v2916
        %2918 = vmatmul.bf16.gmra.mxu0 %v546
        %v2919 = vpop.f32.mrf.mxu0
        %v2920 = vadd.f32 %v2831, %v2919
        %v2921 = vpop.f32.mrf.mxu0
        %v2922 = vadd.f32 %v2833, %v2921
        %2923 = vmatmul.bf16.gmra.mxu0 %v550
        %v2924 = vpop.f32.mrf.mxu0
        %v2925 = vadd.f32 %v2836, %v2924
        %v2926 = vpop.f32.mrf.mxu0
        %v2927 = vadd.f32 %v2838, %v2926
        %2928 = vmatmul.bf16.gmra.mxu0 %v554
        %v2929 = vpop.f32.mrf.mxu0
        %v2930 = vadd.f32 %v2841, %v2929
        %v2931 = vpop.f32.mrf.mxu0
        %v2932 = vadd.f32 %v2843, %v2931
        %2933 = vmatmul.bf16.gmra.mxu0 %v558
        %v2934 = vpop.f32.mrf.mxu0
        %v2935 = vadd.f32 %v2846, %v2934
        %v2936 = vpop.f32.mrf.mxu0
        %v2937 = vadd.f32 %v2848, %v2936
        %2938 = vmatmul.bf16.gmra.mxu0 %v562
        %v2939 = vpop.f32.mrf.mxu0
        %v2940 = vadd.f32 %v2851, %v2939
        %v2941 = vpop.f32.mrf.mxu0
        %v2942 = vadd.f32 %v2853, %v2941
        %2943 = vmatmul.bf16.gmra.mxu0 %v566
        %v2944 = vpop.f32.mrf.mxu0
        %v2945 = vadd.f32 %v2856, %v2944
        %v2946 = vpop.f32.mrf.mxu0
        %v2947 = vadd.f32 %v2858, %v2946
        %2948 = vmatmul.bf16.gmra.mxu0 %v570
        %v2949 = vpop.f32.mrf.mxu0
        %v2950 = vadd.f32 %v2861, %v2949
        %v2951 = vpop.f32.mrf.mxu0
        %v2952 = vadd.f32 %v2863, %v2951
        %2953 = vmatmul.bf16.gmra.mxu0 %v574
        %v2954 = vpop.f32.mrf.mxu0
        %v2955 = vadd.f32 %v2866, %v2954
        %v2956 = vpop.f32.mrf.mxu0
        %v2957 = vadd.f32 %v2868, %v2956
        %2958 = vdwg.mxu0
        %v2959 = vld [vmem:[%s4] sm:$0x3]
        %v2961 = vperm.slane %v2959, 0
        %v2962 = vperm.slane %v2959, 1
        %v2965 = vadd.f32 %v2524, %v2961
        %v2966 = vadd.f32 %v2880, %v2962
        %v2967 = vadd.f32 %v2526, %v2961
        %v2968 = vadd.f32 %v2882, %v2962
        %v2969 = vadd.f32 %v2529, %v2961
        %v2970 = vadd.f32 %v2885, %v2962
        %v2971 = vadd.f32 %v2531, %v2961
        %v2972 = vadd.f32 %v2887, %v2962
        %v2973 = vadd.f32 %v2534, %v2961
        %v2974 = vadd.f32 %v2890, %v2962
        %v2975 = vadd.f32 %v2536, %v2961
        %v2976 = vadd.f32 %v2892, %v2962
        %v2977 = vadd.f32 %v2539, %v2961
        %v2978 = vadd.f32 %v2895, %v2962
        %v2979 = vadd.f32 %v2541, %v2961
        %v2980 = vadd.f32 %v2897, %v2962
        %v2981 = vadd.f32 %v2544, %v2961
        %v2982 = vadd.f32 %v2900, %v2962
        %v2983 = vadd.f32 %v2546, %v2961
        %v2984 = vadd.f32 %v2902, %v2962
        %v2985 = vadd.f32 %v2549, %v2961
        %v2986 = vadd.f32 %v2905, %v2962
        %v2987 = vadd.f32 %v2551, %v2961
        %v2988 = vadd.f32 %v2907, %v2962
        %v2989 = vadd.f32 %v2554, %v2961
        %v2990 = vadd.f32 %v2910, %v2962
        %v2991 = vadd.f32 %v2556, %v2961
        %v2992 = vadd.f32 %v2912, %v2962
        %v2993 = vadd.f32 %v2559, %v2961
        %v2994 = vadd.f32 %v2915, %v2962
        %v2995 = vadd.f32 %v2561, %v2961
        %v2996 = vadd.f32 %v2917, %v2962
        %v2997 = vadd.f32 %v2564, %v2961
        %v2998 = vadd.f32 %v2920, %v2962
        %v2999 = vadd.f32 %v2566, %v2961
        %v3000 = vadd.f32 %v2922, %v2962
        %v3001 = vadd.f32 %v2569, %v2961
        %v3002 = vadd.f32 %v2925, %v2962
        %v3003 = vadd.f32 %v2571, %v2961
        %v3004 = vadd.f32 %v2927, %v2962
        %v3005 = vadd.f32 %v2574, %v2961
        %v3006 = vadd.f32 %v2930, %v2962
        %v3007 = vadd.f32 %v2576, %v2961
        %v3008 = vadd.f32 %v2932, %v2962
        %v3009 = vadd.f32 %v2579, %v2961
        %v3010 = vadd.f32 %v2935, %v2962
        %v3011 = vadd.f32 %v2581, %v2961
        %v3012 = vadd.f32 %v2937, %v2962
        %v3013 = vadd.f32 %v2584, %v2961
        %v3014 = vadd.f32 %v2940, %v2962
        %v3015 = vadd.f32 %v2586, %v2961
        %v3016 = vadd.f32 %v2942, %v2962
        %v3017 = vadd.f32 %v2589, %v2961
        %v3018 = vadd.f32 %v2945, %v2962
        %v3019 = vadd.f32 %v2591, %v2961
        %v3020 = vadd.f32 %v2947, %v2962
        %v3021 = vadd.f32 %v2594, %v2961
        %v3022 = vadd.f32 %v2950, %v2962
        %v3023 = vadd.f32 %v2596, %v2961
        %v3024 = vadd.f32 %v2952, %v2962
        %v3025 = vadd.f32 %v2599, %v2961
        %v3026 = vadd.f32 %v2955, %v2962
        %v3027 = vadd.f32 %v2601, %v2961
        %v3028 = vadd.f32 %v2957, %v2962
        %v3029 = vmax.f32 %v2965, 0.0
        %v3030 = vmax.f32 %v2966, 0.0
        %v3031 = vmax.f32 %v2967, 0.0
        %v3032 = vmax.f32 %v2968, 0.0
        %v3033 = vmax.f32 %v2969, 0.0
        %v3034 = vmax.f32 %v2970, 0.0
        %v3035 = vmax.f32 %v2971, 0.0
        %v3036 = vmax.f32 %v2972, 0.0
        %v3037 = vmax.f32 %v2973, 0.0
        %v3038 = vmax.f32 %v2974, 0.0
        %v3039 = vmax.f32 %v2975, 0.0
        %v3040 = vmax.f32 %v2976, 0.0
        %v3041 = vmax.f32 %v2977, 0.0
        %v3042 = vmax.f32 %v2978, 0.0
        %v3043 = vmax.f32 %v2979, 0.0
        %v3044 = vmax.f32 %v2980, 0.0
        %v3045 = vmax.f32 %v2981, 0.0
        %v3046 = vmax.f32 %v2982, 0.0
        %v3047 = vmax.f32 %v2983, 0.0
        %v3048 = vmax.f32 %v2984, 0.0
        %v3049 = vmax.f32 %v2985, 0.0
        %v3050 = vmax.f32 %v2986, 0.0
        %v3051 = vmax.f32 %v2987, 0.0
        %v3052 = vmax.f32 %v2988, 0.0
        %v3053 = vmax.f32 %v2989, 0.0
        %v3054 = vmax.f32 %v2990, 0.0
        %v3055 = vmax.f32 %v2991, 0.0
        %v3056 = vmax.f32 %v2992, 0.0
        %v3057 = vmax.f32 %v2993, 0.0
        %v3058 = vmax.f32 %v2994, 0.0
        %v3059 = vmax.f32 %v2995, 0.0
        %v3060 = vmax.f32 %v2996, 0.0
        %v3061 = vmax.f32 %v2997, 0.0
        %v3062 = vmax.f32 %v2998, 0.0
        %v3063 = vmax.f32 %v2999, 0.0
        %v3064 = vmax.f32 %v3000, 0.0
        %v3065 = vmax.f32 %v3001, 0.0
        %v3066 = vmax.f32 %v3002, 0.0
        %v3067 = vmax.f32 %v3003, 0.0
        %v3068 = vmax.f32 %v3004, 0.0
        %v3069 = vmax.f32 %v3005, 0.0
        %v3070 = vmax.f32 %v3006, 0.0
        %v3071 = vmax.f32 %v3007, 0.0
        %v3072 = vmax.f32 %v3008, 0.0
        %v3073 = vmax.f32 %v3009, 0.0
        %v3074 = vmax.f32 %v3010, 0.0
        %v3075 = vmax.f32 %v3011, 0.0
        %v3076 = vmax.f32 %v3012, 0.0
        %v3077 = vmax.f32 %v3013, 0.0
        %v3078 = vmax.f32 %v3014, 0.0
        %v3079 = vmax.f32 %v3015, 0.0
        %v3080 = vmax.f32 %v3016, 0.0
        %v3081 = vmax.f32 %v3017, 0.0
        %v3082 = vmax.f32 %v3018, 0.0
        %v3083 = vmax.f32 %v3019, 0.0
        %v3084 = vmax.f32 %v3020, 0.0
        %v3085 = vmax.f32 %v3021, 0.0
        %v3086 = vmax.f32 %v3022, 0.0
        %v3087 = vmax.f32 %v3023, 0.0
        %v3088 = vmax.f32 %v3024, 0.0
        %v3089 = vmax.f32 %v3025, 0.0
        %v3090 = vmax.f32 %v3026, 0.0
        %v3091 = vmax.f32 %v3027, 0.0
        %v3092 = vmax.f32 %v3028, 0.0
        %v3093 = vld [vmem:[%s5] sm:$0x3]
        %v3095 = vperm.slane %v3093, 0
        %v3096 = vperm.slane %v3093, 1
        %v3099 = vmul.f32 %v3029, %v3095
        %v3100 = vmul.f32 %v3030, %v3096
        %v3101 = vmul.f32 %v3031, %v3095
        %v3102 = vmul.f32 %v3032, %v3096
        %v3103 = vmul.f32 %v3033, %v3095
        %v3104 = vmul.f32 %v3034, %v3096
        %v3105 = vmul.f32 %v3035, %v3095
        %v3106 = vmul.f32 %v3036, %v3096
        %v3107 = vmul.f32 %v3037, %v3095
        %v3108 = vmul.f32 %v3038, %v3096
        %v3109 = vmul.f32 %v3039, %v3095
        %v3110 = vmul.f32 %v3040, %v3096
        %v3111 = vmul.f32 %v3041, %v3095
        %v3112 = vmul.f32 %v3042, %v3096
        %v3113 = vmul.f32 %v3043, %v3095
        %v3114 = vmul.f32 %v3044, %v3096
        %v3115 = vmul.f32 %v3045, %v3095
        %v3116 = vmul.f32 %v3046, %v3096
        %v3117 = vmul.f32 %v3047, %v3095
        %v3118 = vmul.f32 %v3048, %v3096
        %v3119 = vmul.f32 %v3049, %v3095
        %v3120 = vmul.f32 %v3050, %v3096
        %v3121 = vmul.f32 %v3051, %v3095
        %v3122 = vmul.f32 %v3052, %v3096
        %v3123 = vmul.f32 %v3053, %v3095
        %v3124 = vmul.f32 %v3054, %v3096
        %v3125 = vmul.f32 %v3055, %v3095
        %v3126 = vmul.f32 %v3056, %v3096
        %v3127 = vmul.f32 %v3057, %v3095
        %v3128 = vmul.f32 %v3058, %v3096
        %v3129 = vmul.f32 %v3059, %v3095
        %v3130 = vmul.f32 %v3060, %v3096
        %v3131 = vmul.f32 %v3061, %v3095
        %v3132 = vmul.f32 %v3062, %v3096
        %v3133 = vmul.f32 %v3063, %v3095
        %v3134 = vmul.f32 %v3064, %v3096
        %v3135 = vmul.f32 %v3065, %v3095
        %v3136 = vmul.f32 %v3066, %v3096
        %v3137 = vmul.f32 %v3067, %v3095
        %v3138 = vmul.f32 %v3068, %v3096
        %v3139 = vmul.f32 %v3069, %v3095
        %v3140 = vmul.f32 %v3070, %v3096
        %v3141 = vmul.f32 %v3071, %v3095
        %v3142 = vmul.f32 %v3072, %v3096
        %v3143 = vmul.f32 %v3073, %v3095
        %v3144 = vmul.f32 %v3074, %v3096
        %v3145 = vmul.f32 %v3075, %v3095
        %v3146 = vmul.f32 %v3076, %v3096
        %v3147 = vmul.f32 %v3077, %v3095
        %v3148 = vmul.f32 %v3078, %v3096
        %v3149 = vmul.f32 %v3079, %v3095
        %v3150 = vmul.f32 %v3080, %v3096
        %v3151 = vmul.f32 %v3081, %v3095
        %v3152 = vmul.f32 %v3082, %v3096
        %v3153 = vmul.f32 %v3083, %v3095
        %v3154 = vmul.f32 %v3084, %v3096
        %v3155 = vmul.f32 %v3085, %v3095
        %v3156 = vmul.f32 %v3086, %v3096
        %v3157 = vmul.f32 %v3087, %v3095
        %v3158 = vmul.f32 %v3088, %v3096
        %v3159 = vmul.f32 %v3089, %v3095
        %v3160 = vmul.f32 %v3090, %v3096
        %v3161 = vmul.f32 %v3091, %v3095
        %v3162 = vmul.f32 %v3092, %v3096
        %v3163 = vadd.f32 %v3099, %v3100
        %3164 = vadd.xlane.f32.xlu0 %v3163
        %v3165 = vpop.xlane.xlu0 %3164
        %v3166 = vadd.f32 %v3101, %v3102
        %3167 = vadd.xlane.f32.xlu0 %v3166
        %v3168 = vpop.xlane.xlu0 %3167
        %v3169 = vadd.f32 %v3103, %v3104
        %3170 = vadd.xlane.f32.xlu0 %v3169
        %v3171 = vpop.xlane.xlu0 %3170
        %v3172 = vadd.f32 %v3105, %v3106
        %3173 = vadd.xlane.f32.xlu0 %v3172
        %v3174 = vpop.xlane.xlu0 %3173
        %v3175 = vadd.f32 %v3107, %v3108
        %3176 = vadd.xlane.f32.xlu0 %v3175
        %v3177 = vpop.xlane.xlu0 %3176
        %v3178 = vadd.f32 %v3109, %v3110
        %3179 = vadd.xlane.f32.xlu0 %v3178
        %v3180 = vpop.xlane.xlu0 %3179
        %v3181 = vadd.f32 %v3111, %v3112
        %3182 = vadd.xlane.f32.xlu0 %v3181
        %v3183 = vpop.xlane.xlu0 %3182
        %v3184 = vadd.f32 %v3113, %v3114
        %3185 = vadd.xlane.f32.xlu0 %v3184
        %v3186 = vpop.xlane.xlu0 %3185
        %v3187 = vadd.f32 %v3115, %v3116
        %3188 = vadd.xlane.f32.xlu0 %v3187
        %v3189 = vpop.xlane.xlu0 %3188
        %v3190 = vadd.f32 %v3117, %v3118
        %3191 = vadd.xlane.f32.xlu0 %v3190
        %v3192 = vpop.xlane.xlu0 %3191
        %v3193 = vadd.f32 %v3119, %v3120
        %3194 = vadd.xlane.f32.xlu0 %v3193
        %v3195 = vpop.xlane.xlu0 %3194
        %v3196 = vadd.f32 %v3121, %v3122
        %3197 = vadd.xlane.f32.xlu0 %v3196
        %v3198 = vpop.xlane.xlu0 %3197
        %v3199 = vadd.f32 %v3123, %v3124
        %3200 = vadd.xlane.f32.xlu0 %v3199
        %v3201 = vpop.xlane.xlu0 %3200
        %v3202 = vadd.f32 %v3125, %v3126
        %3203 = vadd.xlane.f32.xlu0 %v3202
        %v3204 = vpop.xlane.xlu0 %3203
        %v3205 = vadd.f32 %v3127, %v3128
        %3206 = vadd.xlane.f32.xlu0 %v3205
        %v3207 = vpop.xlane.xlu0 %3206
        %v3208 = vadd.f32 %v3129, %v3130
        %3209 = vadd.xlane.f32.xlu0 %v3208
        %v3210 = vpop.xlane.xlu0 %3209
        %v3211 = vadd.f32 %v3131, %v3132
        %3212 = vadd.xlane.f32.xlu0 %v3211
        %v3213 = vpop.xlane.xlu0 %3212
        %v3214 = vadd.f32 %v3133, %v3134
        %3215 = vadd.xlane.f32.xlu0 %v3214
        %v3216 = vpop.xlane.xlu0 %3215
        %v3217 = vadd.f32 %v3135, %v3136
        %3218 = vadd.xlane.f32.xlu0 %v3217
        %v3219 = vpop.xlane.xlu0 %3218
        %v3220 = vadd.f32 %v3137, %v3138
        %3221 = vadd.xlane.f32.xlu0 %v3220
        %v3222 = vpop.xlane.xlu0 %3221
        %v3223 = vadd.f32 %v3139, %v3140
        %3224 = vadd.xlane.f32.xlu0 %v3223
        %v3225 = vpop.xlane.xlu0 %3224
        %v3226 = vadd.f32 %v3141, %v3142
        %3227 = vadd.xlane.f32.xlu0 %v3226
        %v3228 = vpop.xlane.xlu0 %3227
        %v3229 = vadd.f32 %v3143, %v3144
        %3230 = vadd.xlane.f32.xlu0 %v3229
        %v3231 = vpop.xlane.xlu0 %3230
        %v3232 = vadd.f32 %v3145, %v3146
        %3233 = vadd.xlane.f32.xlu0 %v3232
        %v3234 = vpop.xlane.xlu0 %3233
        %v3235 = vadd.f32 %v3147, %v3148
        %3236 = vadd.xlane.f32.xlu0 %v3235
        %v3237 = vpop.xlane.xlu0 %3236
        %v3238 = vadd.f32 %v3149, %v3150
        %3239 = vadd.xlane.f32.xlu0 %v3238
        %v3240 = vpop.xlane.xlu0 %3239
        %v3241 = vadd.f32 %v3151, %v3152
        %3242 = vadd.xlane.f32.xlu0 %v3241
        %v3243 = vpop.xlane.xlu0 %3242
        %v3244 = vadd.f32 %v3153, %v3154
        %3245 = vadd.xlane.f32.xlu0 %v3244
        %v3246 = vpop.xlane.xlu0 %3245
        %v3247 = vadd.f32 %v3155, %v3156
        %3248 = vadd.xlane.f32.xlu0 %v3247
        %v3249 = vpop.xlane.xlu0 %3248
        %v3250 = vadd.f32 %v3157, %v3158
        %3251 = vadd.xlane.f32.xlu0 %v3250
        %v3252 = vpop.xlane.xlu0 %3251
        %v3253 = vadd.f32 %v3159, %v3160
        %3254 = vadd.xlane.f32.xlu0 %v3253
        %v3255 = vpop.xlane.xlu0 %3254
        %v3256 = vadd.f32 %v3161, %v3162
        %3257 = vadd.xlane.f32.xlu0 %v3256
        %v3258 = vpop.xlane.xlu0 %3257
        %v3259 = vld [vmem:[#allocation2] sm:$0x1]
        %v3261 = vperm.slane %v3259, 0
        %v3263 = vadd.f32 %v3165, %v3261
        %v3264 = vadd.f32 %v3168, %v3261
        %v3265 = vadd.f32 %v3171, %v3261
        %v3266 = vadd.f32 %v3174, %v3261
        %v3267 = vadd.f32 %v3177, %v3261
        %v3268 = vadd.f32 %v3180, %v3261
        %v3269 = vadd.f32 %v3183, %v3261
        %v3270 = vadd.f32 %v3186, %v3261
        %v3271 = vadd.f32 %v3189, %v3261
        %v3272 = vadd.f32 %v3192, %v3261
        %v3273 = vadd.f32 %v3195, %v3261
        %v3274 = vadd.f32 %v3198, %v3261
        %v3275 = vadd.f32 %v3201, %v3261
        %v3276 = vadd.f32 %v3204, %v3261
        %v3277 = vadd.f32 %v3207, %v3261
        %v3278 = vadd.f32 %v3210, %v3261
        %v3279 = vadd.f32 %v3213, %v3261
        %v3280 = vadd.f32 %v3216, %v3261
        %v3281 = vadd.f32 %v3219, %v3261
        %v3282 = vadd.f32 %v3222, %v3261
        %v3283 = vadd.f32 %v3225, %v3261
        %v3284 = vadd.f32 %v3228, %v3261
        %v3285 = vadd.f32 %v3231, %v3261
        %v3286 = vadd.f32 %v3234, %v3261
        %v3287 = vadd.f32 %v3237, %v3261
        %v3288 = vadd.f32 %v3240, %v3261
        %v3289 = vadd.f32 %v3243, %v3261
        %v3290 = vadd.f32 %v3246, %v3261
        %v3291 = vadd.f32 %v3249, %v3261
        %v3292 = vadd.f32 %v3252, %v3261
        %v3293 = vadd.f32 %v3255, %v3261
        %v3294 = vadd.f32 %v3258, %v3261
        %v3295 = vxor.u32 %v3263, 2147483648
        %v3296 = vxor.u32 %v3264, 2147483648
        %v3297 = vxor.u32 %v3265, 2147483648
        %v3298 = vxor.u32 %v3266, 2147483648
        %v3299 = vxor.u32 %v3267, 2147483648
        %v3300 = vxor.u32 %v3268, 2147483648
        %v3301 = vxor.u32 %v3269, 2147483648
        %v3302 = vxor.u32 %v3270, 2147483648
        %v3303 = vxor.u32 %v3271, 2147483648
        %v3304 = vxor.u32 %v3272, 2147483648
        %v3305 = vxor.u32 %v3273, 2147483648
        %v3306 = vxor.u32 %v3274, 2147483648
        %v3307 = vxor.u32 %v3275, 2147483648
        %v3308 = vxor.u32 %v3276, 2147483648
        %v3309 = vxor.u32 %v3277, 2147483648
        %v3310 = vxor.u32 %v3278, 2147483648
        %v3311 = vxor.u32 %v3279, 2147483648
        %v3312 = vxor.u32 %v3280, 2147483648
        %v3313 = vxor.u32 %v3281, 2147483648
        %v3314 = vxor.u32 %v3282, 2147483648
        %v3315 = vxor.u32 %v3283, 2147483648
        %v3316 = vxor.u32 %v3284, 2147483648
        %v3317 = vxor.u32 %v3285, 2147483648
        %v3318 = vxor.u32 %v3286, 2147483648
        %v3319 = vxor.u32 %v3287, 2147483648
        %v3320 = vxor.u32 %v3288, 2147483648
        %v3321 = vxor.u32 %v3289, 2147483648
        %v3322 = vxor.u32 %v3290, 2147483648
        %v3323 = vxor.u32 %v3291, 2147483648
        %v3324 = vxor.u32 %v3292, 2147483648
        %v3325 = vxor.u32 %v3293, 2147483648
        %v3326 = vxor.u32 %v3294, 2147483648
        %v3327 = vmul.f32 %v3295, 1.442695
        %v3328 = vpow.pop %v3327
        %v3329 = vmul.f32 %v3296, 1.442695
        %v3330 = vpow.pop %v3329
        %v3331 = vmul.f32 %v3297, 1.442695
        %v3332 = vpow.pop %v3331
        %v3333 = vmul.f32 %v3298, 1.442695
        %v3334 = vpow.pop %v3333
        %v3335 = vmul.f32 %v3299, 1.442695
        %v3336 = vpow.pop %v3335
        %v3337 = vmul.f32 %v3300, 1.442695
        %v3338 = vpow.pop %v3337
        %v3339 = vmul.f32 %v3301, 1.442695
        %v3340 = vpow.pop %v3339
        %v3341 = vmul.f32 %v3302, 1.442695
        %v3342 = vpow.pop %v3341
        %v3343 = vmul.f32 %v3303, 1.442695
        %v3344 = vpow.pop %v3343
        %v3345 = vmul.f32 %v3304, 1.442695
        %v3346 = vpow.pop %v3345
        %v3347 = vmul.f32 %v3305, 1.442695
        %v3348 = vpow.pop %v3347
        %v3349 = vmul.f32 %v3306, 1.442695
        %v3350 = vpow.pop %v3349
        %v3351 = vmul.f32 %v3307, 1.442695
        %v3352 = vpow.pop %v3351
        %v3353 = vmul.f32 %v3308, 1.442695
        %v3354 = vpow.pop %v3353
        %v3355 = vmul.f32 %v3309, 1.442695
        %v3356 = vpow.pop %v3355
        %v3357 = vmul.f32 %v3310, 1.442695
        %v3358 = vpow.pop %v3357
        %v3359 = vmul.f32 %v3311, 1.442695
        %v3360 = vpow.pop %v3359
        %v3361 = vmul.f32 %v3312, 1.442695
        %v3362 = vpow.pop %v3361
        %v3363 = vmul.f32 %v3313, 1.442695
        %v3364 = vpow.pop %v3363
        %v3365 = vmul.f32 %v3314, 1.442695
        %v3366 = vpow.pop %v3365
        %v3367 = vmul.f32 %v3315, 1.442695
        %v3368 = vpow.pop %v3367
        %v3369 = vmul.f32 %v3316, 1.442695
        %v3370 = vpow.pop %v3369
        %v3371 = vmul.f32 %v3317, 1.442695
        %v3372 = vpow.pop %v3371
        %v3373 = vmul.f32 %v3318, 1.442695
        %v3374 = vpow.pop %v3373
        %v3375 = vmul.f32 %v3319, 1.442695
        %v3376 = vpow.pop %v3375
        %v3377 = vmul.f32 %v3320, 1.442695
        %v3378 = vpow.pop %v3377
        %v3379 = vmul.f32 %v3321, 1.442695
        %v3380 = vpow.pop %v3379
        %v3381 = vmul.f32 %v3322, 1.442695
        %v3382 = vpow.pop %v3381
        %v3383 = vmul.f32 %v3323, 1.442695
        %v3384 = vpow.pop %v3383
        %v3385 = vmul.f32 %v3324, 1.442695
        %v3386 = vpow.pop %v3385
        %v3387 = vmul.f32 %v3325, 1.442695
        %v3388 = vpow.pop %v3387
        %v3389 = vmul.f32 %v3326, 1.442695
        %v3390 = vpow.pop %v3389
        %v3391 = vadd.f32 %v3328, 1.0
        %v3392 = vadd.f32 %v3330, 1.0
        %v3393 = vadd.f32 %v3332, 1.0
        %v3394 = vadd.f32 %v3334, 1.0
        %v3395 = vadd.f32 %v3336, 1.0
        %v3396 = vadd.f32 %v3338, 1.0
        %v3397 = vadd.f32 %v3340, 1.0
        %v3398 = vadd.f32 %v3342, 1.0
        %v3399 = vadd.f32 %v3344, 1.0
        %v3400 = vadd.f32 %v3346, 1.0
        %v3401 = vadd.f32 %v3348, 1.0
        %v3402 = vadd.f32 %v3350, 1.0
        %v3403 = vadd.f32 %v3352, 1.0
        %v3404 = vadd.f32 %v3354, 1.0
        %v3405 = vadd.f32 %v3356, 1.0
        %v3406 = vadd.f32 %v3358, 1.0
        %v3407 = vadd.f32 %v3360, 1.0
        %v3408 = vadd.f32 %v3362, 1.0
        %v3409 = vadd.f32 %v3364, 1.0
        %v3410 = vadd.f32 %v3366, 1.0
        %v3411 = vadd.f32 %v3368, 1.0
        %v3412 = vadd.f32 %v3370, 1.0
        %v3413 = vadd.f32 %v3372, 1.0
        %v3414 = vadd.f32 %v3374, 1.0
        %v3415 = vadd.f32 %v3376, 1.0
        %v3416 = vadd.f32 %v3378, 1.0
        %v3417 = vadd.f32 %v3380, 1.0
        %v3418 = vadd.f32 %v3382, 1.0
        %v3419 = vadd.f32 %v3384, 1.0
        %v3420 = vadd.f32 %v3386, 1.0
        %v3421 = vadd.f32 %v3388, 1.0
        %v3422 = vadd.f32 %v3390, 1.0
        %v3423 = vrcp.pop %v3391
        %v3424 = vmul.f32 %v3391, %v3423
        %v3425 = vsub.f32 1.0, %v3424
        %v3426 = vmul.f32 %v3423, %v3425
        %v3427 = vadd.f32 %v3423, %v3426
        %vm3428 = vweird.f32 %v3391
        %vm3429 = vweird.f32 %v3423
        %vm3430 = vmor %vm3428, %vm3429
        %v3431 = vsel %vm3430, %v3423, %v3427
        %v3432 = vand.u32 2147483647, %v3391
        %vm3433 = vcmp.eq.f32.partialorder %v3432, 8.507059e+37
        %v3434 = vand.u32 %v3391, 2147483648
        %v3435 = vor.u32 1.1754944e-38, %v3434
        %v3436 = vsel %vm3433, %v3435, %v3431
        %v3437 = vmul.f32 1.0, %v3436
        %v3438 = vrcp.pop %v3392
        %v3439 = vmul.f32 %v3392, %v3438
        %v3440 = vsub.f32 1.0, %v3439
        %v3441 = vmul.f32 %v3438, %v3440
        %v3442 = vadd.f32 %v3438, %v3441
        %vm3443 = vweird.f32 %v3392
        %vm3444 = vweird.f32 %v3438
        %vm3445 = vmor %vm3443, %vm3444
        %v3446 = vsel %vm3445, %v3438, %v3442
        %v3447 = vand.u32 2147483647, %v3392
        %vm3448 = vcmp.eq.f32.partialorder %v3447, 8.507059e+37
        %v3449 = vand.u32 %v3392, 2147483648
        %v3450 = vor.u32 1.1754944e-38, %v3449
        %v3451 = vsel %vm3448, %v3450, %v3446
        %v3452 = vmul.f32 1.0, %v3451
        %v3453 = vrcp.pop %v3393
        %v3454 = vmul.f32 %v3393, %v3453
        %v3455 = vsub.f32 1.0, %v3454
        %v3456 = vmul.f32 %v3453, %v3455
        %v3457 = vadd.f32 %v3453, %v3456
        %vm3458 = vweird.f32 %v3393
        %vm3459 = vweird.f32 %v3453
        %vm3460 = vmor %vm3458, %vm3459
        %v3461 = vsel %vm3460, %v3453, %v3457
        %v3462 = vand.u32 2147483647, %v3393
        %vm3463 = vcmp.eq.f32.partialorder %v3462, 8.507059e+37
        %v3464 = vand.u32 %v3393, 2147483648
        %v3465 = vor.u32 1.1754944e-38, %v3464
        %v3466 = vsel %vm3463, %v3465, %v3461
        %v3467 = vmul.f32 1.0, %v3466
        %v3468 = vrcp.pop %v3394
        %v3469 = vmul.f32 %v3394, %v3468
        %v3470 = vsub.f32 1.0, %v3469
        %v3471 = vmul.f32 %v3468, %v3470
        %v3472 = vadd.f32 %v3468, %v3471
        %vm3473 = vweird.f32 %v3394
        %vm3474 = vweird.f32 %v3468
        %vm3475 = vmor %vm3473, %vm3474
        %v3476 = vsel %vm3475, %v3468, %v3472
        %v3477 = vand.u32 2147483647, %v3394
        %vm3478 = vcmp.eq.f32.partialorder %v3477, 8.507059e+37
        %v3479 = vand.u32 %v3394, 2147483648
        %v3480 = vor.u32 1.1754944e-38, %v3479
        %v3481 = vsel %vm3478, %v3480, %v3476
        %v3482 = vmul.f32 1.0, %v3481
        %v3483 = vrcp.pop %v3395
        %v3484 = vmul.f32 %v3395, %v3483
        %v3485 = vsub.f32 1.0, %v3484
        %v3486 = vmul.f32 %v3483, %v3485
        %v3487 = vadd.f32 %v3483, %v3486
        %vm3488 = vweird.f32 %v3395
        %vm3489 = vweird.f32 %v3483
        %vm3490 = vmor %vm3488, %vm3489
        %v3491 = vsel %vm3490, %v3483, %v3487
        %v3492 = vand.u32 2147483647, %v3395
        %vm3493 = vcmp.eq.f32.partialorder %v3492, 8.507059e+37
        %v3494 = vand.u32 %v3395, 2147483648
        %v3495 = vor.u32 1.1754944e-38, %v3494
        %v3496 = vsel %vm3493, %v3495, %v3491
        %v3497 = vmul.f32 1.0, %v3496
        %v3498 = vrcp.pop %v3396
        %v3499 = vmul.f32 %v3396, %v3498
        %v3500 = vsub.f32 1.0, %v3499
        %v3501 = vmul.f32 %v3498, %v3500
        %v3502 = vadd.f32 %v3498, %v3501
        %vm3503 = vweird.f32 %v3396
        %vm3504 = vweird.f32 %v3498
        %vm3505 = vmor %vm3503, %vm3504
        %v3506 = vsel %vm3505, %v3498, %v3502
        %v3507 = vand.u32 2147483647, %v3396
        %vm3508 = vcmp.eq.f32.partialorder %v3507, 8.507059e+37
        %v3509 = vand.u32 %v3396, 2147483648
        %v3510 = vor.u32 1.1754944e-38, %v3509
        %v3511 = vsel %vm3508, %v3510, %v3506
        %v3512 = vmul.f32 1.0, %v3511
        %v3513 = vrcp.pop %v3397
        %v3514 = vmul.f32 %v3397, %v3513
        %v3515 = vsub.f32 1.0, %v3514
        %v3516 = vmul.f32 %v3513, %v3515
        %v3517 = vadd.f32 %v3513, %v3516
        %vm3518 = vweird.f32 %v3397
        %vm3519 = vweird.f32 %v3513
        %vm3520 = vmor %vm3518, %vm3519
        %v3521 = vsel %vm3520, %v3513, %v3517
        %v3522 = vand.u32 2147483647, %v3397
        %vm3523 = vcmp.eq.f32.partialorder %v3522, 8.507059e+37
        %v3524 = vand.u32 %v3397, 2147483648
        %v3525 = vor.u32 1.1754944e-38, %v3524
        %v3526 = vsel %vm3523, %v3525, %v3521
        %v3527 = vmul.f32 1.0, %v3526
        %v3528 = vrcp.pop %v3398
        %v3529 = vmul.f32 %v3398, %v3528
        %v3530 = vsub.f32 1.0, %v3529
        %v3531 = vmul.f32 %v3528, %v3530
        %v3532 = vadd.f32 %v3528, %v3531
        %vm3533 = vweird.f32 %v3398
        %vm3534 = vweird.f32 %v3528
        %vm3535 = vmor %vm3533, %vm3534
        %v3536 = vsel %vm3535, %v3528, %v3532
        %v3537 = vand.u32 2147483647, %v3398
        %vm3538 = vcmp.eq.f32.partialorder %v3537, 8.507059e+37
        %v3539 = vand.u32 %v3398, 2147483648
        %v3540 = vor.u32 1.1754944e-38, %v3539
        %v3541 = vsel %vm3538, %v3540, %v3536
        %v3542 = vmul.f32 1.0, %v3541
        %v3543 = vrcp.pop %v3399
        %v3544 = vmul.f32 %v3399, %v3543
        %v3545 = vsub.f32 1.0, %v3544
        %v3546 = vmul.f32 %v3543, %v3545
        %v3547 = vadd.f32 %v3543, %v3546
        %vm3548 = vweird.f32 %v3399
        %vm3549 = vweird.f32 %v3543
        %vm3550 = vmor %vm3548, %vm3549
        %v3551 = vsel %vm3550, %v3543, %v3547
        %v3552 = vand.u32 2147483647, %v3399
        %vm3553 = vcmp.eq.f32.partialorder %v3552, 8.507059e+37
        %v3554 = vand.u32 %v3399, 2147483648
        %v3555 = vor.u32 1.1754944e-38, %v3554
        %v3556 = vsel %vm3553, %v3555, %v3551
        %v3557 = vmul.f32 1.0, %v3556
        %v3558 = vrcp.pop %v3400
        %v3559 = vmul.f32 %v3400, %v3558
        %v3560 = vsub.f32 1.0, %v3559
        %v3561 = vmul.f32 %v3558, %v3560
        %v3562 = vadd.f32 %v3558, %v3561
        %vm3563 = vweird.f32 %v3400
        %vm3564 = vweird.f32 %v3558
        %vm3565 = vmor %vm3563, %vm3564
        %v3566 = vsel %vm3565, %v3558, %v3562
        %v3567 = vand.u32 2147483647, %v3400
        %vm3568 = vcmp.eq.f32.partialorder %v3567, 8.507059e+37
        %v3569 = vand.u32 %v3400, 2147483648
        %v3570 = vor.u32 1.1754944e-38, %v3569
        %v3571 = vsel %vm3568, %v3570, %v3566
        %v3572 = vmul.f32 1.0, %v3571
        %v3573 = vrcp.pop %v3401
        %v3574 = vmul.f32 %v3401, %v3573
        %v3575 = vsub.f32 1.0, %v3574
        %v3576 = vmul.f32 %v3573, %v3575
        %v3577 = vadd.f32 %v3573, %v3576
        %vm3578 = vweird.f32 %v3401
        %vm3579 = vweird.f32 %v3573
        %vm3580 = vmor %vm3578, %vm3579
        %v3581 = vsel %vm3580, %v3573, %v3577
        %v3582 = vand.u32 2147483647, %v3401
        %vm3583 = vcmp.eq.f32.partialorder %v3582, 8.507059e+37
        %v3584 = vand.u32 %v3401, 2147483648
        %v3585 = vor.u32 1.1754944e-38, %v3584
        %v3586 = vsel %vm3583, %v3585, %v3581
        %v3587 = vmul.f32 1.0, %v3586
        %v3588 = vrcp.pop %v3402
        %v3589 = vmul.f32 %v3402, %v3588
        %v3590 = vsub.f32 1.0, %v3589
        %v3591 = vmul.f32 %v3588, %v3590
        %v3592 = vadd.f32 %v3588, %v3591
        %vm3593 = vweird.f32 %v3402
        %vm3594 = vweird.f32 %v3588
        %vm3595 = vmor %vm3593, %vm3594
        %v3596 = vsel %vm3595, %v3588, %v3592
        %v3597 = vand.u32 2147483647, %v3402
        %vm3598 = vcmp.eq.f32.partialorder %v3597, 8.507059e+37
        %v3599 = vand.u32 %v3402, 2147483648
        %v3600 = vor.u32 1.1754944e-38, %v3599
        %v3601 = vsel %vm3598, %v3600, %v3596
        %v3602 = vmul.f32 1.0, %v3601
        %v3603 = vrcp.pop %v3403
        %v3604 = vmul.f32 %v3403, %v3603
        %v3605 = vsub.f32 1.0, %v3604
        %v3606 = vmul.f32 %v3603, %v3605
        %v3607 = vadd.f32 %v3603, %v3606
        %vm3608 = vweird.f32 %v3403
        %vm3609 = vweird.f32 %v3603
        %vm3610 = vmor %vm3608, %vm3609
        %v3611 = vsel %vm3610, %v3603, %v3607
        %v3612 = vand.u32 2147483647, %v3403
        %vm3613 = vcmp.eq.f32.partialorder %v3612, 8.507059e+37
        %v3614 = vand.u32 %v3403, 2147483648
        %v3615 = vor.u32 1.1754944e-38, %v3614
        %v3616 = vsel %vm3613, %v3615, %v3611
        %v3617 = vmul.f32 1.0, %v3616
        %v3618 = vrcp.pop %v3404
        %v3619 = vmul.f32 %v3404, %v3618
        %v3620 = vsub.f32 1.0, %v3619
        %v3621 = vmul.f32 %v3618, %v3620
        %v3622 = vadd.f32 %v3618, %v3621
        %vm3623 = vweird.f32 %v3404
        %vm3624 = vweird.f32 %v3618
        %vm3625 = vmor %vm3623, %vm3624
        %v3626 = vsel %vm3625, %v3618, %v3622
        %v3627 = vand.u32 2147483647, %v3404
        %vm3628 = vcmp.eq.f32.partialorder %v3627, 8.507059e+37
        %v3629 = vand.u32 %v3404, 2147483648
        %v3630 = vor.u32 1.1754944e-38, %v3629
        %v3631 = vsel %vm3628, %v3630, %v3626
        %v3632 = vmul.f32 1.0, %v3631
        %v3633 = vrcp.pop %v3405
        %v3634 = vmul.f32 %v3405, %v3633
        %v3635 = vsub.f32 1.0, %v3634
        %v3636 = vmul.f32 %v3633, %v3635
        %v3637 = vadd.f32 %v3633, %v3636
        %vm3638 = vweird.f32 %v3405
        %vm3639 = vweird.f32 %v3633
        %vm3640 = vmor %vm3638, %vm3639
        %v3641 = vsel %vm3640, %v3633, %v3637
        %v3642 = vand.u32 2147483647, %v3405
        %vm3643 = vcmp.eq.f32.partialorder %v3642, 8.507059e+37
        %v3644 = vand.u32 %v3405, 2147483648
        %v3645 = vor.u32 1.1754944e-38, %v3644
        %v3646 = vsel %vm3643, %v3645, %v3641
        %v3647 = vmul.f32 1.0, %v3646
        %v3648 = vrcp.pop %v3406
        %v3649 = vmul.f32 %v3406, %v3648
        %v3650 = vsub.f32 1.0, %v3649
        %v3651 = vmul.f32 %v3648, %v3650
        %v3652 = vadd.f32 %v3648, %v3651
        %vm3653 = vweird.f32 %v3406
        %vm3654 = vweird.f32 %v3648
        %vm3655 = vmor %vm3653, %vm3654
        %v3656 = vsel %vm3655, %v3648, %v3652
        %v3657 = vand.u32 2147483647, %v3406
        %vm3658 = vcmp.eq.f32.partialorder %v3657, 8.507059e+37
        %v3659 = vand.u32 %v3406, 2147483648
        %v3660 = vor.u32 1.1754944e-38, %v3659
        %v3661 = vsel %vm3658, %v3660, %v3656
        %v3662 = vmul.f32 1.0, %v3661
        %v3663 = vrcp.pop %v3407
        %v3664 = vmul.f32 %v3407, %v3663
        %v3665 = vsub.f32 1.0, %v3664
        %v3666 = vmul.f32 %v3663, %v3665
        %v3667 = vadd.f32 %v3663, %v3666
        %vm3668 = vweird.f32 %v3407
        %vm3669 = vweird.f32 %v3663
        %vm3670 = vmor %vm3668, %vm3669
        %v3671 = vsel %vm3670, %v3663, %v3667
        %v3672 = vand.u32 2147483647, %v3407
        %vm3673 = vcmp.eq.f32.partialorder %v3672, 8.507059e+37
        %v3674 = vand.u32 %v3407, 2147483648
        %v3675 = vor.u32 1.1754944e-38, %v3674
        %v3676 = vsel %vm3673, %v3675, %v3671
        %v3677 = vmul.f32 1.0, %v3676
        %v3678 = vrcp.pop %v3408
        %v3679 = vmul.f32 %v3408, %v3678
        %v3680 = vsub.f32 1.0, %v3679
        %v3681 = vmul.f32 %v3678, %v3680
        %v3682 = vadd.f32 %v3678, %v3681
        %vm3683 = vweird.f32 %v3408
        %vm3684 = vweird.f32 %v3678
        %vm3685 = vmor %vm3683, %vm3684
        %v3686 = vsel %vm3685, %v3678, %v3682
        %v3687 = vand.u32 2147483647, %v3408
        %vm3688 = vcmp.eq.f32.partialorder %v3687, 8.507059e+37
        %v3689 = vand.u32 %v3408, 2147483648
        %v3690 = vor.u32 1.1754944e-38, %v3689
        %v3691 = vsel %vm3688, %v3690, %v3686
        %v3692 = vmul.f32 1.0, %v3691
        %v3693 = vrcp.pop %v3409
        %v3694 = vmul.f32 %v3409, %v3693
        %v3695 = vsub.f32 1.0, %v3694
        %v3696 = vmul.f32 %v3693, %v3695
        %v3697 = vadd.f32 %v3693, %v3696
        %vm3698 = vweird.f32 %v3409
        %vm3699 = vweird.f32 %v3693
        %vm3700 = vmor %vm3698, %vm3699
        %v3701 = vsel %vm3700, %v3693, %v3697
        %v3702 = vand.u32 2147483647, %v3409
        %vm3703 = vcmp.eq.f32.partialorder %v3702, 8.507059e+37
        %v3704 = vand.u32 %v3409, 2147483648
        %v3705 = vor.u32 1.1754944e-38, %v3704
        %v3706 = vsel %vm3703, %v3705, %v3701
        %v3707 = vmul.f32 1.0, %v3706
        %v3708 = vrcp.pop %v3410
        %v3709 = vmul.f32 %v3410, %v3708
        %v3710 = vsub.f32 1.0, %v3709
        %v3711 = vmul.f32 %v3708, %v3710
        %v3712 = vadd.f32 %v3708, %v3711
        %vm3713 = vweird.f32 %v3410
        %vm3714 = vweird.f32 %v3708
        %vm3715 = vmor %vm3713, %vm3714
        %v3716 = vsel %vm3715, %v3708, %v3712
        %v3717 = vand.u32 2147483647, %v3410
        %vm3718 = vcmp.eq.f32.partialorder %v3717, 8.507059e+37
        %v3719 = vand.u32 %v3410, 2147483648
        %v3720 = vor.u32 1.1754944e-38, %v3719
        %v3721 = vsel %vm3718, %v3720, %v3716
        %v3722 = vmul.f32 1.0, %v3721
        %v3723 = vrcp.pop %v3411
        %v3724 = vmul.f32 %v3411, %v3723
        %v3725 = vsub.f32 1.0, %v3724
        %v3726 = vmul.f32 %v3723, %v3725
        %v3727 = vadd.f32 %v3723, %v3726
        %vm3728 = vweird.f32 %v3411
        %vm3729 = vweird.f32 %v3723
        %vm3730 = vmor %vm3728, %vm3729
        %v3731 = vsel %vm3730, %v3723, %v3727
        %v3732 = vand.u32 2147483647, %v3411
        %vm3733 = vcmp.eq.f32.partialorder %v3732, 8.507059e+37
        %v3734 = vand.u32 %v3411, 2147483648
        %v3735 = vor.u32 1.1754944e-38, %v3734
        %v3736 = vsel %vm3733, %v3735, %v3731
        %v3737 = vmul.f32 1.0, %v3736
        %v3738 = vrcp.pop %v3412
        %v3739 = vmul.f32 %v3412, %v3738
        %v3740 = vsub.f32 1.0, %v3739
        %v3741 = vmul.f32 %v3738, %v3740
        %v3742 = vadd.f32 %v3738, %v3741
        %vm3743 = vweird.f32 %v3412
        %vm3744 = vweird.f32 %v3738
        %vm3745 = vmor %vm3743, %vm3744
        %v3746 = vsel %vm3745, %v3738, %v3742
        %v3747 = vand.u32 2147483647, %v3412
        %vm3748 = vcmp.eq.f32.partialorder %v3747, 8.507059e+37
        %v3749 = vand.u32 %v3412, 2147483648
        %v3750 = vor.u32 1.1754944e-38, %v3749
        %v3751 = vsel %vm3748, %v3750, %v3746
        %v3752 = vmul.f32 1.0, %v3751
        %v3753 = vrcp.pop %v3413
        %v3754 = vmul.f32 %v3413, %v3753
        %v3755 = vsub.f32 1.0, %v3754
        %v3756 = vmul.f32 %v3753, %v3755
        %v3757 = vadd.f32 %v3753, %v3756
        %vm3758 = vweird.f32 %v3413
        %vm3759 = vweird.f32 %v3753
        %vm3760 = vmor %vm3758, %vm3759
        %v3761 = vsel %vm3760, %v3753, %v3757
        %v3762 = vand.u32 2147483647, %v3413
        %vm3763 = vcmp.eq.f32.partialorder %v3762, 8.507059e+37
        %v3764 = vand.u32 %v3413, 2147483648
        %v3765 = vor.u32 1.1754944e-38, %v3764
        %v3766 = vsel %vm3763, %v3765, %v3761
        %v3767 = vmul.f32 1.0, %v3766
        %v3768 = vrcp.pop %v3414
        %v3769 = vmul.f32 %v3414, %v3768
        %v3770 = vsub.f32 1.0, %v3769
        %v3771 = vmul.f32 %v3768, %v3770
        %v3772 = vadd.f32 %v3768, %v3771
        %vm3773 = vweird.f32 %v3414
        %vm3774 = vweird.f32 %v3768
        %vm3775 = vmor %vm3773, %vm3774
        %v3776 = vsel %vm3775, %v3768, %v3772
        %v3777 = vand.u32 2147483647, %v3414
        %vm3778 = vcmp.eq.f32.partialorder %v3777, 8.507059e+37
        %v3779 = vand.u32 %v3414, 2147483648
        %v3780 = vor.u32 1.1754944e-38, %v3779
        %v3781 = vsel %vm3778, %v3780, %v3776
        %v3782 = vmul.f32 1.0, %v3781
        %v3783 = vrcp.pop %v3415
        %v3784 = vmul.f32 %v3415, %v3783
        %v3785 = vsub.f32 1.0, %v3784
        %v3786 = vmul.f32 %v3783, %v3785
        %v3787 = vadd.f32 %v3783, %v3786
        %vm3788 = vweird.f32 %v3415
        %vm3789 = vweird.f32 %v3783
        %vm3790 = vmor %vm3788, %vm3789
        %v3791 = vsel %vm3790, %v3783, %v3787
        %v3792 = vand.u32 2147483647, %v3415
        %vm3793 = vcmp.eq.f32.partialorder %v3792, 8.507059e+37
        %v3794 = vand.u32 %v3415, 2147483648
        %v3795 = vor.u32 1.1754944e-38, %v3794
        %v3796 = vsel %vm3793, %v3795, %v3791
        %v3797 = vmul.f32 1.0, %v3796
        %v3798 = vrcp.pop %v3416
        %v3799 = vmul.f32 %v3416, %v3798
        %v3800 = vsub.f32 1.0, %v3799
        %v3801 = vmul.f32 %v3798, %v3800
        %v3802 = vadd.f32 %v3798, %v3801
        %vm3803 = vweird.f32 %v3416
        %vm3804 = vweird.f32 %v3798
        %vm3805 = vmor %vm3803, %vm3804
        %v3806 = vsel %vm3805, %v3798, %v3802
        %v3807 = vand.u32 2147483647, %v3416
        %vm3808 = vcmp.eq.f32.partialorder %v3807, 8.507059e+37
        %v3809 = vand.u32 %v3416, 2147483648
        %v3810 = vor.u32 1.1754944e-38, %v3809
        %v3811 = vsel %vm3808, %v3810, %v3806
        %v3812 = vmul.f32 1.0, %v3811
        %v3813 = vrcp.pop %v3417
        %v3814 = vmul.f32 %v3417, %v3813
        %v3815 = vsub.f32 1.0, %v3814
        %v3816 = vmul.f32 %v3813, %v3815
        %v3817 = vadd.f32 %v3813, %v3816
        %vm3818 = vweird.f32 %v3417
        %vm3819 = vweird.f32 %v3813
        %vm3820 = vmor %vm3818, %vm3819
        %v3821 = vsel %vm3820, %v3813, %v3817
        %v3822 = vand.u32 2147483647, %v3417
        %vm3823 = vcmp.eq.f32.partialorder %v3822, 8.507059e+37
        %v3824 = vand.u32 %v3417, 2147483648
        %v3825 = vor.u32 1.1754944e-38, %v3824
        %v3826 = vsel %vm3823, %v3825, %v3821
        %v3827 = vmul.f32 1.0, %v3826
        %v3828 = vrcp.pop %v3418
        %v3829 = vmul.f32 %v3418, %v3828
        %v3830 = vsub.f32 1.0, %v3829
        %v3831 = vmul.f32 %v3828, %v3830
        %v3832 = vadd.f32 %v3828, %v3831
        %vm3833 = vweird.f32 %v3418
        %vm3834 = vweird.f32 %v3828
        %vm3835 = vmor %vm3833, %vm3834
        %v3836 = vsel %vm3835, %v3828, %v3832
        %v3837 = vand.u32 2147483647, %v3418
        %vm3838 = vcmp.eq.f32.partialorder %v3837, 8.507059e+37
        %v3839 = vand.u32 %v3418, 2147483648
        %v3840 = vor.u32 1.1754944e-38, %v3839
        %v3841 = vsel %vm3838, %v3840, %v3836
        %v3842 = vmul.f32 1.0, %v3841
        %v3843 = vrcp.pop %v3419
        %v3844 = vmul.f32 %v3419, %v3843
        %v3845 = vsub.f32 1.0, %v3844
        %v3846 = vmul.f32 %v3843, %v3845
        %v3847 = vadd.f32 %v3843, %v3846
        %vm3848 = vweird.f32 %v3419
        %vm3849 = vweird.f32 %v3843
        %vm3850 = vmor %vm3848, %vm3849
        %v3851 = vsel %vm3850, %v3843, %v3847
        %v3852 = vand.u32 2147483647, %v3419
        %vm3853 = vcmp.eq.f32.partialorder %v3852, 8.507059e+37
        %v3854 = vand.u32 %v3419, 2147483648
        %v3855 = vor.u32 1.1754944e-38, %v3854
        %v3856 = vsel %vm3853, %v3855, %v3851
        %v3857 = vmul.f32 1.0, %v3856
        %v3858 = vrcp.pop %v3420
        %v3859 = vmul.f32 %v3420, %v3858
        %v3860 = vsub.f32 1.0, %v3859
        %v3861 = vmul.f32 %v3858, %v3860
        %v3862 = vadd.f32 %v3858, %v3861
        %vm3863 = vweird.f32 %v3420
        %vm3864 = vweird.f32 %v3858
        %vm3865 = vmor %vm3863, %vm3864
        %v3866 = vsel %vm3865, %v3858, %v3862
        %v3867 = vand.u32 2147483647, %v3420
        %vm3868 = vcmp.eq.f32.partialorder %v3867, 8.507059e+37
        %v3869 = vand.u32 %v3420, 2147483648
        %v3870 = vor.u32 1.1754944e-38, %v3869
        %v3871 = vsel %vm3868, %v3870, %v3866
        %v3872 = vmul.f32 1.0, %v3871
        %v3873 = vrcp.pop %v3421
        %v3874 = vmul.f32 %v3421, %v3873
        %v3875 = vsub.f32 1.0, %v3874
        %v3876 = vmul.f32 %v3873, %v3875
        %v3877 = vadd.f32 %v3873, %v3876
        %vm3878 = vweird.f32 %v3421
        %vm3879 = vweird.f32 %v3873
        %vm3880 = vmor %vm3878, %vm3879
        %v3881 = vsel %vm3880, %v3873, %v3877
        %v3882 = vand.u32 2147483647, %v3421
        %vm3883 = vcmp.eq.f32.partialorder %v3882, 8.507059e+37
        %v3884 = vand.u32 %v3421, 2147483648
        %v3885 = vor.u32 1.1754944e-38, %v3884
        %v3886 = vsel %vm3883, %v3885, %v3881
        %v3887 = vmul.f32 1.0, %v3886
        %v3888 = vrcp.pop %v3422
        %v3889 = vmul.f32 %v3422, %v3888
        %v3890 = vsub.f32 1.0, %v3889
        %v3891 = vmul.f32 %v3888, %v3890
        %v3892 = vadd.f32 %v3888, %v3891
        %vm3893 = vweird.f32 %v3422
        %vm3894 = vweird.f32 %v3888
        %vm3895 = vmor %vm3893, %vm3894
        %v3896 = vsel %vm3895, %v3888, %v3892
        %v3897 = vand.u32 2147483647, %v3422
        %vm3898 = vcmp.eq.f32.partialorder %v3897, 8.507059e+37
        %v3899 = vand.u32 %v3422, 2147483648
        %v3900 = vor.u32 1.1754944e-38, %v3899
        %v3901 = vsel %vm3898, %v3900, %v3896
        %v3902 = vmul.f32 1.0, %v3901
        %vm3903 = vcmask 7168
        %3904 = vst.msk [vmem:[%s381] sm:$0xff] %vm3903, %v3437
        %3905 = vst.msk [vmem:[%s381 + $0x8] sm:$0xff] %vm3903, %v3452
        %3906 = vst.msk [vmem:[%s381 + $0x10] sm:$0xff] %vm3903, %v3467
        %3907 = vst.msk [vmem:[%s381 + $0x18] sm:$0xff] %vm3903, %v3482
        %3908 = vst.msk [vmem:[%s381 + $0x20] sm:$0xff] %vm3903, %v3497
        %3909 = vst.msk [vmem:[%s381 + $0x28] sm:$0xff] %vm3903, %v3512
        %3910 = vst.msk [vmem:[%s381 + $0x30] sm:$0xff] %vm3903, %v3527
        %3911 = vst.msk [vmem:[%s381 + $0x38] sm:$0xff] %vm3903, %v3542
        %3912 = vst.msk [vmem:[%s381 + $0x40] sm:$0xff] %vm3903, %v3557
        %3913 = vst.msk [vmem:[%s381 + $0x48] sm:$0xff] %vm3903, %v3572
        %3914 = vst.msk [vmem:[%s381 + $0x50] sm:$0xff] %vm3903, %v3587
        %3915 = vst.msk [vmem:[%s381 + $0x58] sm:$0xff] %vm3903, %v3602
        %3916 = vst.msk [vmem:[%s381 + $0x60] sm:$0xff] %vm3903, %v3617
        %3917 = vst.msk [vmem:[%s381 + $0x68] sm:$0xff] %vm3903, %v3632
        %3918 = vst.msk [vmem:[%s381 + $0x70] sm:$0xff] %vm3903, %v3647
        %3919 = vst.msk [vmem:[%s381 + $0x78] sm:$0xff] %vm3903, %v3662
        %3920 = vst.msk [vmem:[%s381 + $0x80] sm:$0xff] %vm3903, %v3677
        %3921 = vst.msk [vmem:[%s381 + $0x88] sm:$0xff] %vm3903, %v3692
        %3922 = vst.msk [vmem:[%s381 + $0x90] sm:$0xff] %vm3903, %v3707
        %3923 = vst.msk [vmem:[%s381 + $0x98] sm:$0xff] %vm3903, %v3722
        %3924 = vst.msk [vmem:[%s381 + $0xa0] sm:$0xff] %vm3903, %v3737
        %3925 = vst.msk [vmem:[%s381 + $0xa8] sm:$0xff] %vm3903, %v3752
        %3926 = vst.msk [vmem:[%s381 + $0xb0] sm:$0xff] %vm3903, %v3767
        %3927 = vst.msk [vmem:[%s381 + $0xb8] sm:$0xff] %vm3903, %v3782
        %3928 = vst.msk [vmem:[%s381 + $0xc0] sm:$0xff] %vm3903, %v3797
        %3929 = vst.msk [vmem:[%s381 + $0xc8] sm:$0xff] %vm3903, %v3812
        %3930 = vst.msk [vmem:[%s381 + $0xd0] sm:$0xff] %vm3903, %v3827
        %3931 = vst.msk [vmem:[%s381 + $0xd8] sm:$0xff] %vm3903, %v3842
        %3932 = vst.msk [vmem:[%s381 + $0xe0] sm:$0xff] %vm3903, %v3857
        %3933 = vst.msk [vmem:[%s381 + $0xe8] sm:$0xff] %vm3903, %v3872
        %3934 = vst.msk [vmem:[%s381 + $0xf0] sm:$0xff] %vm3903, %v3887
        %3935 = vst.msk [vmem:[%s381 + $0xf8] sm:$0xff] %vm3903, %v3902
        %s3936 = smul.u32 32, %s27
        %p3937 = scmp.lt.s32.totalorder %s3936, 63
        %s3938 = scalar_select %p3937, %s3936, 63
        %s3939 = smul.addr %s3938, 8
        %s3940 = scalar_lea.vmem %s7, %s3939
        // Predicated region
        $region65: #{tpu_custom_call.1} parent=47 // pred_check
          %p3941 = pneg %p202
        $region66: #{tpu_custom_call.1} parent=47 // pred_check_branch
          %3943 = sbr.rel (%p3941) target = $region68
        $region67: #{tpu_custom_call.1} parent=47 // pred_region
          %s3944 = smul.u32 32, %s27
        $region68: #{tpu_custom_call.1} parent=47 // pred_fallthru
          _
      $region48: #{tpu_custom_call.1} parent=5 // pred_fallthru
        _
      %p3945 = scmp.le.s32.totalorder 2, %s22
      // Predicated region
      $region69: #{tpu_custom_call.1} parent=5 // pred_check
        %p3946 = pneg %p3945
      $region70: #{tpu_custom_call.1} parent=5 // pred_check_branch
        %3948 = sbr.rel (%p3946) target = $region72
      $region71: #{tpu_custom_call.1} parent=5 // pred_region
        %s3949 = ssub.s32 %s22, 2
        // Predicated region
        $region73: #{tpu_custom_call.1} parent=71 // pred_check
          %p3950 = pneg %p208
        $region74: #{tpu_custom_call.1} parent=71 // pred_check_branch
          %3952 = sbr.rel (%p3950) target = $region76
        $region75: #{tpu_custom_call.1} parent=71 // pred_region
          %s3953 = smul.u32 32, %s28
          %p3954 = scmp.lt.s32.totalorder %s3953, 63
          %s3955 = scalar_select %p3954, %s3953, 63
          %s3956 = smul.addr %s3955, 8
          %s3957 = scalar_lea.vmem %s7, %s3956
        $region76: #{tpu_custom_call.1} parent=71 // pred_fallthru
          _
      $region72: #{tpu_custom_call.1} parent=5 // pred_fallthru
        _
    $region6: #{tpu_custom_call.1} parent=1 // loop_footer
      %s26 = sadd.s32 1, %s22
    $region7: #{tpu_custom_call.1} parent=1 // loop_footer_branch
      %21 = sbr.rel target = $region3
    $region8: #{tpu_custom_call.1} parent=1 // loop_exit
      _
    %3958 = vsyncpa [#allocation4], 1
    %s3959 = scalar_lea.sflag [#allocation4], 1
    %3960 = vsyncpa %s3959, 1
    %3961 = vsyncpa [#allocation6], 1
    %s3962 = scalar_lea.sflag [#allocation6], 1
    %3963 = vsyncpa %s3962, 1
    %3964 = vsyncpa [#allocation9], 1

</llo_original>
